<compile_context>
chip_gen: v5e
topology: v5e:2x2
jax: 0.10.0
libtpu: 0.0.40
codegen_flags: <defaults>
</compile_context>

<pallas_src>
import functools

import jax
import jax.numpy as jnp
import numpy as np
from jax import lax
from jax.experimental import pallas as pl
from jax.experimental.pallas import tpu as pltpu


# ------------------------------- helpers ---------------------------------------

def _round_up(a, m):
    return -(-a // m) * m


def _axis_plan(K, stride, padding, out_len, in_len):
    """Sub-pixel plan for one spatial axis.

    Returns (plans, T, d_min, d_max, pad_lo, pad_hi).  plans[j] = (o0, [(k, d), ...]),
    sorted by o0: output index o0 + stride*t (0 <= t < T) receives kernel tap k reading
    (un-dilated) input row t + d.  Out-of-range rows come from zero padding.
    """
    T = out_len // stride
    plans = []
    for ph in range(stride):
        o0 = (ph - padding) % stride
        taps = [(k, (o0 + padding - k) // stride)
                for k in range(K) if (o0 + padding - k) % stride == 0]
        plans.append((o0, taps))
    plans.sort(key=lambda t: t[0])                       # parity order == output offset
    offs = [d for _, taps in plans for _, d in taps] or [0]
    d_min, d_max = min(offs), max(offs)
    pad_lo = max(0, -d_min)
    pad_hi = max(0, d_max + T - 1 - (in_len - 1))
    return plans, T, d_min, d_max, pad_lo, pad_hi


def _vmem_limit_bytes():
    """Per-generation VMEM ceiling: ~96 MiB on 128 MiB chips (v5e/v6e), 48 MiB on v7x."""
    cap = None
    try:
        cap = getattr(pltpu.get_tpu_info(), "vmem_capacity_bytes", None)
    except Exception:
        cap = None
    if not cap:
        cap = 64 << 20                                   # conservative (v7x per-TC VMEM)
    return int(min(cap * 3 // 4, 96 << 20))


# ------------------------------- forward ---------------------------------------

def deconv_forward(x, weight, bias, *, stride=2, padding=1, final_layer=False,
                   eps=1e-5, gamma=None, beta=None, compute_dtype=jnp.bfloat16):
    """DeConv.forward. x: NCHW f32. weight: (Cin, Cout, kH, kW) (ConvTranspose2d layout)."""
    N, Cin, H, W = x.shape
    Cin_w, Cout, kH, kW = weight.shape
    assert Cin_w == Cin
    Hout = (H - 1) * stride - 2 * padding + kH
    Wout = (W - 1) * stride - 2 * padding + kW

    x_nhwc = jnp.transpose(x, (0, 2, 3, 1))              # (N, H, W, Cin)
    s = stride
    if (Hout % s) or (Wout % s):
        # TODO(synk): ragged parities (odd kernel/stride combos) fall back to an explicitly
        # dilated input (stride zeros materialized); numerically correct but the slow path.
        xd = jnp.zeros((N, (H - 1) * s + 1, (W - 1) * s + 1, Cin), x_nhwc.dtype)
        x_nhwc = xd.at[:, ::s, ::s, :].set(x_nhwc)
        H, W = x_nhwc.shape[1], x_nhwc.shape[2]
        s = 1

    hplans, Th, dh_min, dh_max, ph_lo, ph_hi = _axis_plan(kH, s, padding, Hout, H)
    wplans, Tw, dw_min, dw_max, pw_lo, pw_hi = _axis_plan(kW, s, padding, Wout, W)
    span_h = dh_max - dh_min
    n_ph, n_pw = len(hplans), len(wplans)
    P = n_ph * n_pw                                      # = s*s parity planes

    itemsize = jnp.dtype(compute_dtype).itemsize
    store_dtype = (jnp.float32 if jnp.dtype(compute_dtype) == jnp.dtype(jnp.float32)
                   else jnp.bfloat16)

    # Pad the output-tile width to the sublane tile so the in-kernel
    # (tile_th, Tw_pad, Cin) -> (tile_th*Tw_pad, Cin) collapse is layout-clean.
    sub_tile = 8 * max(1, 4 // itemsize)                 # 8 for f32, 16 for bf16
    Tw_pad = _round_up(Tw, sub_tile)
    w_extra = Tw_pad - Tw

    # Padded, NHWC, compute-dtype input: read from HBM exactly once per row block.
    xp = jnp.pad(x_nhwc, ((0, 0), (ph_lo, ph_hi), (pw_lo, pw_hi + w_extra), (0, 0)))
    xp = xp.astype(compute_dtype)
    Wp = xp.shape[2]
    c_h = dh_min + ph_lo                                 # padded row of output-row 0's window

    # Per-tap weights pre-transposed to (Cout, Cin): kernel emits y^T = W @ x^T directly.
    w_all = jnp.transpose(weight, (2, 3, 1, 0)).reshape(kH * kW, Cout, Cin)
    w_all = w_all.astype(compute_dtype)
    b_col = bias.reshape(Cout, 1).astype(jnp.float32)

    # ---- row-block split: largest block that fits the per-generation VMEM budget. ----
    vmem_limit = _vmem_limit_bytes()
    budget = (vmem_limit * 3) // 5
    store_isz = jnp.dtype(store_dtype).itemsize

    def _est(n_th):
        tile_th_ = Th // n_th
        hin = tile_th_ + span_h
        tile_m_ = tile_th_ * Tw_pad
        cin_l = _round_up(Cin, 128)
        x_b = hin * _round_up(Wp, 8) * cin_l * itemsize
        w_b = kH * kW * _round_up(Cout, 8) * cin_l * itemsize
        y_b = P * _round_up(Cout, 8) * _round_up(tile_m_, 128) * store_isz
        st_b = P * _round_up(Cout, 8) * 128 * 4
        tmp = (tile_th_ * _round_up(Tw_pad, 8) * cin_l * itemsize
               + _round_up(tile_m_, 8) * cin_l * itemsize
               + 3 * _round_up(Cout, 8) * _round_up(tile_m_, 128) * 4)
        return 2 * (x_b + y_b + st_b + w_b) + tmp

    divisors = [d for d in range(1, Th + 1) if Th % d == 0]
    fits = [d for d in divisors if _est(d) <= budget]
    if not fits:
        n_th = Th
    else:
        n_th = fits[0]
        if N * n_th < 2:                                 # keep both v7x TensorCores busy
            for d in fits:
                if N * d >= 2:
                    n_th = d
                    break
    tile_th = Th // n_th
    Hin_blk = tile_th + span_h
    tile_m = tile_th * Tw_pad
    B = N * n_th

    # Row blocks (halo rows duplicated host-side only when n_th > 1; halo = K/s - 1 rows).
    if n_th == 1:
        x_blk = lax.slice_in_dim(xp, c_h, c_h + Hin_blk, axis=1)
    else:
        x_blk = jnp.stack(
            [lax.slice_in_dim(xp, c_h + r * tile_th, c_h + r * tile_th + Hin_blk, axis=1)
             for r in range(n_th)], axis=1)
        x_blk = x_blk.reshape(B, Hin_blk, Wp, Cin)

    grp_cnt = float(tile_th * Tw)                        # real (unpadded) elements per group

    # ------------------------------ Pallas kernel --------------------------------
    def _body(x_ref, w_ref, b_ref, y_ref, st_ref):
        bias_col = b_ref[...]                            # (Cout, 1) f32
        if Tw_pad != Tw:
            lane = lax.broadcasted_iota(jnp.int32, (1, tile_m), 1)
            valid = (lane % Tw_pad) < Tw                 # mask out the width padding
        for pi, (_, htaps) in enumerate(hplans):
            for pj, (_, wtaps) in enumerate(wplans):
                p = pi * n_pw + pj
                acc = None
                for kh, dh in htaps:
                    r0 = dh - dh_min
                    for kw, dw in wtaps:
                        c0 = dw + pw_lo
                        xs = x_ref[r0:r0 + tile_th, c0:c0 + Tw_pad, :]
                        xs = xs.reshape(tile_m, Cin)
                        wt = w_ref[kh * kW + kw]         # (Cout, Cin)
                        part = lax.dot_general(          # (Cout, tile_m), f32 accum on MXU
                            wt, xs, (((1,), (1,)), ((), ())),
                            preferred_element_type=jnp.float32)
                        acc = part if acc is None else acc + part
                if acc is None:
                    acc = jnp.zeros((Cout, tile_m), jnp.float32)
                y = acc + bias_col
                if final_layer:
                    y = jnp.tanh(y)
                else:
                    # Per-(block, parity) mean-centered partial stats (lane/XLU reduce).
                    if Tw_pad != Tw:
                        ym = jnp.where(valid, y, 0.0)
                        mean_c = jnp.sum(ym, axis=1, keepdims=True) * (1.0 / grp_cnt)
                        dev = jnp.where(valid, y - mean_c, 0.0)
                    else:
                        mean_c = jnp.mean(y, axis=1, keepdims=True)
                        dev = y - mean_c
                    m2_c = jnp.sum(dev * dev, axis=1, keepdims=True)
                    st_ref[p] = jnp.concatenate([mean_c, m2_c], axis=1)   # (Cout, 2)
                y_ref[p] = y.astype(y_ref.dtype)         # lane-dense (Cout, tile_m) store

    if final_layer:
        def kernel(x_ref, w_ref, b_ref, y_ref):
            _body(x_ref, w_ref, b_ref, y_ref, None)
    else:
        def kernel(x_ref, w_ref, b_ref, y_ref, st_ref):
            _body(x_ref, w_ref, b_ref, y_ref, st_ref)

    in_specs = [
        pl.BlockSpec((None, Hin_blk, Wp, Cin), lambda b: (b, 0, 0, 0)),
        pl.BlockSpec((kH * kW, Cout, Cin), lambda b: (0, 0, 0)),
        pl.BlockSpec((Cout, 1), lambda b: (0, 0)),
    ]
    y_spec = pl.BlockSpec((None, P, Cout, tile_m), lambda b: (b, 0, 0, 0))
    y_shape = jax.ShapeDtypeStruct((B, P, Cout, tile_m), store_dtype)
    cparams = pltpu.CompilerParams(dimension_semantics=("parallel",),
                                   vmem_limit_bytes=vmem_limit)

    if final_layer:
        y_out = pl.pallas_call(
            kernel, out_shape=y_shape, grid=(B,),
            in_specs=in_specs, out_specs=y_spec, compiler_params=cparams,
        )(x_blk, w_all, b_col)
        y = y_out.astype(jnp.float32)
    else:
        y_out, stats = pl.pallas_call(
            kernel,
            out_shape=(y_shape, jax.ShapeDtypeStruct((B, P, Cout, 2), jnp.float32)),
            grid=(B,),
            in_specs=in_specs,
            out_specs=(y_spec, pl.BlockSpec((None, P, Cout, 2), lambda b: (b, 0, 0, 0))),
            compiler_params=cparams,
        )(x_blk, w_all, b_col)

        # Exact training-mode batch stats: Chan-style combine of centered partials.
        mean_g = stats[..., 0]                           # (B, P, Cout)
        m2_g = stats[..., 1]
        mu = jnp.mean(mean_g, axis=(0, 1))               # (Cout,)
        var = (jnp.mean(m2_g, axis=(0, 1)) / grp_cnt
               + jnp.mean((mean_g - mu[None, None, :]) ** 2, axis=(0, 1)))
        g = jnp.ones((Cout,), jnp.float32) if gamma is None else gamma.astype(jnp.float32)
        b_ = jnp.zeros((Cout,), jnp.float32) if beta is None else beta.astype(jnp.float32)
        scale = g * lax.rsqrt(var + eps)
        shift = b_ - mu * scale
        # BN + ReLU fused by XLA into the un-shuffle transpose below (single HBM pass).
        y = y_out.astype(jnp.float32)
        y = jnp.maximum(y * scale[None, None, :, None] + shift[None, None, :, None], 0.0)

    # Parity un-shuffle straight to NCHW (drop width padding), one transpose.
    y = y.reshape(N, n_th, n_ph, n_pw, Cout, tile_th, Tw_pad)[..., :Tw]
    out = jnp.transpose(y, (0, 4, 1, 5, 2, 6, 3)).reshape(N, Cout, Hout, Wout)
    return out


# ------------------------------- reference -------------------------------------

def _reference(x, weight, bias, *, stride, padding, final_layer, eps):
    """Pure-JAX reference using lax.conv_general_dilated (same math as PyTorch)."""
    Cin, Cout, kH, kW = weight.shape
    wconv = jnp.transpose(weight[:, :, ::-1, ::-1], (1, 0, 2, 3))   # (Cout, Cin, kH, kW)
    y = jax.lax.conv_general_dilated(
        x, wconv, window_strides=(1, 1),
        padding=[(kH - 1 - padding,) * 2, (kW - 1 - padding,) * 2],
        lhs_dilation=(stride, stride),
        dimension_numbers=("NCHW", "OIHW", "NCHW"))
    y = y + bias.reshape(1, Cout, 1, 1)
    if final_layer:
        return jnp.tanh(y)
    mean = jnp.mean(y, axis=(0, 2, 3), keepdims=True)
    var = jnp.mean((y - mean) ** 2, axis=(0, 2, 3), keepdims=True)
    return jnp.maximum((y - mean) * jax.lax.rsqrt(var + eps), 0.0)


if __name__ == "__main__":
    key = jax.random.PRNGKey(0)
    N, Cin, Cout, H, W, K = 2, 4, 8, 16, 16, 4
    kx, kw_key = jax.random.split(key)

    x = jax.random.normal(kx, (N, Cin, H, W), jnp.float32)

    # Deterministic xavier_uniform_ on the ConvTranspose2d weight (Cin, Cout, kH, kW):
    # PyTorch fan_in = Cout*K*K, fan_out = Cin*K*K.  Bias is zero-initialized.
    fan_in, fan_out = Cout * K * K, Cin * K * K
    bound = float(np.sqrt(6.0 / (fan_in + fan_out)))
    weight = jax.random.uniform(kw_key, (Cin, Cout, K, K), jnp.float32, -bound, bound)
    bias = jnp.zeros((Cout,), jnp.float32)

    # Hidden DeConv block: ConvTranspose2d -> BatchNorm2d (batch stats) -> ReLU (bf16 MXU).
    fwd = jax.jit(functools.partial(deconv_forward, stride=2, padding=1,
                                    final_layer=False))
    out = jax.block_until_ready(fwd(x, weight, bias))
    ref = _reference(x, weight, bias, stride=2, padding=1, final_layer=False, eps=1e-5)
    assert out.shape == (N, Cout, 2 * H, 2 * W), out.shape
    np.testing.assert_allclose(np.asarray(out), np.asarray(ref), atol=5e-2, rtol=5e-2)

    # Same block with f32 matmul operands / f32 intermediates (tight structural check).
    fwd32 = jax.jit(functools.partial(deconv_forward, stride=2, padding=1,
                                      final_layer=False, compute_dtype=jnp.float32))
    out32 = jax.block_until_ready(fwd32(x, weight, bias))
    np.testing.assert_allclose(np.asarray(out32), np.asarray(ref), atol=2e-3, rtol=2e-3)

    # Final DeConv block: ConvTranspose2d -> Tanh.
    fwdf = jax.jit(functools.partial(deconv_forward, stride=2, padding=1,
                                     final_layer=True))
    outf = jax.block_until_ready(fwdf(x, weight, bias))
    reff = _reference(x, weight, bias, stride=2, padding=1, final_layer=True, eps=1e-5)
    np.testing.assert_allclose(np.asarray(outf), np.asarray(reff), atol=2e-2, rtol=2e-2)

    print("KERNEL_OK")
</pallas_src>

<mosaic_0001>
module attributes {stable_mosaic.version = 11 : i64} {
  func.func @kernel(%arg0: i32, %arg1: memref<1x18x18x4xbf16, #tpu.memory_space<vmem>>, %arg2: memref<16x8x4xbf16, #tpu.memory_space<vmem>>, %arg3: memref<8x1xf32, #tpu.memory_space<vmem>>, %arg4: memref<1x4x8x256xbf16, #tpu.memory_space<vmem>>, %arg5: memref<1x4x8x2xf32, #tpu.memory_space<vmem>>) attributes {dimension_semantics = [#tpu.dimension_semantics<parallel>], iteration_bounds = array<i64: 2>, scalar_prefetch = 0 : i64, scratch_operands = 0 : i64, tpu.core_type = #tpu.core_type<tc>, window_params = [{transform_indices = @transform_0, window_bounds = array<i64: 1, 18, 18, 4>}, {pipeline_mode = #tpu.pipeline_mode<synchronous>, transform_indices = @transform_1, window_bounds = array<i64: 16, 8, 4>}, {pipeline_mode = #tpu.pipeline_mode<synchronous>, transform_indices = @transform_2, window_bounds = array<i64: 8, 1>}, {transform_indices = @transform_3, window_bounds = array<i64: 1, 4, 8, 256>}, {transform_indices = @transform_4, window_bounds = array<i64: 1, 4, 8, 2>}]} {
    %c0 = arith.constant 0 : index
    %c0_0 = arith.constant 0 : index
    %0 = vector.load %arg3[%c0, %c0_0] : memref<8x1xf32, #tpu.memory_space<vmem>>, vector<8x1xf32>
    %c0_1 = arith.constant 0 : index
    %c1 = arith.constant 1 : index
    %c1_2 = arith.constant 1 : index
    %c0_3 = arith.constant 0 : index
    %1 = vector.load %arg1[%c0_1, %c1, %c1_2, %c0_3] : memref<1x18x18x4xbf16, #tpu.memory_space<vmem>>, vector<1x16x16x4xbf16>
    %2 = vector.shape_cast %1 : vector<1x16x16x4xbf16> to vector<16x16x4xbf16>
    %3 = vector.shape_cast %2 : vector<16x16x4xbf16> to vector<256x4xbf16>
    %c5 = arith.constant 5 : index
    %c0_4 = arith.constant 0 : index
    %c0_5 = arith.constant 0 : index
    %4 = vector.load %arg2[%c5, %c0_4, %c0_5] : memref<16x8x4xbf16, #tpu.memory_space<vmem>>, vector<1x8x4xbf16>
    %5 = vector.shape_cast %4 : vector<1x8x4xbf16> to vector<8x4xbf16>
    %cst = arith.constant dense<0.000000e+00> : vector<8x256xf32>
    %6 = tpu.matmul %5, %3, %cst {dimension_numbers = #tpu.dot_dimension_numbers<[1], [1], [0], [0], [0, 0, 1, 0], [], []>} : vector<8x4xbf16>, vector<256x4xbf16>, vector<8x256xf32> -> vector<8x256xf32>
    %c0_6 = arith.constant 0 : index
    %c1_7 = arith.constant 1 : index
    %c0_8 = arith.constant 0 : index
    %c0_9 = arith.constant 0 : index
    %7 = vector.load %arg1[%c0_6, %c1_7, %c0_8, %c0_9] : memref<1x18x18x4xbf16, #tpu.memory_space<vmem>>, vector<1x16x16x4xbf16>
    %8 = vector.shape_cast %7 : vector<1x16x16x4xbf16> to vector<16x16x4xbf16>
    %9 = vector.shape_cast %8 : vector<16x16x4xbf16> to vector<256x4xbf16>
    %c7 = arith.constant 7 : index
    %c0_10 = arith.constant 0 : index
    %c0_11 = arith.constant 0 : index
    %10 = vector.load %arg2[%c7, %c0_10, %c0_11] : memref<16x8x4xbf16, #tpu.memory_space<vmem>>, vector<1x8x4xbf16>
    %11 = vector.shape_cast %10 : vector<1x8x4xbf16> to vector<8x4xbf16>
    %cst_12 = arith.constant dense<0.000000e+00> : vector<8x256xf32>
    %12 = tpu.matmul %11, %9, %cst_12 {dimension_numbers = #tpu.dot_dimension_numbers<[1], [1], [0], [0], [0, 0, 1, 0], [], []>} : vector<8x4xbf16>, vector<256x4xbf16>, vector<8x256xf32> -> vector<8x256xf32>
    %13 = arith.addf %6, %12 : vector<8x256xf32>
    %c0_13 = arith.constant 0 : index
    %c0_14 = arith.constant 0 : index
    %c1_15 = arith.constant 1 : index
    %c0_16 = arith.constant 0 : index
    %14 = vector.load %arg1[%c0_13, %c0_14, %c1_15, %c0_16] : memref<1x18x18x4xbf16, #tpu.memory_space<vmem>>, vector<1x16x16x4xbf16>
    %15 = vector.shape_cast %14 : vector<1x16x16x4xbf16> to vector<16x16x4xbf16>
    %16 = vector.shape_cast %15 : vector<16x16x4xbf16> to vector<256x4xbf16>
    %c13 = arith.constant 13 : index
    %c0_17 = arith.constant 0 : index
    %c0_18 = arith.constant 0 : index
    %17 = vector.load %arg2[%c13, %c0_17, %c0_18] : memref<16x8x4xbf16, #tpu.memory_space<vmem>>, vector<1x8x4xbf16>
    %18 = vector.shape_cast %17 : vector<1x8x4xbf16> to vector<8x4xbf16>
    %cst_19 = arith.constant dense<0.000000e+00> : vector<8x256xf32>
    %19 = tpu.matmul %18, %16, %cst_19 {dimension_numbers = #tpu.dot_dimension_numbers<[1], [1], [0], [0], [0, 0, 1, 0], [], []>} : vector<8x4xbf16>, vector<256x4xbf16>, vector<8x256xf32> -> vector<8x256xf32>
    %20 = arith.addf %13, %19 : vector<8x256xf32>
    %c0_20 = arith.constant 0 : index
    %c0_21 = arith.constant 0 : index
    %c0_22 = arith.constant 0 : index
    %c0_23 = arith.constant 0 : index
    %21 = vector.load %arg1[%c0_20, %c0_21, %c0_22, %c0_23] : memref<1x18x18x4xbf16, #tpu.memory_space<vmem>>, vector<1x16x16x4xbf16>
    %22 = vector.shape_cast %21 : vector<1x16x16x4xbf16> to vector<16x16x4xbf16>
    %23 = vector.shape_cast %22 : vector<16x16x4xbf16> to vector<256x4xbf16>
    %c15 = arith.constant 15 : index
    %c0_24 = arith.constant 0 : index
    %c0_25 = arith.constant 0 : index
    %24 = vector.load %arg2[%c15, %c0_24, %c0_25] : memref<16x8x4xbf16, #tpu.memory_space<vmem>>, vector<1x8x4xbf16>
    %25 = vector.shape_cast %24 : vector<1x8x4xbf16> to vector<8x4xbf16>
    %cst_26 = arith.constant dense<0.000000e+00> : vector<8x256xf32>
    %26 = tpu.matmul %25, %23, %cst_26 {dimension_numbers = #tpu.dot_dimension_numbers<[1], [1], [0], [0], [0, 0, 1, 0], [], []>} : vector<8x4xbf16>, vector<256x4xbf16>, vector<8x256xf32> -> vector<8x256xf32>
    %27 = arith.addf %20, %26 : vector<8x256xf32>
    %28 = vector.broadcast %0 : vector<8x1xf32> to vector<8x256xf32>
    %29 = arith.addf %27, %28 : vector<8x256xf32>
    %cst_27 = arith.constant dense<0.000000e+00> : vector<8xf32>
    %30 = vector.multi_reduction <add>, %29, %cst_27 [1] : vector<8x256xf32> to vector<8xf32>
    %31 = vector.shape_cast %30 : vector<8xf32> to vector<8x1xf32>
    %cst_28 = arith.constant 2.560000e+02 : f32
    %32 = vector.broadcast %cst_28 : f32 to vector<8x1xf32>
    %33 = arith.divf %31, %32 : vector<8x1xf32>
    %34 = vector.broadcast %33 : vector<8x1xf32> to vector<8x256xf32>
    %35 = arith.subf %29, %34 : vector<8x256xf32>
    %36 = arith.mulf %35, %35 : vector<8x256xf32>
    %cst_29 = arith.constant dense<0.000000e+00> : vector<8xf32>
    %37 = vector.multi_reduction <add>, %36, %cst_29 [1] : vector<8x256xf32> to vector<8xf32>
    %38 = vector.shape_cast %37 : vector<8xf32> to vector<8x1xf32>
    %39 = tpu.concatenate %33, %38 in 1 : vector<8x1xf32>, vector<8x1xf32> -> vector<8x2xf32>
    %c0_30 = arith.constant 0 : index
    %c0_31 = arith.constant 0 : index
    %c0_32 = arith.constant 0 : index
    %c0_33 = arith.constant 0 : index
    %40 = vector.load %arg5[%c0_30, %c0_31, %c0_32, %c0_33] : memref<1x4x8x2xf32, #tpu.memory_space<vmem>>, vector<1x1x8x2xf32>
    %41 = vector.shape_cast %40 : vector<1x1x8x2xf32> to vector<8x2xf32>
    %42 = vector.shape_cast %39 : vector<8x2xf32> to vector<1x1x8x2xf32>
    tpu.vector_store %arg5[%c0_30, %c0_31, %c0_32, %c0_33], %42 {strides = array<i32>} : memref<1x4x8x2xf32, #tpu.memory_space<vmem>>, vector<1x1x8x2xf32>,
    %43 = arith.truncf %29 : vector<8x256xf32> to vector<8x256xbf16>
    %c0_34 = arith.constant 0 : index
    %c0_35 = arith.constant 0 : index
    %c0_36 = arith.constant 0 : index
    %c0_37 = arith.constant 0 : index
    %44 = vector.load %arg4[%c0_34, %c0_35, %c0_36, %c0_37] : memref<1x4x8x256xbf16, #tpu.memory_space<vmem>>, vector<1x1x8x256xbf16>
    %45 = vector.shape_cast %44 : vector<1x1x8x256xbf16> to vector<8x256xbf16>
    %46 = vector.shape_cast %43 : vector<8x256xbf16> to vector<1x1x8x256xbf16>
    tpu.vector_store %arg4[%c0_34, %c0_35, %c0_36, %c0_37], %46 {strides = array<i32>} : memref<1x4x8x256xbf16, #tpu.memory_space<vmem>>, vector<1x1x8x256xbf16>,
    %c0_38 = arith.constant 0 : index
    %c1_39 = arith.constant 1 : index
    %c2 = arith.constant 2 : index
    %c0_40 = arith.constant 0 : index
    %47 = vector.load %arg1[%c0_38, %c1_39, %c2, %c0_40] : memref<1x18x18x4xbf16, #tpu.memory_space<vmem>>, vector<1x16x16x4xbf16>
    %48 = vector.shape_cast %47 : vector<1x16x16x4xbf16> to vector<16x16x4xbf16>
    %49 = vector.shape_cast %48 : vector<16x16x4xbf16> to vector<256x4xbf16>
    %c4 = arith.constant 4 : index
    %c0_41 = arith.constant 0 : index
    %c0_42 = arith.constant 0 : index
    %50 = vector.load %arg2[%c4, %c0_41, %c0_42] : memref<16x8x4xbf16, #tpu.memory_space<vmem>>, vector<1x8x4xbf16>
    %51 = vector.shape_cast %50 : vector<1x8x4xbf16> to vector<8x4xbf16>
    %cst_43 = arith.constant dense<0.000000e+00> : vector<8x256xf32>
    %52 = tpu.matmul %51, %49, %cst_43 {dimension_numbers = #tpu.dot_dimension_numbers<[1], [1], [0], [0], [0, 0, 1, 0], [], []>} : vector<8x4xbf16>, vector<256x4xbf16>, vector<8x256xf32> -> vector<8x256xf32>
    %c0_44 = arith.constant 0 : index
    %c1_45 = arith.constant 1 : index
    %c1_46 = arith.constant 1 : index
    %c0_47 = arith.constant 0 : index
    %53 = vector.load %arg1[%c0_44, %c1_45, %c1_46, %c0_47] : memref<1x18x18x4xbf16, #tpu.memory_space<vmem>>, vector<1x16x16x4xbf16>
    %54 = vector.shape_cast %53 : vector<1x16x16x4xbf16> to vector<16x16x4xbf16>
    %55 = vector.shape_cast %54 : vector<16x16x4xbf16> to vector<256x4xbf16>
    %c6 = arith.constant 6 : index
    %c0_48 = arith.constant 0 : index
    %c0_49 = arith.constant 0 : index
    %56 = vector.load %arg2[%c6, %c0_48, %c0_49] : memref<16x8x4xbf16, #tpu.memory_space<vmem>>, vector<1x8x4xbf16>
    %57 = vector.shape_cast %56 : vector<1x8x4xbf16> to vector<8x4xbf16>
    %cst_50 = arith.constant dense<0.000000e+00> : vector<8x256xf32>
    %58 = tpu.matmul %57, %55, %cst_50 {dimension_numbers = #tpu.dot_dimension_numbers<[1], [1], [0], [0], [0, 0, 1, 0], [], []>} : vector<8x4xbf16>, vector<256x4xbf16>, vector<8x256xf32> -> vector<8x256xf32>
    %59 = arith.addf %52, %58 : vector<8x256xf32>
    %c0_51 = arith.constant 0 : index
    %c0_52 = arith.constant 0 : index
    %c2_53 = arith.constant 2 : index
    %c0_54 = arith.constant 0 : index
    %60 = vector.load %arg1[%c0_51, %c0_52, %c2_53, %c0_54] : memref<1x18x18x4xbf16, #tpu.memory_space<vmem>>, vector<1x16x16x4xbf16>
    %61 = vector.shape_cast %60 : vector<1x16x16x4xbf16> to vector<16x16x4xbf16>
    %62 = vector.shape_cast %61 : vector<16x16x4xbf16> to vector<256x4xbf16>
    %c12 = arith.constant 12 : index
    %c0_55 = arith.constant 0 : index
    %c0_56 = arith.constant 0 : index
    %63 = vector.load %arg2[%c12, %c0_55, %c0_56] : memref<16x8x4xbf16, #tpu.memory_space<vmem>>, vector<1x8x4xbf16>
    %64 = vector.shape_cast %63 : vector<1x8x4xbf16> to vector<8x4xbf16>
    %cst_57 = arith.constant dense<0.000000e+00> : vector<8x256xf32>
    %65 = tpu.matmul %64, %62, %cst_57 {dimension_numbers = #tpu.dot_dimension_numbers<[1], [1], [0], [0], [0, 0, 1, 0], [], []>} : vector<8x4xbf16>, vector<256x4xbf16>, vector<8x256xf32> -> vector<8x256xf32>
    %66 = arith.addf %59, %65 : vector<8x256xf32>
    %c0_58 = arith.constant 0 : index
    %c0_59 = arith.constant 0 : index
    %c1_60 = arith.constant 1 : index
    %c0_61 = arith.constant 0 : index
    %67 = vector.load %arg1[%c0_58, %c0_59, %c1_60, %c0_61] : memref<1x18x18x4xbf16, #tpu.memory_space<vmem>>, vector<1x16x16x4xbf16>
    %68 = vector.shape_cast %67 : vector<1x16x16x4xbf16> to vector<16x16x4xbf16>
    %69 = vector.shape_cast %68 : vector<16x16x4xbf16> to vector<256x4xbf16>
    %c14 = arith.constant 14 : index
    %c0_62 = arith.constant 0 : index
    %c0_63 = arith.constant 0 : index
    %70 = vector.load %arg2[%c14, %c0_62, %c0_63] : memref<16x8x4xbf16, #tpu.memory_space<vmem>>, vector<1x8x4xbf16>
    %71 = vector.shape_cast %70 : vector<1x8x4xbf16> to vector<8x4xbf16>
    %cst_64 = arith.constant dense<0.000000e+00> : vector<8x256xf32>
    %72 = tpu.matmul %71, %69, %cst_64 {dimension_numbers = #tpu.dot_dimension_numbers<[1], [1], [0], [0], [0, 0, 1, 0], [], []>} : vector<8x4xbf16>, vector<256x4xbf16>, vector<8x256xf32> -> vector<8x256xf32>
    %73 = arith.addf %66, %72 : vector<8x256xf32>
    %74 = vector.broadcast %0 : vector<8x1xf32> to vector<8x256xf32>
    %75 = arith.addf %73, %74 : vector<8x256xf32>
    %cst_65 = arith.constant dense<0.000000e+00> : vector<8xf32>
    %76 = vector.multi_reduction <add>, %75, %cst_65 [1] : vector<8x256xf32> to vector<8xf32>
    %77 = vector.shape_cast %76 : vector<8xf32> to vector<8x1xf32>
    %cst_66 = arith.constant 2.560000e+02 : f32
    %78 = vector.broadcast %cst_66 : f32 to vector<8x1xf32>
    %79 = arith.divf %77, %78 : vector<8x1xf32>
    %80 = vector.broadcast %79 : vector<8x1xf32> to vector<8x256xf32>
    %81 = arith.subf %75, %80 : vector<8x256xf32>
    %82 = arith.mulf %81, %81 : vector<8x256xf32>
    %cst_67 = arith.constant dense<0.000000e+00> : vector<8xf32>
    %83 = vector.multi_reduction <add>, %82, %cst_67 [1] : vector<8x256xf32> to vector<8xf32>
    %84 = vector.shape_cast %83 : vector<8xf32> to vector<8x1xf32>
    %85 = tpu.concatenate %79, %84 in 1 : vector<8x1xf32>, vector<8x1xf32> -> vector<8x2xf32>
    %c0_68 = arith.constant 0 : index
    %c1_69 = arith.constant 1 : index
    %c0_70 = arith.constant 0 : index
    %c0_71 = arith.constant 0 : index
    %86 = vector.load %arg5[%c0_68, %c1_69, %c0_70, %c0_71] : memref<1x4x8x2xf32, #tpu.memory_space<vmem>>, vector<1x1x8x2xf32>
    %87 = vector.shape_cast %86 : vector<1x1x8x2xf32> to vector<8x2xf32>
    %88 = vector.shape_cast %85 : vector<8x2xf32> to vector<1x1x8x2xf32>
    tpu.vector_store %arg5[%c0_68, %c1_69, %c0_70, %c0_71], %88 {strides = array<i32>} : memref<1x4x8x2xf32, #tpu.memory_space<vmem>>, vector<1x1x8x2xf32>,
    %89 = arith.truncf %75 : vector<8x256xf32> to vector<8x256xbf16>
    %c0_72 = arith.constant 0 : index
    %c1_73 = arith.constant 1 : index
    %c0_74 = arith.constant 0 : index
    %c0_75 = arith.constant 0 : index
    %90 = vector.load %arg4[%c0_72, %c1_73, %c0_74, %c0_75] : memref<1x4x8x256xbf16, #tpu.memory_space<vmem>>, vector<1x1x8x256xbf16>
    %91 = vector.shape_cast %90 : vector<1x1x8x256xbf16> to vector<8x256xbf16>
    %92 = vector.shape_cast %89 : vector<8x256xbf16> to vector<1x1x8x256xbf16>
    tpu.vector_store %arg4[%c0_72, %c1_73, %c0_74, %c0_75], %92 {strides = array<i32>} : memref<1x4x8x256xbf16, #tpu.memory_space<vmem>>, vector<1x1x8x256xbf16>,
    %c0_76 = arith.constant 0 : index
    %c2_77 = arith.constant 2 : index
    %c1_78 = arith.constant 1 : index
    %c0_79 = arith.constant 0 : index
    %93 = vector.load %arg1[%c0_76, %c2_77, %c1_78, %c0_79] : memref<1x18x18x4xbf16, #tpu.memory_space<vmem>>, vector<1x16x16x4xbf16>
    %94 = vector.shape_cast %93 : vector<1x16x16x4xbf16> to vector<16x16x4xbf16>
    %95 = vector.shape_cast %94 : vector<16x16x4xbf16> to vector<256x4xbf16>
    %c1_80 = arith.constant 1 : index
    %c0_81 = arith.constant 0 : index
    %c0_82 = arith.constant 0 : index
    %96 = vector.load %arg2[%c1_80, %c0_81, %c0_82] : memref<16x8x4xbf16, #tpu.memory_space<vmem>>, vector<1x8x4xbf16>
    %97 = vector.shape_cast %96 : vector<1x8x4xbf16> to vector<8x4xbf16>
    %cst_83 = arith.constant dense<0.000000e+00> : vector<8x256xf32>
    %98 = tpu.matmul %97, %95, %cst_83 {dimension_numbers = #tpu.dot_dimension_numbers<[1], [1], [0], [0], [0, 0, 1, 0], [], []>} : vector<8x4xbf16>, vector<256x4xbf16>, vector<8x256xf32> -> vector<8x256xf32>
    %c0_84 = arith.constant 0 : index
    %c2_85 = arith.constant 2 : index
    %c0_86 = arith.constant 0 : index
    %c0_87 = arith.constant 0 : index
    %99 = vector.load %arg1[%c0_84, %c2_85, %c0_86, %c0_87] : memref<1x18x18x4xbf16, #tpu.memory_space<vmem>>, vector<1x16x16x4xbf16>
    %100 = vector.shape_cast %99 : vector<1x16x16x4xbf16> to vector<16x16x4xbf16>
    %101 = vector.shape_cast %100 : vector<16x16x4xbf16> to vector<256x4xbf16>
    %c3 = arith.constant 3 : index
    %c0_88 = arith.constant 0 : index
    %c0_89 = arith.constant 0 : index
    %102 = vector.load %arg2[%c3, %c0_88, %c0_89] : memref<16x8x4xbf16, #tpu.memory_space<vmem>>, vector<1x8x4xbf16>
    %103 = vector.shape_cast %102 : vector<1x8x4xbf16> to vector<8x4xbf16>
    %cst_90 = arith.constant dense<0.000000e+00> : vector<8x256xf32>
    %104 = tpu.matmul %103, %101, %cst_90 {dimension_numbers = #tpu.dot_dimension_numbers<[1], [1], [0], [0], [0, 0, 1, 0], [], []>} : vector<8x4xbf16>, vector<256x4xbf16>, vector<8x256xf32> -> vector<8x256xf32>
    %105 = arith.addf %98, %104 : vector<8x256xf32>
    %c0_91 = arith.constant 0 : index
    %c1_92 = arith.constant 1 : index
    %c1_93 = arith.constant 1 : index
    %c0_94 = arith.constant 0 : index
    %106 = vector.load %arg1[%c0_91, %c1_92, %c1_93, %c0_94] : memref<1x18x18x4xbf16, #tpu.memory_space<vmem>>, vector<1x16x16x4xbf16>
    %107 = vector.shape_cast %106 : vector<1x16x16x4xbf16> to vector<16x16x4xbf16>
    %108 = vector.shape_cast %107 : vector<16x16x4xbf16> to vector<256x4xbf16>
    %c9 = arith.constant 9 : index
    %c0_95 = arith.constant 0 : index
    %c0_96 = arith.constant 0 : index
    %109 = vector.load %arg2[%c9, %c0_95, %c0_96] : memref<16x8x4xbf16, #tpu.memory_space<vmem>>, vector<1x8x4xbf16>
    %110 = vector.shape_cast %109 : vector<1x8x4xbf16> to vector<8x4xbf16>
    %cst_97 = arith.constant dense<0.000000e+00> : vector<8x256xf32>
    %111 = tpu.matmul %110, %108, %cst_97 {dimension_numbers = #tpu.dot_dimension_numbers<[1], [1], [0], [0], [0, 0, 1, 0], [], []>} : vector<8x4xbf16>, vector<256x4xbf16>, vector<8x256xf32> -> vector<8x256xf32>
    %112 = arith.addf %105, %111 : vector<8x256xf32>
    %c0_98 = arith.constant 0 : index
    %c1_99 = arith.constant 1 : index
    %c0_100 = arith.constant 0 : index
    %c0_101 = arith.constant 0 : index
    %113 = vector.load %arg1[%c0_98, %c1_99, %c0_100, %c0_101] : memref<1x18x18x4xbf16, #tpu.memory_space<vmem>>, vector<1x16x16x4xbf16>
    %114 = vector.shape_cast %113 : vector<1x16x16x4xbf16> to vector<16x16x4xbf16>
    %115 = vector.shape_cast %114 : vector<16x16x4xbf16> to vector<256x4xbf16>
    %c11 = arith.constant 11 : index
    %c0_102 = arith.constant 0 : index
    %c0_103 = arith.constant 0 : index
    %116 = vector.load %arg2[%c11, %c0_102, %c0_103] : memref<16x8x4xbf16, #tpu.memory_space<vmem>>, vector<1x8x4xbf16>
    %117 = vector.shape_cast %116 : vector<1x8x4xbf16> to vector<8x4xbf16>
    %cst_104 = arith.constant dense<0.000000e+00> : vector<8x256xf32>
    %118 = tpu.matmul %117, %115, %cst_104 {dimension_numbers = #tpu.dot_dimension_numbers<[1], [1], [0], [0], [0, 0, 1, 0], [], []>} : vector<8x4xbf16>, vector<256x4xbf16>, vector<8x256xf32> -> vector<8x256xf32>
    %119 = arith.addf %112, %118 : vector<8x256xf32>
    %120 = vector.broadcast %0 : vector<8x1xf32> to vector<8x256xf32>
    %121 = arith.addf %119, %120 : vector<8x256xf32>
    %cst_105 = arith.constant dense<0.000000e+00> : vector<8xf32>
    %122 = vector.multi_reduction <add>, %121, %cst_105 [1] : vector<8x256xf32> to vector<8xf32>
    %123 = vector.shape_cast %122 : vector<8xf32> to vector<8x1xf32>
    %cst_106 = arith.constant 2.560000e+02 : f32
    %124 = vector.broadcast %cst_106 : f32 to vector<8x1xf32>
    %125 = arith.divf %123, %124 : vector<8x1xf32>
    %126 = vector.broadcast %125 : vector<8x1xf32> to vector<8x256xf32>
    %127 = arith.subf %121, %126 : vector<8x256xf32>
    %128 = arith.mulf %127, %127 : vector<8x256xf32>
    %cst_107 = arith.constant dense<0.000000e+00> : vector<8xf32>
    %129 = vector.multi_reduction <add>, %128, %cst_107 [1] : vector<8x256xf32> to vector<8xf32>
    %130 = vector.shape_cast %129 : vector<8xf32> to vector<8x1xf32>
    %131 = tpu.concatenate %125, %130 in 1 : vector<8x1xf32>, vector<8x1xf32> -> vector<8x2xf32>
    %c0_108 = arith.constant 0 : index
    %c2_109 = arith.constant 2 : index
    %c0_110 = arith.constant 0 : index
    %c0_111 = arith.constant 0 : index
    %132 = vector.load %arg5[%c0_108, %c2_109, %c0_110, %c0_111] : memref<1x4x8x2xf32, #tpu.memory_space<vmem>>, vector<1x1x8x2xf32>
    %133 = vector.shape_cast %132 : vector<1x1x8x2xf32> to vector<8x2xf32>
    %134 = vector.shape_cast %131 : vector<8x2xf32> to vector<1x1x8x2xf32>
    tpu.vector_store %arg5[%c0_108, %c2_109, %c0_110, %c0_111], %134 {strides = array<i32>} : memref<1x4x8x2xf32, #tpu.memory_space<vmem>>, vector<1x1x8x2xf32>,
    %135 = arith.truncf %121 : vector<8x256xf32> to vector<8x256xbf16>
    %c0_112 = arith.constant 0 : index
    %c2_113 = arith.constant 2 : index
    %c0_114 = arith.constant 0 : index
    %c0_115 = arith.constant 0 : index
    %136 = vector.load %arg4[%c0_112, %c2_113, %c0_114, %c0_115] : memref<1x4x8x256xbf16, #tpu.memory_space<vmem>>, vector<1x1x8x256xbf16>
    %137 = vector.shape_cast %136 : vector<1x1x8x256xbf16> to vector<8x256xbf16>
    %138 = vector.shape_cast %135 : vector<8x256xbf16> to vector<1x1x8x256xbf16>
    tpu.vector_store %arg4[%c0_112, %c2_113, %c0_114, %c0_115], %138 {strides = array<i32>} : memref<1x4x8x256xbf16, #tpu.memory_space<vmem>>, vector<1x1x8x256xbf16>,
    %c0_116 = arith.constant 0 : index
    %c2_117 = arith.constant 2 : index
    %c2_118 = arith.constant 2 : index
    %c0_119 = arith.constant 0 : index
    %139 = vector.load %arg1[%c0_116, %c2_117, %c2_118, %c0_119] : memref<1x18x18x4xbf16, #tpu.memory_space<vmem>>, vector<1x16x16x4xbf16>
    %140 = vector.shape_cast %139 : vector<1x16x16x4xbf16> to vector<16x16x4xbf16>
    %141 = vector.shape_cast %140 : vector<16x16x4xbf16> to vector<256x4xbf16>
    %c0_120 = arith.constant 0 : index
    %c0_121 = arith.constant 0 : index
    %c0_122 = arith.constant 0 : index
    %142 = vector.load %arg2[%c0_120, %c0_121, %c0_122] : memref<16x8x4xbf16, #tpu.memory_space<vmem>>, vector<1x8x4xbf16>
    %143 = vector.shape_cast %142 : vector<1x8x4xbf16> to vector<8x4xbf16>
    %cst_123 = arith.constant dense<0.000000e+00> : vector<8x256xf32>
    %144 = tpu.matmul %143, %141, %cst_123 {dimension_numbers = #tpu.dot_dimension_numbers<[1], [1], [0], [0], [0, 0, 1, 0], [], []>} : vector<8x4xbf16>, vector<256x4xbf16>, vector<8x256xf32> -> vector<8x256xf32>
    %c0_124 = arith.constant 0 : index
    %c2_125 = arith.constant 2 : index
    %c1_126 = arith.constant 1 : index
    %c0_127 = arith.constant 0 : index
    %145 = vector.load %arg1[%c0_124, %c2_125, %c1_126, %c0_127] : memref<1x18x18x4xbf16, #tpu.memory_space<vmem>>, vector<1x16x16x4xbf16>
    %146 = vector.shape_cast %145 : vector<1x16x16x4xbf16> to vector<16x16x4xbf16>
    %147 = vector.shape_cast %146 : vector<16x16x4xbf16> to vector<256x4xbf16>
    %c2_128 = arith.constant 2 : index
    %c0_129 = arith.constant 0 : index
    %c0_130 = arith.constant 0 : index
    %148 = vector.load %arg2[%c2_128, %c0_129, %c0_130] : memref<16x8x4xbf16, #tpu.memory_space<vmem>>, vector<1x8x4xbf16>
    %149 = vector.shape_cast %148 : vector<1x8x4xbf16> to vector<8x4xbf16>
    %cst_131 = arith.constant dense<0.000000e+00> : vector<8x256xf32>
    %150 = tpu.matmul %149, %147, %cst_131 {dimension_numbers = #tpu.dot_dimension_numbers<[1], [1], [0], [0], [0, 0, 1, 0], [], []>} : vector<8x4xbf16>, vector<256x4xbf16>, vector<8x256xf32> -> vector<8x256xf32>
    %151 = arith.addf %144, %150 : vector<8x256xf32>
    %c0_132 = arith.constant 0 : index
    %c1_133 = arith.constant 1 : index
    %c2_134 = arith.constant 2 : index
    %c0_135 = arith.constant 0 : index
    %152 = vector.load %arg1[%c0_132, %c1_133, %c2_134, %c0_135] : memref<1x18x18x4xbf16, #tpu.memory_space<vmem>>, vector<1x16x16x4xbf16>
    %153 = vector.shape_cast %152 : vector<1x16x16x4xbf16> to vector<16x16x4xbf16>
    %154 = vector.shape_cast %153 : vector<16x16x4xbf16> to vector<256x4xbf16>
    %c8 = arith.constant 8 : index
    %c0_136 = arith.constant 0 : index
    %c0_137 = arith.constant 0 : index
    %155 = vector.load %arg2[%c8, %c0_136, %c0_137] : memref<16x8x4xbf16, #tpu.memory_space<vmem>>, vector<1x8x4xbf16>
    %156 = vector.shape_cast %155 : vector<1x8x4xbf16> to vector<8x4xbf16>
    %cst_138 = arith.constant dense<0.000000e+00> : vector<8x256xf32>
    %157 = tpu.matmul %156, %154, %cst_138 {dimension_numbers = #tpu.dot_dimension_numbers<[1], [1], [0], [0], [0, 0, 1, 0], [], []>} : vector<8x4xbf16>, vector<256x4xbf16>, vector<8x256xf32> -> vector<8x256xf32>
    %158 = arith.addf %151, %157 : vector<8x256xf32>
    %c0_139 = arith.constant 0 : index
    %c1_140 = arith.constant 1 : index
    %c1_141 = arith.constant 1 : index
    %c0_142 = arith.constant 0 : index
    %159 = vector.load %arg1[%c0_139, %c1_140, %c1_141, %c0_142] : memref<1x18x18x4xbf16, #tpu.memory_space<vmem>>, vector<1x16x16x4xbf16>
    %160 = vector.shape_cast %159 : vector<1x16x16x4xbf16> to vector<16x16x4xbf16>
    %161 = vector.shape_cast %160 : vector<16x16x4xbf16> to vector<256x4xbf16>
    %c10 = arith.constant 10 : index
    %c0_143 = arith.constant 0 : index
    %c0_144 = arith.constant 0 : index
    %162 = vector.load %arg2[%c10, %c0_143, %c0_144] : memref<16x8x4xbf16, #tpu.memory_space<vmem>>, vector<1x8x4xbf16>
    %163 = vector.shape_cast %162 : vector<1x8x4xbf16> to vector<8x4xbf16>
    %cst_145 = arith.constant dense<0.000000e+00> : vector<8x256xf32>
    %164 = tpu.matmul %163, %161, %cst_145 {dimension_numbers = #tpu.dot_dimension_numbers<[1], [1], [0], [0], [0, 0, 1, 0], [], []>} : vector<8x4xbf16>, vector<256x4xbf16>, vector<8x256xf32> -> vector<8x256xf32>
    %165 = arith.addf %158, %164 : vector<8x256xf32>
    %166 = vector.broadcast %0 : vector<8x1xf32> to vector<8x256xf32>
    %167 = arith.addf %165, %166 : vector<8x256xf32>
    %cst_146 = arith.constant dense<0.000000e+00> : vector<8xf32>
    %168 = vector.multi_reduction <add>, %167, %cst_146 [1] : vector<8x256xf32> to vector<8xf32>
    %169 = vector.shape_cast %168 : vector<8xf32> to vector<8x1xf32>
    %cst_147 = arith.constant 2.560000e+02 : f32
    %170 = vector.broadcast %cst_147 : f32 to vector<8x1xf32>
    %171 = arith.divf %169, %170 : vector<8x1xf32>
    %172 = vector.broadcast %171 : vector<8x1xf32> to vector<8x256xf32>
    %173 = arith.subf %167, %172 : vector<8x256xf32>
    %174 = arith.mulf %173, %173 : vector<8x256xf32>
    %cst_148 = arith.constant dense<0.000000e+00> : vector<8xf32>
    %175 = vector.multi_reduction <add>, %174, %cst_148 [1] : vector<8x256xf32> to vector<8xf32>
    %176 = vector.shape_cast %175 : vector<8xf32> to vector<8x1xf32>
    %177 = tpu.concatenate %171, %176 in 1 : vector<8x1xf32>, vector<8x1xf32> -> vector<8x2xf32>
    %c0_149 = arith.constant 0 : index
    %c3_150 = arith.constant 3 : index
    %c0_151 = arith.constant 0 : index
    %c0_152 = arith.constant 0 : index
    %178 = vector.load %arg5[%c0_149, %c3_150, %c0_151, %c0_152] : memref<1x4x8x2xf32, #tpu.memory_space<vmem>>, vector<1x1x8x2xf32>
    %179 = vector.shape_cast %178 : vector<1x1x8x2xf32> to vector<8x2xf32>
    %180 = vector.shape_cast %177 : vector<8x2xf32> to vector<1x1x8x2xf32>
    tpu.vector_store %arg5[%c0_149, %c3_150, %c0_151, %c0_152], %180 {strides = array<i32>} : memref<1x4x8x2xf32, #tpu.memory_space<vmem>>, vector<1x1x8x2xf32>,
    %181 = arith.truncf %167 : vector<8x256xf32> to vector<8x256xbf16>
    %c0_153 = arith.constant 0 : index
    %c3_154 = arith.constant 3 : index
    %c0_155 = arith.constant 0 : index
    %c0_156 = arith.constant 0 : index
    %182 = vector.load %arg4[%c0_153, %c3_154, %c0_155, %c0_156] : memref<1x4x8x256xbf16, #tpu.memory_space<vmem>>, vector<1x1x8x256xbf16>
    %183 = vector.shape_cast %182 : vector<1x1x8x256xbf16> to vector<8x256xbf16>
    %184 = vector.shape_cast %181 : vector<8x256xbf16> to vector<1x1x8x256xbf16>
    tpu.vector_store %arg4[%c0_153, %c3_154, %c0_155, %c0_156], %184 {strides = array<i32>} : memref<1x4x8x256xbf16, #tpu.memory_space<vmem>>, vector<1x1x8x256xbf16>,
    return
  }
  func.func @transform_0(%arg0: i32) -> (i32, i32, i32, i32) {
    %c0_i32 = arith.constant 0 : i32
    %c0_i32_0 = arith.constant 0 : i32
    %c0_i32_1 = arith.constant 0 : i32
    %c0_i32_2 = arith.constant 0 : i32
    return %arg0, %c0_i32, %c0_i32_0, %c0_i32_1 : i32, i32, i32, i32
  }
  func.func @transform_1(%arg0: i32) -> (i32, i32, i32) {
    %c0_i32 = arith.constant 0 : i32
    %c0_i32_0 = arith.constant 0 : i32
    %c0_i32_1 = arith.constant 0 : i32
    %c0_i32_2 = arith.constant 0 : i32
    return %c0_i32, %c0_i32_0, %c0_i32_1 : i32, i32, i32
  }
  func.func @transform_2(%arg0: i32) -> (i32, i32) {
    %c0_i32 = arith.constant 0 : i32
    %c0_i32_0 = arith.constant 0 : i32
    %c0_i32_1 = arith.constant 0 : i32
    return %c0_i32, %c0_i32_0 : i32, i32
  }
  func.func @transform_3(%arg0: i32) -> (i32, i32, i32, i32) {
    %c0_i32 = arith.constant 0 : i32
    %c0_i32_0 = arith.constant 0 : i32
    %c0_i32_1 = arith.constant 0 : i32
    %c0_i32_2 = arith.constant 0 : i32
    return %arg0, %c0_i32, %c0_i32_0, %c0_i32_1 : i32, i32, i32, i32
  }
  func.func @transform_4(%arg0: i32) -> (i32, i32, i32, i32) {
    %c0_i32 = arith.constant 0 : i32
    %c0_i32_0 = arith.constant 0 : i32
    %c0_i32_1 = arith.constant 0 : i32
    %c0_i32_2 = arith.constant 0 : i32
    return %arg0, %c0_i32, %c0_i32_0, %c0_i32_1 : i32, i32, i32, i32
  }
}

</mosaic_0001>

<llo_original>
// kernel: deconv_forward.1
$region0: #{deconv_forward.1}
  #allocation0 [shape = 'u32[]', space=smem, size = 0x4, offset = 0x4, fixed_abs, tag = 'smem constant byte address 0x4 - core index']
  #allocation1 [shape = 'u32[72,128]{1,0:T(1,128)}', space=vmem, size = 0x9000, scoped, tag = 'internal scratch']
  %s0 = inlined_call_operand.vmem [shape: bf16[2,18,18,4], index: 0, kind: input, shape index: {}]
  %s1 = inlined_call_operand.vmem [shape: bf16[16,8,4], index: 1, kind: input, shape index: {}]
  %s2 = inlined_call_operand.vmem [shape: f32[8,1], index: 2, kind: input, shape index: {}]
  %s3 = inlined_call_operand.vmem [shape: bf16[2,4,8,256], index: 3, kind: output, shape index: {0}]
  %s4 = inlined_call_operand.vmem [shape: f32[2,4,8,2], index: 4, kind: output, shape index: {1}]
  %5 = xla_tuple %s3, %s4
  %s6 = sld [smem:[#allocation0]]
  $region53: #{deconv_forward.1} parent=0
    _
  %s8 = ssub.s32 1, %s6
  %s9 = scalar_select 0, %s8, %s6
  loop: start=0, step=1, limit=4
  $region2: #{deconv_forward.1} parent=0 // loop_pre_header
    _
  $region3: #{deconv_forward.1} parent=0 // loop_header
    %s11 = sphi 0, %s15
    %p12 = scmp.ge.s32.totalorder %s11, 4
    %s21 = sphi 0, %s23
    %s24 = sphi 0, %s21
    %s25 = sphi 0, %s24
    %s41 = sphi 0, %s25
    %s45 = sphi 0, %s45
    %s47 = sphi 0, %s45
    %s48 = sphi 0, %s47
    %s62 = sphi 0, %s48
    %s66 = sphi 0, %s66
    %s68 = sphi 0, %s66
    %s69 = sphi 0, %s68
    %s83 = sphi 0, %s69
    %s89 = sphi 0, %s91
    %s92 = sphi 0, %s89
    %s93 = sphi 0, %s92
    %s109 = sphi 0, %s93
    %s115 = sphi 0, %s117
    %s118 = sphi 0, %s115
    %s119 = sphi 0, %s118
    %s135 = sphi 0, %s119
  $region4: #{deconv_forward.1} parent=0 // loop_header_branch
    %14 = sbr.rel (%p12) target = $region8
  $region5: #{deconv_forward.1} parent=0 // loop_body
    %s16 = ssub.s32 %s11, 1
    %s17 = ssub.s32 %s11, 2
    %s18 = sadd.s32 %s11, 1
    %s19 = ssub.s32 %s11, %s18
    %p20 = scmp.eq.s32.totalorder %s19, 0
    %s22 = sadd.s32 %s21, 1
    %s23 = scalar_select %p20, %s21, %s22
    %p26 = pneg %p20
    %p27 = scmp.eq.s32.totalorder %s11, 1
    %p28 = por %p26, %p27
    %p29 = scmp.ne.s32.totalorder %s21, %s24
    %p30 = scmp.eq.s32.totalorder %s11, 0
    %p31 = por %p29, %p30
    %p32 = scmp.ne.s32.totalorder %s21, %s24
    %p33 = scmp.eq.s32.totalorder %s16, 1
    %p34 = por %p32, %p33
    %p35 = scmp.ne.s32.totalorder %s24, %s25
    %p36 = scmp.eq.s32.totalorder %s16, 0
    %p37 = por %p35, %p36
    %p38 = scmp.ne.s32.totalorder %s24, %s25
    %p39 = scmp.eq.s32.totalorder %s17, 1
    %p40 = por %p38, %p39
    %p42 = scmp.ne.s32.totalorder %s25, %s41
    %p43 = scmp.eq.s32.totalorder %s17, 0
    %p44 = por %p42, %p43
    %s46 = sadd.s32 %s45, 1
    %p49 = scmp.eq.s32.totalorder %s11, 1
    %p50 = scmp.ne.s32.totalorder %s45, %s47
    %p51 = scmp.eq.s32.totalorder %s11, 0
    %p52 = por %p50, %p51
    %p53 = scmp.ne.s32.totalorder %s45, %s47
    %p54 = scmp.eq.s32.totalorder %s16, 1
    %p55 = por %p53, %p54
    %p56 = scmp.ne.s32.totalorder %s47, %s48
    %p57 = scmp.eq.s32.totalorder %s16, 0
    %p58 = por %p56, %p57
    %p59 = scmp.ne.s32.totalorder %s47, %s48
    %p60 = scmp.eq.s32.totalorder %s17, 1
    %p61 = por %p59, %p60
    %p63 = scmp.ne.s32.totalorder %s48, %s62
    %p64 = scmp.eq.s32.totalorder %s17, 0
    %p65 = por %p63, %p64
    %s67 = sadd.s32 %s66, 1
    %p70 = scmp.eq.s32.totalorder %s11, 1
    %p71 = scmp.ne.s32.totalorder %s66, %s68
    %p72 = scmp.eq.s32.totalorder %s11, 0
    %p73 = por %p71, %p72
    %p74 = scmp.ne.s32.totalorder %s66, %s68
    %p75 = scmp.eq.s32.totalorder %s16, 1
    %p76 = por %p74, %p75
    %p77 = scmp.ne.s32.totalorder %s68, %s69
    %p78 = scmp.eq.s32.totalorder %s16, 0
    %p79 = por %p77, %p78
    %p80 = scmp.ne.s32.totalorder %s68, %s69
    %p81 = scmp.eq.s32.totalorder %s17, 1
    %p82 = por %p80, %p81
    %p84 = scmp.ne.s32.totalorder %s69, %s83
    %p85 = scmp.eq.s32.totalorder %s17, 0
    %p86 = por %p84, %p85
    %s87 = ssub.s32 %s11, %s18
    %p88 = scmp.eq.s32.totalorder %s87, 0
    %s90 = sadd.s32 %s89, 1
    %s91 = scalar_select %p88, %s89, %s90
    %p94 = pneg %p88
    %p95 = scmp.eq.s32.totalorder %s11, 1
    %p96 = por %p94, %p95
    %p97 = scmp.ne.s32.totalorder %s89, %s92
    %p98 = scmp.eq.s32.totalorder %s11, 0
    %p99 = por %p97, %p98
    %p100 = scmp.ne.s32.totalorder %s89, %s92
    %p101 = scmp.eq.s32.totalorder %s16, 1
    %p102 = por %p100, %p101
    %p103 = scmp.ne.s32.totalorder %s92, %s93
    %p104 = scmp.eq.s32.totalorder %s16, 0
    %p105 = por %p103, %p104
    %p106 = scmp.ne.s32.totalorder %s92, %s93
    %p107 = scmp.eq.s32.totalorder %s17, 1
    %p108 = por %p106, %p107
    %p110 = scmp.ne.s32.totalorder %s93, %s109
    %p111 = scmp.eq.s32.totalorder %s17, 0
    %p112 = por %p110, %p111
    %s113 = ssub.s32 %s11, %s18
    %p114 = scmp.eq.s32.totalorder %s113, 0
    %s116 = sadd.s32 %s115, 1
    %s117 = scalar_select %p114, %s115, %s116
    %p120 = pneg %p114
    %p121 = scmp.eq.s32.totalorder %s11, 1
    %p122 = por %p120, %p121
    %p123 = scmp.ne.s32.totalorder %s115, %s118
    %p124 = scmp.eq.s32.totalorder %s11, 0
    %p125 = por %p123, %p124
    %p126 = scmp.ne.s32.totalorder %s115, %s118
    %p127 = scmp.eq.s32.totalorder %s16, 1
    %p128 = por %p126, %p127
    %p129 = scmp.ne.s32.totalorder %s118, %s119
    %p130 = scmp.eq.s32.totalorder %s16, 0
    %p131 = por %p129, %p130
    %p132 = scmp.ne.s32.totalorder %s118, %s119
    %p133 = scmp.eq.s32.totalorder %s17, 1
    %p134 = por %p132, %p133
    %p136 = scmp.ne.s32.totalorder %s119, %s135
    %p137 = scmp.eq.s32.totalorder %s17, 0
    %p138 = por %p136, %p137
    %p139 = scmp.le.s32.totalorder 1, %s11
    %p140 = scmp.lt.s32.totalorder %s11, 3
    %p141 = pnand %p139, %p140
    %p142 = pneg %p141
    // Predicated region
    $region9: #{deconv_forward.1} parent=5 // pred_check
      _
    $region10: #{deconv_forward.1} parent=5 // pred_check_branch
      %144 = sbr.rel (%p141) target = $region12
    $region11: #{deconv_forward.1} parent=5 // pred_region
      %s145 = ssub.s32 %s11, 1
      // Predicated region
      $region13: #{deconv_forward.1} parent=11 // pred_check
        %p146 = pneg %p58
      $region14: #{deconv_forward.1} parent=11 // pred_check_branch
        %148 = sbr.rel (%p146) target = $region16
      $region15: #{deconv_forward.1} parent=11 // pred_region
        _
      $region16: #{deconv_forward.1} parent=11 // pred_fallthru
        _
      // Predicated region
      $region17: #{deconv_forward.1} parent=11 // pred_check
        %p149 = pneg %p79
      $region18: #{deconv_forward.1} parent=11 // pred_check_branch
        %151 = sbr.rel (%p149) target = $region20
      $region19: #{deconv_forward.1} parent=11 // pred_region
        _
      $region20: #{deconv_forward.1} parent=11 // pred_fallthru
        _
    $region12: #{deconv_forward.1} parent=5 // pred_fallthru
      _
    %p152 = scmp.lt.s32.totalorder %s11, 2
    // Predicated region
    $region21: #{deconv_forward.1} parent=5 // pred_check
      %p153 = pneg %p152
    $region22: #{deconv_forward.1} parent=5 // pred_check_branch
      %155 = sbr.rel (%p153) target = $region24
    $region23: #{deconv_forward.1} parent=5 // pred_region
      // Predicated region
      $region25: #{deconv_forward.1} parent=23 // pred_check
        %p156 = pneg %p31
      $region26: #{deconv_forward.1} parent=23 // pred_check_branch
        %158 = sbr.rel (%p156) target = $region28
      $region27: #{deconv_forward.1} parent=23 // pred_region
        %p159 = scmp.lt.s32.totalorder %s11, 1
        %s160 = scalar_select %p159, %s11, 1
        %s161 = smul.addr %s160, 54
        %s162 = smul.addr %s161, 4
        %s163 = scalar_lea.vmem %s0, %s162
      $region28: #{deconv_forward.1} parent=23 // pred_fallthru
        _
    $region24: #{deconv_forward.1} parent=5 // pred_fallthru
      _
    %p164 = scmp.le.s32.totalorder 1, %s11
    %p165 = scmp.lt.s32.totalorder %s11, 3
    %p166 = pnand %p164, %p165
    %p167 = pneg %p166
    // Predicated region
    $region29: #{deconv_forward.1} parent=5 // pred_check
      _
    $region30: #{deconv_forward.1} parent=5 // pred_check_branch
      %169 = sbr.rel (%p166) target = $region32
    $region31: #{deconv_forward.1} parent=5 // pred_region
      %s170 = ssub.s32 %s11, 1
      %p171 = scmp.lt.s32.totalorder %s16, 1
      %s172 = scalar_select %p171, %s16, 1
      %s173 = smul.addr %s172, 54
      %s174 = smul.addr %s173, 4
      %s175 = scalar_lea.vmem %s0, %s174
      %p176 = pneg %p37
      %p177 = pneg %p34
      %p178 = pneg %p58
      %p179 = pneg %p55
      %p180 = pneg %p79
      %p181 = pneg %p76
      %p182 = pneg %p105
      %p183 = pneg %p102
      %p184 = scmp.lt.s32.totalorder %s16, 1
      %s185 = scalar_select %p184, %s16, 1
      %s186 = smul.addr %s185, 8
      %s187 = smul.addr %s186, 4
      %s188 = scalar_lea.vmem %s3, %s187
      %p189 = pneg %p131
      %p190 = pneg %p128
      %p191 = scmp.lt.s32.totalorder %s16, 1
      %s192 = scalar_select %p191, %s16, 1
      %s193 = smul.addr %s192, 4
      %s194 = smul.addr %s193, 8
      %s195 = scalar_lea.vmem %s4, %s194
      %p196 = scmp.lt.s32.totalorder %s16, 1
      %s197 = scalar_select %p196, %s16, 1
      %s198 = smul.addr %s197, 54
      %s199 = smul.addr %s198, 4
      %s200 = scalar_lea.vmem %s0, %s199
      %p201 = scmp.lt.s32.totalorder %s16, 1
      %s202 = scalar_select %p201, %s16, 1
      %s203 = smul.addr %s202, 8
      %s204 = smul.addr %s203, 4
      %s205 = scalar_lea.vmem %s3, %s204
      %p206 = scmp.lt.s32.totalorder %s16, 1
      %s207 = scalar_select %p206, %s16, 1
      %s208 = smul.addr %s207, 4
      %s209 = smul.addr %s208, 8
      %s210 = scalar_lea.vmem %s4, %s209
      %v211 = vld [vmem:[%s2] sm:$0xff]
      %s212 = scalar_lea.vmem %s200, 12
      %v213 = vld [vmem:[%s212] sm:$0xf]
      %v214 = vld [vmem:[%s212 + $0x4] sm:$0xf]
      %v215 = vld [vmem:[%s212 + $0x8] sm:$0x1]
      %v216 = vld [vmem:[%s212 + $0xc] sm:$0xf]
      %v217 = vld [vmem:[%s212 + $0x10] sm:$0xf]
      %v218 = vld [vmem:[%s212 + $0x14] sm:$0x1]
      %v219 = vld [vmem:[%s212 + $0x18] sm:$0xf]
      %v220 = vld [vmem:[%s212 + $0x1c] sm:$0xf]
      %v221 = vld [vmem:[%s212 + $0x20] sm:$0x1]
      %v222 = vld [vmem:[%s212 + $0x24] sm:$0xf]
      %v223 = vld [vmem:[%s212 + $0x28] sm:$0xf]
      %v224 = vld [vmem:[%s212 + $0x2c] sm:$0x1]
      %v225 = vld [vmem:[%s212 + $0x30] sm:$0xf]
      %v226 = vld [vmem:[%s212 + $0x34] sm:$0xf]
      %v227 = vld [vmem:[%s212 + $0x38] sm:$0x1]
      %v228 = vld [vmem:[%s212 + $0x3c] sm:$0xf]
      %v229 = vld [vmem:[%s212 + $0x40] sm:$0xf]
      %v230 = vld [vmem:[%s212 + $0x44] sm:$0x1]
      %v231 = vld [vmem:[%s212 + $0x48] sm:$0xf]
      %v232 = vld [vmem:[%s212 + $0x4c] sm:$0xf]
      %v233 = vld [vmem:[%s212 + $0x50] sm:$0x1]
      %v234 = vld [vmem:[%s212 + $0x54] sm:$0xf]
      %v235 = vld [vmem:[%s212 + $0x58] sm:$0xf]
      %v236 = vld [vmem:[%s212 + $0x5c] sm:$0x1]
      %v237 = vld [vmem:[%s212 + $0x60] sm:$0xf]
      %v238 = vld [vmem:[%s212 + $0x64] sm:$0xf]
      %v239 = vld [vmem:[%s212 + $0x68] sm:$0x1]
      %v240 = vld [vmem:[%s212 + $0x6c] sm:$0xf]
      %v241 = vld [vmem:[%s212 + $0x70] sm:$0xf]
      %v242 = vld [vmem:[%s212 + $0x74] sm:$0x1]
      %v243 = vld [vmem:[%s212 + $0x78] sm:$0xf]
      %v244 = vld [vmem:[%s212 + $0x7c] sm:$0xf]
      %v245 = vld [vmem:[%s212 + $0x80] sm:$0x1]
      %v246 = vld [vmem:[%s212 + $0x84] sm:$0xf]
      %v247 = vld [vmem:[%s212 + $0x88] sm:$0xf]
      %v248 = vld [vmem:[%s212 + $0x8c] sm:$0x1]
      %v249 = vld [vmem:[%s212 + $0x90] sm:$0xf]
      %v250 = vld [vmem:[%s212 + $0x94] sm:$0xf]
      %v251 = vld [vmem:[%s212 + $0x98] sm:$0x1]
      %v252 = vld [vmem:[%s212 + $0x9c] sm:$0xf]
      %v253 = vld [vmem:[%s212 + $0xa0] sm:$0xf]
      %v254 = vld [vmem:[%s212 + $0xa4] sm:$0x1]
      %v255 = vld [vmem:[%s212 + $0xa8] sm:$0xf]
      %v256 = vld [vmem:[%s212 + $0xac] sm:$0xf]
      %v257 = vld [vmem:[%s212 + $0xb0] sm:$0x1]
      %v258 = vld [vmem:[%s212 + $0xb4] sm:$0xf]
      %v259 = vld [vmem:[%s212 + $0xb8] sm:$0xf]
      %v260 = vld [vmem:[%s212 + $0xbc] sm:$0x1]
      %vm261 = vsmask.f32 3328
      %vm262 = vsmask.f32 7440
      %vm263 = vmor %vm261, %vm262
      %v265 = vshrl.u32 %v213, 16
      %v267 = vrot.slane %v265, 4
      %v268 = vshll.u32 %v213, 16
      %v270 = vrot.slane %v268, 5
      %v271 = vor.u32 %v267, %v270
      %v272 = vrot.slane %v271, 4
      %v274 = vshll.u32 %v214, 16
      %v276 = vrot.slane %v274, 5
      %v277 = vsel %vm263, %v272, %v276
      %v278 = vshrl.u32 %v214, 16
      %v280 = vrot.slane %v278, 4
      %v281 = vor.u32 %v280, %v276
      %v282 = vrot.slane %v281, 4
      %v284 = vshll.u32 %v215, 16
      %v286 = vrot.slane %v284, 5
      %v287 = vsel %vm263, %v282, %v286
      %v289 = vshrl.u32 %v216, 16
      %v291 = vrot.slane %v289, 4
      %v292 = vshll.u32 %v216, 16
      %v294 = vrot.slane %v292, 5
      %v295 = vor.u32 %v291, %v294
      %v296 = vrot.slane %v295, 4
      %v298 = vshll.u32 %v217, 16
      %v300 = vrot.slane %v298, 5
      %v301 = vsel %vm263, %v296, %v300
      %v302 = vshrl.u32 %v217, 16
      %v304 = vrot.slane %v302, 4
      %v305 = vor.u32 %v304, %v300
      %v306 = vrot.slane %v305, 4
      %v308 = vshll.u32 %v218, 16
      %v310 = vrot.slane %v308, 5
      %v311 = vsel %vm263, %v306, %v310
      %v313 = vshrl.u32 %v219, 16
      %v315 = vrot.slane %v313, 4
      %v316 = vshll.u32 %v219, 16
      %v318 = vrot.slane %v316, 5
      %v319 = vor.u32 %v315, %v318
      %v320 = vrot.slane %v319, 4
      %v322 = vshll.u32 %v220, 16
      %v324 = vrot.slane %v322, 5
      %v325 = vsel %vm263, %v320, %v324
      %v326 = vshrl.u32 %v220, 16
      %v328 = vrot.slane %v326, 4
      %v329 = vor.u32 %v328, %v324
      %v330 = vrot.slane %v329, 4
      %v332 = vshll.u32 %v221, 16
      %v334 = vrot.slane %v332, 5
      %v335 = vsel %vm263, %v330, %v334
      %v337 = vshrl.u32 %v222, 16
      %v339 = vrot.slane %v337, 4
      %v340 = vshll.u32 %v222, 16
      %v342 = vrot.slane %v340, 5
      %v343 = vor.u32 %v339, %v342
      %v344 = vrot.slane %v343, 4
      %v346 = vshll.u32 %v223, 16
      %v348 = vrot.slane %v346, 5
      %v349 = vsel %vm263, %v344, %v348
      %v350 = vshrl.u32 %v223, 16
      %v352 = vrot.slane %v350, 4
      %v353 = vor.u32 %v352, %v348
      %v354 = vrot.slane %v353, 4
      %v356 = vshll.u32 %v224, 16
      %v358 = vrot.slane %v356, 5
      %v359 = vsel %vm263, %v354, %v358
      %v361 = vshrl.u32 %v225, 16
      %v363 = vrot.slane %v361, 4
      %v364 = vshll.u32 %v225, 16
      %v366 = vrot.slane %v364, 5
      %v367 = vor.u32 %v363, %v366
      %v368 = vrot.slane %v367, 4
      %v370 = vshll.u32 %v226, 16
      %v372 = vrot.slane %v370, 5
      %v373 = vsel %vm263, %v368, %v372
      %v374 = vshrl.u32 %v226, 16
      %v376 = vrot.slane %v374, 4
      %v377 = vor.u32 %v376, %v372
      %v378 = vrot.slane %v377, 4
      %v380 = vshll.u32 %v227, 16
      %v382 = vrot.slane %v380, 5
      %v383 = vsel %vm263, %v378, %v382
      %v385 = vshrl.u32 %v228, 16
      %v387 = vrot.slane %v385, 4
      %v388 = vshll.u32 %v228, 16
      %v390 = vrot.slane %v388, 5
      %v391 = vor.u32 %v387, %v390
      %v392 = vrot.slane %v391, 4
      %v394 = vshll.u32 %v229, 16
      %v396 = vrot.slane %v394, 5
      %v397 = vsel %vm263, %v392, %v396
      %v398 = vshrl.u32 %v229, 16
      %v400 = vrot.slane %v398, 4
      %v401 = vor.u32 %v400, %v396
      %v402 = vrot.slane %v401, 4
      %v404 = vshll.u32 %v230, 16
      %v406 = vrot.slane %v404, 5
      %v407 = vsel %vm263, %v402, %v406
      %v409 = vshrl.u32 %v231, 16
      %v411 = vrot.slane %v409, 4
      %v412 = vshll.u32 %v231, 16
      %v414 = vrot.slane %v412, 5
      %v415 = vor.u32 %v411, %v414
      %v416 = vrot.slane %v415, 4
      %v418 = vshll.u32 %v232, 16
      %v420 = vrot.slane %v418, 5
      %v421 = vsel %vm263, %v416, %v420
      %v422 = vshrl.u32 %v232, 16
      %v424 = vrot.slane %v422, 4
      %v425 = vor.u32 %v424, %v420
      %v426 = vrot.slane %v425, 4
      %v428 = vshll.u32 %v233, 16
      %v430 = vrot.slane %v428, 5
      %v431 = vsel %vm263, %v426, %v430
      %v433 = vshrl.u32 %v234, 16
      %v435 = vrot.slane %v433, 4
      %v436 = vshll.u32 %v234, 16
      %v438 = vrot.slane %v436, 5
      %v439 = vor.u32 %v435, %v438
      %v440 = vrot.slane %v439, 4
      %v442 = vshll.u32 %v235, 16
      %v444 = vrot.slane %v442, 5
      %v445 = vsel %vm263, %v440, %v444
      %v446 = vshrl.u32 %v235, 16
      %v448 = vrot.slane %v446, 4
      %v449 = vor.u32 %v448, %v444
      %v450 = vrot.slane %v449, 4
      %v452 = vshll.u32 %v236, 16
      %v454 = vrot.slane %v452, 5
      %v455 = vsel %vm263, %v450, %v454
      %v457 = vshrl.u32 %v237, 16
      %v459 = vrot.slane %v457, 4
      %v460 = vshll.u32 %v237, 16
      %v462 = vrot.slane %v460, 5
      %v463 = vor.u32 %v459, %v462
      %v464 = vrot.slane %v463, 4
      %v466 = vshll.u32 %v238, 16
      %v468 = vrot.slane %v466, 5
      %v469 = vsel %vm263, %v464, %v468
      %v470 = vshrl.u32 %v238, 16
      %v472 = vrot.slane %v470, 4
      %v473 = vor.u32 %v472, %v468
      %v474 = vrot.slane %v473, 4
      %v476 = vshll.u32 %v239, 16
      %v478 = vrot.slane %v476, 5
      %v479 = vsel %vm263, %v474, %v478
      %v481 = vshrl.u32 %v240, 16
      %v483 = vrot.slane %v481, 4
      %v484 = vshll.u32 %v240, 16
      %v486 = vrot.slane %v484, 5
      %v487 = vor.u32 %v483, %v486
      %v488 = vrot.slane %v487, 4
      %v490 = vshll.u32 %v241, 16
      %v492 = vrot.slane %v490, 5
      %v493 = vsel %vm263, %v488, %v492
      %v494 = vshrl.u32 %v241, 16
      %v496 = vrot.slane %v494, 4
      %v497 = vor.u32 %v496, %v492
      %v498 = vrot.slane %v497, 4
      %v500 = vshll.u32 %v242, 16
      %v502 = vrot.slane %v500, 5
      %v503 = vsel %vm263, %v498, %v502
      %v505 = vshrl.u32 %v243, 16
      %v507 = vrot.slane %v505, 4
      %v508 = vshll.u32 %v243, 16
      %v510 = vrot.slane %v508, 5
      %v511 = vor.u32 %v507, %v510
      %v512 = vrot.slane %v511, 4
      %v514 = vshll.u32 %v244, 16
      %v516 = vrot.slane %v514, 5
      %v517 = vsel %vm263, %v512, %v516
      %v518 = vshrl.u32 %v244, 16
      %v520 = vrot.slane %v518, 4
      %v521 = vor.u32 %v520, %v516
      %v522 = vrot.slane %v521, 4
      %v524 = vshll.u32 %v245, 16
      %v526 = vrot.slane %v524, 5
      %v527 = vsel %vm263, %v522, %v526
      %v529 = vshrl.u32 %v246, 16
      %v531 = vrot.slane %v529, 4
      %v532 = vshll.u32 %v246, 16
      %v534 = vrot.slane %v532, 5
      %v535 = vor.u32 %v531, %v534
      %v536 = vrot.slane %v535, 4
      %v538 = vshll.u32 %v247, 16
      %v540 = vrot.slane %v538, 5
      %v541 = vsel %vm263, %v536, %v540
      %v542 = vshrl.u32 %v247, 16
      %v544 = vrot.slane %v542, 4
      %v545 = vor.u32 %v544, %v540
      %v546 = vrot.slane %v545, 4
      %v548 = vshll.u32 %v248, 16
      %v550 = vrot.slane %v548, 5
      %v551 = vsel %vm263, %v546, %v550
      %v553 = vshrl.u32 %v249, 16
      %v555 = vrot.slane %v553, 4
      %v556 = vshll.u32 %v249, 16
      %v558 = vrot.slane %v556, 5
      %v559 = vor.u32 %v555, %v558
      %v560 = vrot.slane %v559, 4
      %v562 = vshll.u32 %v250, 16
      %v564 = vrot.slane %v562, 5
      %v565 = vsel %vm263, %v560, %v564
      %v566 = vshrl.u32 %v250, 16
      %v568 = vrot.slane %v566, 4
      %v569 = vor.u32 %v568, %v564
      %v570 = vrot.slane %v569, 4
      %v572 = vshll.u32 %v251, 16
      %v574 = vrot.slane %v572, 5
      %v575 = vsel %vm263, %v570, %v574
      %v577 = vshrl.u32 %v252, 16
      %v579 = vrot.slane %v577, 4
      %v580 = vshll.u32 %v252, 16
      %v582 = vrot.slane %v580, 5
      %v583 = vor.u32 %v579, %v582
      %v584 = vrot.slane %v583, 4
      %v586 = vshll.u32 %v253, 16
      %v588 = vrot.slane %v586, 5
      %v589 = vsel %vm263, %v584, %v588
      %v590 = vshrl.u32 %v253, 16
      %v592 = vrot.slane %v590, 4
      %v593 = vor.u32 %v592, %v588
      %v594 = vrot.slane %v593, 4
      %v596 = vshll.u32 %v254, 16
      %v598 = vrot.slane %v596, 5
      %v599 = vsel %vm263, %v594, %v598
      %v601 = vshrl.u32 %v255, 16
      %v603 = vrot.slane %v601, 4
      %v604 = vshll.u32 %v255, 16
      %v606 = vrot.slane %v604, 5
      %v607 = vor.u32 %v603, %v606
      %v608 = vrot.slane %v607, 4
      %v610 = vshll.u32 %v256, 16
      %v612 = vrot.slane %v610, 5
      %v613 = vsel %vm263, %v608, %v612
      %v614 = vshrl.u32 %v256, 16
      %v616 = vrot.slane %v614, 4
      %v617 = vor.u32 %v616, %v612
      %v618 = vrot.slane %v617, 4
      %v620 = vshll.u32 %v257, 16
      %v622 = vrot.slane %v620, 5
      %v623 = vsel %vm263, %v618, %v622
      %v625 = vshrl.u32 %v258, 16
      %v627 = vrot.slane %v625, 4
      %v628 = vshll.u32 %v258, 16
      %v630 = vrot.slane %v628, 5
      %v631 = vor.u32 %v627, %v630
      %v632 = vrot.slane %v631, 4
      %v634 = vshll.u32 %v259, 16
      %v636 = vrot.slane %v634, 5
      %v637 = vsel %vm263, %v632, %v636
      %v638 = vshrl.u32 %v259, 16
      %v640 = vrot.slane %v638, 4
      %v641 = vor.u32 %v640, %v636
      %v642 = vrot.slane %v641, 4
      %v644 = vshll.u32 %v260, 16
      %v646 = vrot.slane %v644, 5
      %v647 = vsel %vm263, %v642, %v646
      %s648 = scalar_lea.vmem %s1, 20
      %v649 = vld [vmem:[%s648] sm:$0xf]
      %s650 = scalar_lea.vmem %s1, 28
      %v651 = vld [vmem:[%s650] sm:$0xf]
      %v684 = vunpack.c.l.b16 %v213
      %v685 = vunpack.c.l.b16 %v214
      %v686 = vunpack.c.l.b16 %v216
      %v687 = vunpack.c.l.b16 %v217
      %v688 = vunpack.c.l.b16 %v219
      %v689 = vunpack.c.l.b16 %v220
      %v690 = vunpack.c.l.b16 %v222
      %v691 = vunpack.c.l.b16 %v223
      %v692 = vunpack.c.l.b16 %v225
      %v693 = vunpack.c.l.b16 %v226
      %v694 = vunpack.c.l.b16 %v228
      %v695 = vunpack.c.l.b16 %v229
      %v696 = vunpack.c.l.b16 %v231
      %v697 = vunpack.c.l.b16 %v232
      %v698 = vunpack.c.l.b16 %v234
      %v699 = vunpack.c.l.b16 %v235
      %v700 = vunpack.c.l.b16 %v237
      %v701 = vunpack.c.l.b16 %v238
      %v702 = vunpack.c.l.b16 %v240
      %v703 = vunpack.c.l.b16 %v241
      %v704 = vunpack.c.l.b16 %v243
      %v705 = vunpack.c.l.b16 %v244
      %v706 = vunpack.c.l.b16 %v246
      %v707 = vunpack.c.l.b16 %v247
      %v708 = vunpack.c.l.b16 %v249
      %v709 = vunpack.c.l.b16 %v250
      %v710 = vunpack.c.l.b16 %v252
      %v711 = vunpack.c.l.b16 %v253
      %v712 = vunpack.c.l.b16 %v255
      %v713 = vunpack.c.l.b16 %v256
      %v714 = vunpack.c.l.b16 %v258
      %v715 = vunpack.c.l.b16 %v259
      %v716 = vpack.c.b16 %v685, %v684
      %v717 = vpack.c.b16 %v687, %v686
      %v718 = vpack.c.b16 %v689, %v688
      %v719 = vpack.c.b16 %v691, %v690
      %v720 = vpack.c.b16 %v693, %v692
      %v721 = vpack.c.b16 %v695, %v694
      %v722 = vpack.c.b16 %v697, %v696
      %v723 = vpack.c.b16 %v699, %v698
      %v724 = vpack.c.b16 %v701, %v700
      %v725 = vpack.c.b16 %v703, %v702
      %v726 = vpack.c.b16 %v705, %v704
      %v727 = vpack.c.b16 %v707, %v706
      %v728 = vpack.c.b16 %v709, %v708
      %v729 = vpack.c.b16 %v711, %v710
      %v730 = vpack.c.b16 %v713, %v712
      %v731 = vpack.c.b16 %v715, %v714
      %vm732 = vcmask 31744
      %v734 = vsel %vm732, %v651, 0
      %v737 = vsel %vm732, %v716, 0
      %v740 = vsel %vm732, %v717, 0
      %v743 = vsel %vm732, %v718, 0
      %v746 = vsel %vm732, %v719, 0
      %v749 = vsel %vm732, %v720, 0
      %v752 = vsel %vm732, %v721, 0
      %v755 = vsel %vm732, %v722, 0
      %v758 = vsel %vm732, %v723, 0
      %v761 = vsel %vm732, %v724, 0
      %v764 = vsel %vm732, %v725, 0
      %v767 = vsel %vm732, %v726, 0
      %v770 = vsel %vm732, %v727, 0
      %v773 = vsel %vm732, %v728, 0
      %v776 = vsel %vm732, %v729, 0
      %v779 = vsel %vm732, %v730, 0
      %v782 = vsel %vm732, %v731, 0
      %784 = vmatpush.bf16.xpose.msra.mxu0 %v758
      %785 = vmatpush.bf16.xpose.msra.mxu0 %v755
      %786 = vmatpush.bf16.xpose.msra.mxu0 %v752
      %787 = vmatpush.bf16.xpose.msra.mxu0 %v749
      %788 = vmatpush.bf16.xpose.msra.mxu0 %v746
      %789 = vmatpush.bf16.xpose.msra.mxu0 %v743
      %790 = vmatpush.bf16.xpose.msra.mxu0 %v740
      %791 = vmatpush.bf16.xpose.msra.mxu0 %v737
      %792 = vmatmul.bf16.gmra.mxu0 %v734
      %v793 = vpop.f32.mrf.mxu0
      %v794 = vadd.f32 0.0, %v793
      %v795 = vpop.f32.mrf.mxu0
      %796 = vdwg.mxu0
      %797 = vmatpush.bf16.xpose.msra.mxu0 %v782
      %798 = vmatpush.bf16.xpose.msra.mxu0 %v779
      %799 = vmatpush.bf16.xpose.msra.mxu0 %v776
      %800 = vmatpush.bf16.xpose.msra.mxu0 %v773
      %801 = vmatpush.bf16.xpose.msra.mxu0 %v770
      %802 = vmatpush.bf16.xpose.msra.mxu0 %v767
      %803 = vmatpush.bf16.xpose.msra.mxu0 %v764
      %804 = vmatpush.bf16.xpose.msra.mxu0 %v761
      %805 = vmatmul.bf16.gmra.mxu0 %v734
      %v806 = vpop.f32.mrf.mxu0
      %v807 = vadd.f32 0.0, %v806
      %v808 = vpop.f32.mrf.mxu0
      %809 = vdwg.mxu0
      %v810 = vunpack.c.l.b16 %v277
      %v811 = vunpack.c.l.b16 %v287
      %v812 = vunpack.c.l.b16 %v301
      %v813 = vunpack.c.l.b16 %v311
      %v814 = vunpack.c.l.b16 %v325
      %v815 = vunpack.c.l.b16 %v335
      %v816 = vunpack.c.l.b16 %v349
      %v817 = vunpack.c.l.b16 %v359
      %v818 = vunpack.c.l.b16 %v373
      %v819 = vunpack.c.l.b16 %v383
      %v820 = vunpack.c.l.b16 %v397
      %v821 = vunpack.c.l.b16 %v407
      %v822 = vunpack.c.l.b16 %v421
      %v823 = vunpack.c.l.b16 %v431
      %v824 = vunpack.c.l.b16 %v445
      %v825 = vunpack.c.l.b16 %v455
      %v826 = vunpack.c.l.b16 %v469
      %v827 = vunpack.c.l.b16 %v479
      %v828 = vunpack.c.l.b16 %v493
      %v829 = vunpack.c.l.b16 %v503
      %v830 = vunpack.c.l.b16 %v517
      %v831 = vunpack.c.l.b16 %v527
      %v832 = vunpack.c.l.b16 %v541
      %v833 = vunpack.c.l.b16 %v551
      %v834 = vunpack.c.l.b16 %v565
      %v835 = vunpack.c.l.b16 %v575
      %v836 = vunpack.c.l.b16 %v589
      %v837 = vunpack.c.l.b16 %v599
      %v838 = vunpack.c.l.b16 %v613
      %v839 = vunpack.c.l.b16 %v623
      %v840 = vunpack.c.l.b16 %v637
      %v841 = vunpack.c.l.b16 %v647
      %v842 = vpack.c.b16 %v811, %v810
      %v843 = vpack.c.b16 %v813, %v812
      %v844 = vpack.c.b16 %v815, %v814
      %v845 = vpack.c.b16 %v817, %v816
      %v846 = vpack.c.b16 %v819, %v818
      %v847 = vpack.c.b16 %v821, %v820
      %v848 = vpack.c.b16 %v823, %v822
      %v849 = vpack.c.b16 %v825, %v824
      %v850 = vpack.c.b16 %v827, %v826
      %v851 = vpack.c.b16 %v829, %v828
      %v852 = vpack.c.b16 %v831, %v830
      %v853 = vpack.c.b16 %v833, %v832
      %v854 = vpack.c.b16 %v835, %v834
      %v855 = vpack.c.b16 %v837, %v836
      %v856 = vpack.c.b16 %v839, %v838
      %v857 = vpack.c.b16 %v841, %v840
      %v859 = vsel %vm732, %v649, 0
      %v862 = vsel %vm732, %v842, 0
      %v865 = vsel %vm732, %v843, 0
      %v868 = vsel %vm732, %v844, 0
      %v871 = vsel %vm732, %v845, 0
      %v874 = vsel %vm732, %v846, 0
      %v877 = vsel %vm732, %v847, 0
      %v880 = vsel %vm732, %v848, 0
      %v883 = vsel %vm732, %v849, 0
      %v886 = vsel %vm732, %v850, 0
      %v889 = vsel %vm732, %v851, 0
      %v892 = vsel %vm732, %v852, 0
      %v895 = vsel %vm732, %v853, 0
      %v898 = vsel %vm732, %v854, 0
      %v901 = vsel %vm732, %v855, 0
      %v904 = vsel %vm732, %v856, 0
      %v907 = vsel %vm732, %v857, 0
      %909 = vmatpush.bf16.xpose.msra.mxu0 %v883
      %910 = vmatpush.bf16.xpose.msra.mxu0 %v880
      %911 = vmatpush.bf16.xpose.msra.mxu0 %v877
      %912 = vmatpush.bf16.xpose.msra.mxu0 %v874
      %913 = vmatpush.bf16.xpose.msra.mxu0 %v871
      %914 = vmatpush.bf16.xpose.msra.mxu0 %v868
      %915 = vmatpush.bf16.xpose.msra.mxu0 %v865
      %916 = vmatpush.bf16.xpose.msra.mxu0 %v862
      %917 = vmatmul.bf16.gmra.mxu0 %v859
      %v918 = vpop.f32.mrf.mxu0
      %v919 = vadd.f32 %v794, %v918
      %v920 = vpop.f32.mrf.mxu0
      %921 = vdwg.mxu0
      %922 = vmatpush.bf16.xpose.msra.mxu0 %v907
      %923 = vmatpush.bf16.xpose.msra.mxu0 %v904
      %924 = vmatpush.bf16.xpose.msra.mxu0 %v901
      %925 = vmatpush.bf16.xpose.msra.mxu0 %v898
      %926 = vmatpush.bf16.xpose.msra.mxu0 %v895
      %927 = vmatpush.bf16.xpose.msra.mxu0 %v892
      %928 = vmatpush.bf16.xpose.msra.mxu0 %v889
      %929 = vmatpush.bf16.xpose.msra.mxu0 %v886
      %930 = vmatmul.bf16.gmra.mxu0 %v859
      %v931 = vpop.f32.mrf.mxu0
      %v932 = vadd.f32 %v807, %v931
      %v933 = vpop.f32.mrf.mxu0
      %934 = vdwg.mxu0
      %v935 = vld [vmem:[%s200] sm:$0xf]
      %v936 = vld [vmem:[%s200 + $0x4] sm:$0xf]
      %v937 = vld [vmem:[%s200 + $0x8] sm:$0x1]
      %v938 = vld [vmem:[%s200 + $0xc] sm:$0xf]
      %v939 = vld [vmem:[%s200 + $0x10] sm:$0xf]
      %v940 = vld [vmem:[%s200 + $0x14] sm:$0x1]
      %v941 = vld [vmem:[%s200 + $0x18] sm:$0xf]
      %v942 = vld [vmem:[%s200 + $0x1c] sm:$0xf]
      %v943 = vld [vmem:[%s200 + $0x20] sm:$0x1]
      %v944 = vld [vmem:[%s200 + $0x24] sm:$0xf]
      %v945 = vld [vmem:[%s200 + $0x28] sm:$0xf]
      %v946 = vld [vmem:[%s200 + $0x2c] sm:$0x1]
      %v947 = vld [vmem:[%s200 + $0x30] sm:$0xf]
      %v948 = vld [vmem:[%s200 + $0x34] sm:$0xf]
      %v949 = vld [vmem:[%s200 + $0x38] sm:$0x1]
      %v950 = vld [vmem:[%s200 + $0x3c] sm:$0xf]
      %v951 = vld [vmem:[%s200 + $0x40] sm:$0xf]
      %v952 = vld [vmem:[%s200 + $0x44] sm:$0x1]
      %v953 = vld [vmem:[%s200 + $0x48] sm:$0xf]
      %v954 = vld [vmem:[%s200 + $0x4c] sm:$0xf]
      %v955 = vld [vmem:[%s200 + $0x50] sm:$0x1]
      %v956 = vld [vmem:[%s200 + $0x54] sm:$0xf]
      %v957 = vld [vmem:[%s200 + $0x58] sm:$0xf]
      %v958 = vld [vmem:[%s200 + $0x5c] sm:$0x1]
      %v959 = vld [vmem:[%s200 + $0x60] sm:$0xf]
      %v960 = vld [vmem:[%s200 + $0x64] sm:$0xf]
      %v961 = vld [vmem:[%s200 + $0x68] sm:$0x1]
      %v962 = vld [vmem:[%s200 + $0x6c] sm:$0xf]
      %v963 = vld [vmem:[%s200 + $0x70] sm:$0xf]
      %v964 = vld [vmem:[%s200 + $0x74] sm:$0x1]
      %v965 = vld [vmem:[%s200 + $0x78] sm:$0xf]
      %v966 = vld [vmem:[%s200 + $0x7c] sm:$0xf]
      %v967 = vld [vmem:[%s200 + $0x80] sm:$0x1]
      %v968 = vld [vmem:[%s200 + $0x84] sm:$0xf]
      %v969 = vld [vmem:[%s200 + $0x88] sm:$0xf]
      %v970 = vld [vmem:[%s200 + $0x8c] sm:$0x1]
      %v971 = vld [vmem:[%s200 + $0x90] sm:$0xf]
      %v972 = vld [vmem:[%s200 + $0x94] sm:$0xf]
      %v973 = vld [vmem:[%s200 + $0x98] sm:$0x1]
      %v974 = vld [vmem:[%s200 + $0x9c] sm:$0xf]
      %v975 = vld [vmem:[%s200 + $0xa0] sm:$0xf]
      %v976 = vld [vmem:[%s200 + $0xa4] sm:$0x1]
      %v977 = vld [vmem:[%s200 + $0xa8] sm:$0xf]
      %v978 = vld [vmem:[%s200 + $0xac] sm:$0xf]
      %v979 = vld [vmem:[%s200 + $0xb0] sm:$0x1]
      %v980 = vld [vmem:[%s200 + $0xb4] sm:$0xf]
      %v981 = vld [vmem:[%s200 + $0xb8] sm:$0xf]
      %v982 = vld [vmem:[%s200 + $0xbc] sm:$0x1]
      %v984 = vshrl.u32 %v935, 16
      %v986 = vrot.slane %v984, 4
      %v987 = vshll.u32 %v935, 16
      %v989 = vrot.slane %v987, 5
      %v990 = vor.u32 %v986, %v989
      %v991 = vrot.slane %v990, 4
      %v993 = vshll.u32 %v936, 16
      %v995 = vrot.slane %v993, 5
      %v996 = vsel %vm263, %v991, %v995
      %v997 = vshrl.u32 %v936, 16
      %v999 = vrot.slane %v997, 4
      %v1000 = vor.u32 %v999, %v995
      %v1001 = vrot.slane %v1000, 4
      %v1003 = vshll.u32 %v937, 16
      %v1005 = vrot.slane %v1003, 5
      %v1006 = vsel %vm263, %v1001, %v1005
      %v1008 = vshrl.u32 %v938, 16
      %v1010 = vrot.slane %v1008, 4
      %v1011 = vshll.u32 %v938, 16
      %v1013 = vrot.slane %v1011, 5
      %v1014 = vor.u32 %v1010, %v1013
      %v1015 = vrot.slane %v1014, 4
      %v1017 = vshll.u32 %v939, 16
      %v1019 = vrot.slane %v1017, 5
      %v1020 = vsel %vm263, %v1015, %v1019
      %v1021 = vshrl.u32 %v939, 16
      %v1023 = vrot.slane %v1021, 4
      %v1024 = vor.u32 %v1023, %v1019
      %v1025 = vrot.slane %v1024, 4
      %v1027 = vshll.u32 %v940, 16
      %v1029 = vrot.slane %v1027, 5
      %v1030 = vsel %vm263, %v1025, %v1029
      %v1032 = vshrl.u32 %v941, 16
      %v1034 = vrot.slane %v1032, 4
      %v1035 = vshll.u32 %v941, 16
      %v1037 = vrot.slane %v1035, 5
      %v1038 = vor.u32 %v1034, %v1037
      %v1039 = vrot.slane %v1038, 4
      %v1041 = vshll.u32 %v942, 16
      %v1043 = vrot.slane %v1041, 5
      %v1044 = vsel %vm263, %v1039, %v1043
      %v1045 = vshrl.u32 %v942, 16
      %v1047 = vrot.slane %v1045, 4
      %v1048 = vor.u32 %v1047, %v1043
      %v1049 = vrot.slane %v1048, 4
      %v1051 = vshll.u32 %v943, 16
      %v1053 = vrot.slane %v1051, 5
      %v1054 = vsel %vm263, %v1049, %v1053
      %v1056 = vshrl.u32 %v944, 16
      %v1058 = vrot.slane %v1056, 4
      %v1059 = vshll.u32 %v944, 16
      %v1061 = vrot.slane %v1059, 5
      %v1062 = vor.u32 %v1058, %v1061
      %v1063 = vrot.slane %v1062, 4
      %v1065 = vshll.u32 %v945, 16
      %v1067 = vrot.slane %v1065, 5
      %v1068 = vsel %vm263, %v1063, %v1067
      %v1069 = vshrl.u32 %v945, 16
      %v1071 = vrot.slane %v1069, 4
      %v1072 = vor.u32 %v1071, %v1067
      %v1073 = vrot.slane %v1072, 4
      %v1075 = vshll.u32 %v946, 16
      %v1077 = vrot.slane %v1075, 5
      %v1078 = vsel %vm263, %v1073, %v1077
      %v1080 = vshrl.u32 %v947, 16
      %v1082 = vrot.slane %v1080, 4
      %v1083 = vshll.u32 %v947, 16
      %v1085 = vrot.slane %v1083, 5
      %v1086 = vor.u32 %v1082, %v1085
      %v1087 = vrot.slane %v1086, 4
      %v1089 = vshll.u32 %v948, 16
      %v1091 = vrot.slane %v1089, 5
      %v1092 = vsel %vm263, %v1087, %v1091
      %v1093 = vshrl.u32 %v948, 16
      %v1095 = vrot.slane %v1093, 4
      %v1096 = vor.u32 %v1095, %v1091
      %v1097 = vrot.slane %v1096, 4
      %v1099 = vshll.u32 %v949, 16
      %v1101 = vrot.slane %v1099, 5
      %v1102 = vsel %vm263, %v1097, %v1101
      %v1104 = vshrl.u32 %v950, 16
      %v1106 = vrot.slane %v1104, 4
      %v1107 = vshll.u32 %v950, 16
      %v1109 = vrot.slane %v1107, 5
      %v1110 = vor.u32 %v1106, %v1109
      %v1111 = vrot.slane %v1110, 4
      %v1113 = vshll.u32 %v951, 16
      %v1115 = vrot.slane %v1113, 5
      %v1116 = vsel %vm263, %v1111, %v1115
      %v1117 = vshrl.u32 %v951, 16
      %v1119 = vrot.slane %v1117, 4
      %v1120 = vor.u32 %v1119, %v1115
      %v1121 = vrot.slane %v1120, 4
      %v1123 = vshll.u32 %v952, 16
      %v1125 = vrot.slane %v1123, 5
      %v1126 = vsel %vm263, %v1121, %v1125
      %v1128 = vshrl.u32 %v953, 16
      %v1130 = vrot.slane %v1128, 4
      %v1131 = vshll.u32 %v953, 16
      %v1133 = vrot.slane %v1131, 5
      %v1134 = vor.u32 %v1130, %v1133
      %v1135 = vrot.slane %v1134, 4
      %v1137 = vshll.u32 %v954, 16
      %v1139 = vrot.slane %v1137, 5
      %v1140 = vsel %vm263, %v1135, %v1139
      %v1141 = vshrl.u32 %v954, 16
      %v1143 = vrot.slane %v1141, 4
      %v1144 = vor.u32 %v1143, %v1139
      %v1145 = vrot.slane %v1144, 4
      %v1147 = vshll.u32 %v955, 16
      %v1149 = vrot.slane %v1147, 5
      %v1150 = vsel %vm263, %v1145, %v1149
      %v1152 = vshrl.u32 %v956, 16
      %v1154 = vrot.slane %v1152, 4
      %v1155 = vshll.u32 %v956, 16
      %v1157 = vrot.slane %v1155, 5
      %v1158 = vor.u32 %v1154, %v1157
      %v1159 = vrot.slane %v1158, 4
      %v1161 = vshll.u32 %v957, 16
      %v1163 = vrot.slane %v1161, 5
      %v1164 = vsel %vm263, %v1159, %v1163
      %v1165 = vshrl.u32 %v957, 16
      %v1167 = vrot.slane %v1165, 4
      %v1168 = vor.u32 %v1167, %v1163
      %v1169 = vrot.slane %v1168, 4
      %v1171 = vshll.u32 %v958, 16
      %v1173 = vrot.slane %v1171, 5
      %v1174 = vsel %vm263, %v1169, %v1173
      %v1176 = vshrl.u32 %v959, 16
      %v1178 = vrot.slane %v1176, 4
      %v1179 = vshll.u32 %v959, 16
      %v1181 = vrot.slane %v1179, 5
      %v1182 = vor.u32 %v1178, %v1181
      %v1183 = vrot.slane %v1182, 4
      %v1185 = vshll.u32 %v960, 16
      %v1187 = vrot.slane %v1185, 5
      %v1188 = vsel %vm263, %v1183, %v1187
      %v1189 = vshrl.u32 %v960, 16
      %v1191 = vrot.slane %v1189, 4
      %v1192 = vor.u32 %v1191, %v1187
      %v1193 = vrot.slane %v1192, 4
      %v1195 = vshll.u32 %v961, 16
      %v1197 = vrot.slane %v1195, 5
      %v1198 = vsel %vm263, %v1193, %v1197
      %v1200 = vshrl.u32 %v962, 16
      %v1202 = vrot.slane %v1200, 4
      %v1203 = vshll.u32 %v962, 16
      %v1205 = vrot.slane %v1203, 5
      %v1206 = vor.u32 %v1202, %v1205
      %v1207 = vrot.slane %v1206, 4
      %v1209 = vshll.u32 %v963, 16
      %v1211 = vrot.slane %v1209, 5
      %v1212 = vsel %vm263, %v1207, %v1211
      %v1213 = vshrl.u32 %v963, 16
      %v1215 = vrot.slane %v1213, 4
      %v1216 = vor.u32 %v1215, %v1211
      %v1217 = vrot.slane %v1216, 4
      %v1219 = vshll.u32 %v964, 16
      %v1221 = vrot.slane %v1219, 5
      %v1222 = vsel %vm263, %v1217, %v1221
      %v1224 = vshrl.u32 %v965, 16
      %v1226 = vrot.slane %v1224, 4
      %v1227 = vshll.u32 %v965, 16
      %v1229 = vrot.slane %v1227, 5
      %v1230 = vor.u32 %v1226, %v1229
      %v1231 = vrot.slane %v1230, 4
      %v1233 = vshll.u32 %v966, 16
      %v1235 = vrot.slane %v1233, 5
      %v1236 = vsel %vm263, %v1231, %v1235
      %v1237 = vshrl.u32 %v966, 16
      %v1239 = vrot.slane %v1237, 4
      %v1240 = vor.u32 %v1239, %v1235
      %v1241 = vrot.slane %v1240, 4
      %v1243 = vshll.u32 %v967, 16
      %v1245 = vrot.slane %v1243, 5
      %v1246 = vsel %vm263, %v1241, %v1245
      %v1248 = vshrl.u32 %v968, 16
      %v1250 = vrot.slane %v1248, 4
      %v1251 = vshll.u32 %v968, 16
      %v1253 = vrot.slane %v1251, 5
      %v1254 = vor.u32 %v1250, %v1253
      %v1255 = vrot.slane %v1254, 4
      %v1257 = vshll.u32 %v969, 16
      %v1259 = vrot.slane %v1257, 5
      %v1260 = vsel %vm263, %v1255, %v1259
      %v1261 = vshrl.u32 %v969, 16
      %v1263 = vrot.slane %v1261, 4
      %v1264 = vor.u32 %v1263, %v1259
      %v1265 = vrot.slane %v1264, 4
      %v1267 = vshll.u32 %v970, 16
      %v1269 = vrot.slane %v1267, 5
      %v1270 = vsel %vm263, %v1265, %v1269
      %v1272 = vshrl.u32 %v971, 16
      %v1274 = vrot.slane %v1272, 4
      %v1275 = vshll.u32 %v971, 16
      %v1277 = vrot.slane %v1275, 5
      %v1278 = vor.u32 %v1274, %v1277
      %v1279 = vrot.slane %v1278, 4
      %v1281 = vshll.u32 %v972, 16
      %v1283 = vrot.slane %v1281, 5
      %v1284 = vsel %vm263, %v1279, %v1283
      %v1285 = vshrl.u32 %v972, 16
      %v1287 = vrot.slane %v1285, 4
      %v1288 = vor.u32 %v1287, %v1283
      %v1289 = vrot.slane %v1288, 4
      %v1291 = vshll.u32 %v973, 16
      %v1293 = vrot.slane %v1291, 5
      %v1294 = vsel %vm263, %v1289, %v1293
      %v1296 = vshrl.u32 %v974, 16
      %v1298 = vrot.slane %v1296, 4
      %v1299 = vshll.u32 %v974, 16
      %v1301 = vrot.slane %v1299, 5
      %v1302 = vor.u32 %v1298, %v1301
      %v1303 = vrot.slane %v1302, 4
      %v1305 = vshll.u32 %v975, 16
      %v1307 = vrot.slane %v1305, 5
      %v1308 = vsel %vm263, %v1303, %v1307
      %v1309 = vshrl.u32 %v975, 16
      %v1311 = vrot.slane %v1309, 4
      %v1312 = vor.u32 %v1311, %v1307
      %v1313 = vrot.slane %v1312, 4
      %v1315 = vshll.u32 %v976, 16
      %v1317 = vrot.slane %v1315, 5
      %v1318 = vsel %vm263, %v1313, %v1317
      %v1320 = vshrl.u32 %v977, 16
      %v1322 = vrot.slane %v1320, 4
      %v1323 = vshll.u32 %v977, 16
      %v1325 = vrot.slane %v1323, 5
      %v1326 = vor.u32 %v1322, %v1325
      %v1327 = vrot.slane %v1326, 4
      %v1329 = vshll.u32 %v978, 16
      %v1331 = vrot.slane %v1329, 5
      %v1332 = vsel %vm263, %v1327, %v1331
      %v1333 = vshrl.u32 %v978, 16
      %v1335 = vrot.slane %v1333, 4
      %v1336 = vor.u32 %v1335, %v1331
      %v1337 = vrot.slane %v1336, 4
      %v1339 = vshll.u32 %v979, 16
      %v1341 = vrot.slane %v1339, 5
      %v1342 = vsel %vm263, %v1337, %v1341
      %v1344 = vshrl.u32 %v980, 16
      %v1346 = vrot.slane %v1344, 4
      %v1347 = vshll.u32 %v980, 16
      %v1349 = vrot.slane %v1347, 5
      %v1350 = vor.u32 %v1346, %v1349
      %v1351 = vrot.slane %v1350, 4
      %v1353 = vshll.u32 %v981, 16
      %v1355 = vrot.slane %v1353, 5
      %v1356 = vsel %vm263, %v1351, %v1355
      %v1357 = vshrl.u32 %v981, 16
      %v1359 = vrot.slane %v1357, 4
      %v1360 = vor.u32 %v1359, %v1355
      %v1361 = vrot.slane %v1360, 4
      %v1363 = vshll.u32 %v982, 16
      %v1365 = vrot.slane %v1363, 5
      %v1366 = vsel %vm263, %v1361, %v1365
      %s1367 = scalar_lea.vmem %s1, 52
      %v1368 = vld [vmem:[%s1367] sm:$0xf]
      %v1369 = vunpack.c.l.b16 %v996
      %v1370 = vunpack.c.l.b16 %v1006
      %v1371 = vunpack.c.l.b16 %v1020
      %v1372 = vunpack.c.l.b16 %v1030
      %v1373 = vunpack.c.l.b16 %v1044
      %v1374 = vunpack.c.l.b16 %v1054
      %v1375 = vunpack.c.l.b16 %v1068
      %v1376 = vunpack.c.l.b16 %v1078
      %v1377 = vunpack.c.l.b16 %v1092
      %v1378 = vunpack.c.l.b16 %v1102
      %v1379 = vunpack.c.l.b16 %v1116
      %v1380 = vunpack.c.l.b16 %v1126
      %v1381 = vunpack.c.l.b16 %v1140
      %v1382 = vunpack.c.l.b16 %v1150
      %v1383 = vunpack.c.l.b16 %v1164
      %v1384 = vunpack.c.l.b16 %v1174
      %v1385 = vunpack.c.l.b16 %v1188
      %v1386 = vunpack.c.l.b16 %v1198
      %v1387 = vunpack.c.l.b16 %v1212
      %v1388 = vunpack.c.l.b16 %v1222
      %v1389 = vunpack.c.l.b16 %v1236
      %v1390 = vunpack.c.l.b16 %v1246
      %v1391 = vunpack.c.l.b16 %v1260
      %v1392 = vunpack.c.l.b16 %v1270
      %v1393 = vunpack.c.l.b16 %v1284
      %v1394 = vunpack.c.l.b16 %v1294
      %v1395 = vunpack.c.l.b16 %v1308
      %v1396 = vunpack.c.l.b16 %v1318
      %v1397 = vunpack.c.l.b16 %v1332
      %v1398 = vunpack.c.l.b16 %v1342
      %v1399 = vunpack.c.l.b16 %v1356
      %v1400 = vunpack.c.l.b16 %v1366
      %v1401 = vpack.c.b16 %v1370, %v1369
      %v1402 = vpack.c.b16 %v1372, %v1371
      %v1403 = vpack.c.b16 %v1374, %v1373
      %v1404 = vpack.c.b16 %v1376, %v1375
      %v1405 = vpack.c.b16 %v1378, %v1377
      %v1406 = vpack.c.b16 %v1380, %v1379
      %v1407 = vpack.c.b16 %v1382, %v1381
      %v1408 = vpack.c.b16 %v1384, %v1383
      %v1409 = vpack.c.b16 %v1386, %v1385
      %v1410 = vpack.c.b16 %v1388, %v1387
      %v1411 = vpack.c.b16 %v1390, %v1389
      %v1412 = vpack.c.b16 %v1392, %v1391
      %v1413 = vpack.c.b16 %v1394, %v1393
      %v1414 = vpack.c.b16 %v1396, %v1395
      %v1415 = vpack.c.b16 %v1398, %v1397
      %v1416 = vpack.c.b16 %v1400, %v1399
      %v1418 = vsel %vm732, %v1368, 0
      %v1421 = vsel %vm732, %v1401, 0
      %v1424 = vsel %vm732, %v1402, 0
      %v1427 = vsel %vm732, %v1403, 0
      %v1430 = vsel %vm732, %v1404, 0
      %v1433 = vsel %vm732, %v1405, 0
      %v1436 = vsel %vm732, %v1406, 0
      %v1439 = vsel %vm732, %v1407, 0
      %v1442 = vsel %vm732, %v1408, 0
      %v1445 = vsel %vm732, %v1409, 0
      %v1448 = vsel %vm732, %v1410, 0
      %v1451 = vsel %vm732, %v1411, 0
      %v1454 = vsel %vm732, %v1412, 0
      %v1457 = vsel %vm732, %v1413, 0
      %v1460 = vsel %vm732, %v1414, 0
      %v1463 = vsel %vm732, %v1415, 0
      %v1466 = vsel %vm732, %v1416, 0
      %1468 = vmatpush.bf16.xpose.msra.mxu0 %v1442
      %1469 = vmatpush.bf16.xpose.msra.mxu0 %v1439
      %1470 = vmatpush.bf16.xpose.msra.mxu0 %v1436
      %1471 = vmatpush.bf16.xpose.msra.mxu0 %v1433
      %1472 = vmatpush.bf16.xpose.msra.mxu0 %v1430
      %1473 = vmatpush.bf16.xpose.msra.mxu0 %v1427
      %1474 = vmatpush.bf16.xpose.msra.mxu0 %v1424
      %1475 = vmatpush.bf16.xpose.msra.mxu0 %v1421
      %1476 = vmatmul.bf16.gmra.mxu0 %v1418
      %v1477 = vpop.f32.mrf.mxu0
      %v1478 = vadd.f32 0.0, %v1477
      %v1479 = vpop.f32.mrf.mxu0
      %1480 = vdwg.mxu0
      %1481 = vmatpush.bf16.xpose.msra.mxu0 %v1466
      %1482 = vmatpush.bf16.xpose.msra.mxu0 %v1463
      %1483 = vmatpush.bf16.xpose.msra.mxu0 %v1460
      %1484 = vmatpush.bf16.xpose.msra.mxu0 %v1457
      %1485 = vmatpush.bf16.xpose.msra.mxu0 %v1454
      %1486 = vmatpush.bf16.xpose.msra.mxu0 %v1451
      %1487 = vmatpush.bf16.xpose.msra.mxu0 %v1448
      %1488 = vmatpush.bf16.xpose.msra.mxu0 %v1445
      %1489 = vmatmul.bf16.gmra.mxu0 %v1418
      %v1490 = vpop.f32.mrf.mxu0
      %v1491 = vadd.f32 0.0, %v1490
      %v1492 = vpop.f32.mrf.mxu0
      %1493 = vdwg.mxu0
      %v1494 = vadd.f32 %v919, %v1478
      %v1495 = vadd.f32 %v932, %v1491
      %v1496 = vld [vmem:[%s200] sm:$0xf]
      %v1497 = vld [vmem:[%s200 + $0x4] sm:$0xf]
      %v1498 = vld [vmem:[%s200 + $0xc] sm:$0xf]
      %v1499 = vld [vmem:[%s200 + $0x10] sm:$0xf]
      %v1500 = vld [vmem:[%s200 + $0x18] sm:$0xf]
      %v1501 = vld [vmem:[%s200 + $0x1c] sm:$0xf]
      %v1502 = vld [vmem:[%s200 + $0x24] sm:$0xf]
      %v1503 = vld [vmem:[%s200 + $0x28] sm:$0xf]
      %v1504 = vld [vmem:[%s200 + $0x30] sm:$0xf]
      %v1505 = vld [vmem:[%s200 + $0x34] sm:$0xf]
      %v1506 = vld [vmem:[%s200 + $0x3c] sm:$0xf]
      %v1507 = vld [vmem:[%s200 + $0x40] sm:$0xf]
      %v1508 = vld [vmem:[%s200 + $0x48] sm:$0xf]
      %v1509 = vld [vmem:[%s200 + $0x4c] sm:$0xf]
      %v1510 = vld [vmem:[%s200 + $0x54] sm:$0xf]
      %v1511 = vld [vmem:[%s200 + $0x58] sm:$0xf]
      %v1512 = vld [vmem:[%s200 + $0x60] sm:$0xf]
      %v1513 = vld [vmem:[%s200 + $0x64] sm:$0xf]
      %v1514 = vld [vmem:[%s200 + $0x6c] sm:$0xf]
      %v1515 = vld [vmem:[%s200 + $0x70] sm:$0xf]
      %v1516 = vld [vmem:[%s200 + $0x78] sm:$0xf]
      %v1517 = vld [vmem:[%s200 + $0x7c] sm:$0xf]
      %v1518 = vld [vmem:[%s200 + $0x84] sm:$0xf]
      %v1519 = vld [vmem:[%s200 + $0x88] sm:$0xf]
      %v1520 = vld [vmem:[%s200 + $0x90] sm:$0xf]
      %v1521 = vld [vmem:[%s200 + $0x94] sm:$0xf]
      %v1522 = vld [vmem:[%s200 + $0x9c] sm:$0xf]
      %v1523 = vld [vmem:[%s200 + $0xa0] sm:$0xf]
      %v1524 = vld [vmem:[%s200 + $0xa8] sm:$0xf]
      %v1525 = vld [vmem:[%s200 + $0xac] sm:$0xf]
      %v1526 = vld [vmem:[%s200 + $0xb4] sm:$0xf]
      %v1527 = vld [vmem:[%s200 + $0xb8] sm:$0xf]
      %s1528 = scalar_lea.vmem %s1, 60
      %v1529 = vld [vmem:[%s1528] sm:$0xf]
      %v1562 = vunpack.c.l.b16 %v1496
      %v1563 = vunpack.c.l.b16 %v1497
      %v1564 = vunpack.c.l.b16 %v1498
      %v1565 = vunpack.c.l.b16 %v1499
      %v1566 = vunpack.c.l.b16 %v1500
      %v1567 = vunpack.c.l.b16 %v1501
      %v1568 = vunpack.c.l.b16 %v1502
      %v1569 = vunpack.c.l.b16 %v1503
      %v1570 = vunpack.c.l.b16 %v1504
      %v1571 = vunpack.c.l.b16 %v1505
      %v1572 = vunpack.c.l.b16 %v1506
      %v1573 = vunpack.c.l.b16 %v1507
      %v1574 = vunpack.c.l.b16 %v1508
      %v1575 = vunpack.c.l.b16 %v1509
      %v1576 = vunpack.c.l.b16 %v1510
      %v1577 = vunpack.c.l.b16 %v1511
      %v1578 = vunpack.c.l.b16 %v1512
      %v1579 = vunpack.c.l.b16 %v1513
      %v1580 = vunpack.c.l.b16 %v1514
      %v1581 = vunpack.c.l.b16 %v1515
      %v1582 = vunpack.c.l.b16 %v1516
      %v1583 = vunpack.c.l.b16 %v1517
      %v1584 = vunpack.c.l.b16 %v1518
      %v1585 = vunpack.c.l.b16 %v1519
      %v1586 = vunpack.c.l.b16 %v1520
      %v1587 = vunpack.c.l.b16 %v1521
      %v1588 = vunpack.c.l.b16 %v1522
      %v1589 = vunpack.c.l.b16 %v1523
      %v1590 = vunpack.c.l.b16 %v1524
      %v1591 = vunpack.c.l.b16 %v1525
      %v1592 = vunpack.c.l.b16 %v1526
      %v1593 = vunpack.c.l.b16 %v1527
      %v1594 = vpack.c.b16 %v1563, %v1562
      %v1595 = vpack.c.b16 %v1565, %v1564
      %v1596 = vpack.c.b16 %v1567, %v1566
      %v1597 = vpack.c.b16 %v1569, %v1568
      %v1598 = vpack.c.b16 %v1571, %v1570
      %v1599 = vpack.c.b16 %v1573, %v1572
      %v1600 = vpack.c.b16 %v1575, %v1574
      %v1601 = vpack.c.b16 %v1577, %v1576
      %v1602 = vpack.c.b16 %v1579, %v1578
      %v1603 = vpack.c.b16 %v1581, %v1580
      %v1604 = vpack.c.b16 %v1583, %v1582
      %v1605 = vpack.c.b16 %v1585, %v1584
      %v1606 = vpack.c.b16 %v1587, %v1586
      %v1607 = vpack.c.b16 %v1589, %v1588
      %v1608 = vpack.c.b16 %v1591, %v1590
      %v1609 = vpack.c.b16 %v1593, %v1592
      %v1611 = vsel %vm732, %v1529, 0
      %v1614 = vsel %vm732, %v1594, 0
      %v1617 = vsel %vm732, %v1595, 0
      %v1620 = vsel %vm732, %v1596, 0
      %v1623 = vsel %vm732, %v1597, 0
      %v1626 = vsel %vm732, %v1598, 0
      %v1629 = vsel %vm732, %v1599, 0
      %v1632 = vsel %vm732, %v1600, 0
      %v1635 = vsel %vm732, %v1601, 0
      %v1638 = vsel %vm732, %v1602, 0
      %v1641 = vsel %vm732, %v1603, 0
      %v1644 = vsel %vm732, %v1604, 0
      %v1647 = vsel %vm732, %v1605, 0
      %v1650 = vsel %vm732, %v1606, 0
      %v1653 = vsel %vm732, %v1607, 0
      %v1656 = vsel %vm732, %v1608, 0
      %v1659 = vsel %vm732, %v1609, 0
      %1661 = vmatpush.bf16.xpose.msra.mxu0 %v1635
      %1662 = vmatpush.bf16.xpose.msra.mxu0 %v1632
      %1663 = vmatpush.bf16.xpose.msra.mxu0 %v1629
      %1664 = vmatpush.bf16.xpose.msra.mxu0 %v1626
      %1665 = vmatpush.bf16.xpose.msra.mxu0 %v1623
      %1666 = vmatpush.bf16.xpose.msra.mxu0 %v1620
      %1667 = vmatpush.bf16.xpose.msra.mxu0 %v1617
      %1668 = vmatpush.bf16.xpose.msra.mxu0 %v1614
      %1669 = vmatmul.bf16.gmra.mxu0 %v1611
      %v1670 = vpop.f32.mrf.mxu0
      %v1671 = vadd.f32 0.0, %v1670
      %v1672 = vpop.f32.mrf.mxu0
      %1673 = vdwg.mxu0
      %1674 = vmatpush.bf16.xpose.msra.mxu0 %v1659
      %1675 = vmatpush.bf16.xpose.msra.mxu0 %v1656
      %1676 = vmatpush.bf16.xpose.msra.mxu0 %v1653
      %1677 = vmatpush.bf16.xpose.msra.mxu0 %v1650
      %1678 = vmatpush.bf16.xpose.msra.mxu0 %v1647
      %1679 = vmatpush.bf16.xpose.msra.mxu0 %v1644
      %1680 = vmatpush.bf16.xpose.msra.mxu0 %v1641
      %1681 = vmatpush.bf16.xpose.msra.mxu0 %v1638
      %1682 = vmatmul.bf16.gmra.mxu0 %v1611
      %v1683 = vpop.f32.mrf.mxu0
      %v1684 = vadd.f32 0.0, %v1683
      %v1685 = vpop.f32.mrf.mxu0
      %1686 = vdwg.mxu0
      %v1687 = vadd.f32 %v1494, %v1671
      %v1688 = vadd.f32 %v1495, %v1684
      %1690 = vset.pattern.permute.xlu0 0
      %1691 = vperm.xlu0 %1690, %v211
      %v1692 = vpop.permute.xlu0 %1691
      %v1694 = vadd.f32 %v1687, %v1692
      %v1695 = vadd.f32 %v1688, %v1692
      %v1696 = vadd.f32 %v1694, %v1695
      %1697 = vadd.xlane.f32.xlu0 %v1696
      %v1698 = vpop.xlane.xlu0 %1697
      %v1699 = vrcp.pop 256.0
      %v1700 = vmul.f32 256.0, %v1699
      %v1701 = vsub.f32 1.0, %v1700
      %v1702 = vmul.f32 %v1699, %v1701
      %v1703 = vadd.f32 %v1699, %v1702
      %vm1704 = vweird.f32 %v1699
      %v1705 = vsel %vm1704, %v1699, %v1703
      %v1706 = vmul.f32 %v1698, %v1705
      %v1707 = vsub.f32 %v1694, %v1706
      %v1708 = vsub.f32 %v1695, %v1706
      %v1709 = vmul.f32 %v1707, %v1707
      %v1710 = vmul.f32 %v1708, %v1708
      %v1711 = vadd.f32 %v1709, %v1710
      %1712 = vadd.xlane.f32.xlu0 %v1711
      %v1713 = vpop.xlane.xlu0 %1712
      %vm1714 = vcmask 7168
      %v1715 = vsel %vm1714, %v1706, %v1713
      %vm1716 = vcmask 15360
      %1717 = vst.msk [vmem:[%s210] sm:$0xff] %vm1716, %v1715
      %v1718 = vpack.c.bf16 %v1695, %v1694
      %1719 = vst [vmem:[%s205] sm:$0xff] %v1718
      %v1720 = vld [vmem:[%s212] sm:$0xe]
      %v1721 = vld [vmem:[%s212 + $0x4] sm:$0xf]
      %v1722 = vld [vmem:[%s212 + $0x8] sm:$0x1]
      %v1723 = vld [vmem:[%s212 + $0xc] sm:$0xe]
      %v1724 = vld [vmem:[%s212 + $0x10] sm:$0xf]
      %v1725 = vld [vmem:[%s212 + $0x14] sm:$0x1]
      %v1726 = vld [vmem:[%s212 + $0x18] sm:$0xe]
      %v1727 = vld [vmem:[%s212 + $0x1c] sm:$0xf]
      %v1728 = vld [vmem:[%s212 + $0x20] sm:$0x1]
      %v1729 = vld [vmem:[%s212 + $0x24] sm:$0xe]
      %v1730 = vld [vmem:[%s212 + $0x28] sm:$0xf]
      %v1731 = vld [vmem:[%s212 + $0x2c] sm:$0x1]
      %v1732 = vld [vmem:[%s212 + $0x30] sm:$0xe]
      %v1733 = vld [vmem:[%s212 + $0x34] sm:$0xf]
      %v1734 = vld [vmem:[%s212 + $0x38] sm:$0x1]
      %v1735 = vld [vmem:[%s212 + $0x3c] sm:$0xe]
      %v1736 = vld [vmem:[%s212 + $0x40] sm:$0xf]
      %v1737 = vld [vmem:[%s212 + $0x44] sm:$0x1]
      %v1738 = vld [vmem:[%s212 + $0x48] sm:$0xe]
      %v1739 = vld [vmem:[%s212 + $0x4c] sm:$0xf]
      %v1740 = vld [vmem:[%s212 + $0x50] sm:$0x1]
      %v1741 = vld [vmem:[%s212 + $0x54] sm:$0xe]
      %v1742 = vld [vmem:[%s212 + $0x58] sm:$0xf]
      %v1743 = vld [vmem:[%s212 + $0x5c] sm:$0x1]
      %v1744 = vld [vmem:[%s212 + $0x60] sm:$0xe]
      %v1745 = vld [vmem:[%s212 + $0x64] sm:$0xf]
      %v1746 = vld [vmem:[%s212 + $0x68] sm:$0x1]
      %v1747 = vld [vmem:[%s212 + $0x6c] sm:$0xe]
      %v1748 = vld [vmem:[%s212 + $0x70] sm:$0xf]
      %v1749 = vld [vmem:[%s212 + $0x74] sm:$0x1]
      %v1750 = vld [vmem:[%s212 + $0x78] sm:$0xe]
      %v1751 = vld [vmem:[%s212 + $0x7c] sm:$0xf]
      %v1752 = vld [vmem:[%s212 + $0x80] sm:$0x1]
      %v1753 = vld [vmem:[%s212 + $0x84] sm:$0xe]
      %v1754 = vld [vmem:[%s212 + $0x88] sm:$0xf]
      %v1755 = vld [vmem:[%s212 + $0x8c] sm:$0x1]
      %v1756 = vld [vmem:[%s212 + $0x90] sm:$0xe]
      %v1757 = vld [vmem:[%s212 + $0x94] sm:$0xf]
      %v1758 = vld [vmem:[%s212 + $0x98] sm:$0x1]
      %v1759 = vld [vmem:[%s212 + $0x9c] sm:$0xe]
      %v1760 = vld [vmem:[%s212 + $0xa0] sm:$0xf]
      %v1761 = vld [vmem:[%s212 + $0xa4] sm:$0x1]
      %v1762 = vld [vmem:[%s212 + $0xa8] sm:$0xe]
      %v1763 = vld [vmem:[%s212 + $0xac] sm:$0xf]
      %v1764 = vld [vmem:[%s212 + $0xb0] sm:$0x1]
      %v1765 = vld [vmem:[%s212 + $0xb4] sm:$0xe]
      %v1766 = vld [vmem:[%s212 + $0xb8] sm:$0xf]
      %v1767 = vld [vmem:[%s212 + $0xbc] sm:$0x1]
      %vm1816 = vcmask 1042432
      %vm1817 = vcmask 1046532
      %vm1818 = vmor %vm1816, %vm1817
      %v1819 = vrot.slane %v1720, 5
      %v1820 = vrot.slane %v1819, 4
      %v1821 = vrot.slane %v1721, 5
      %v1822 = vsel %vm1818, %v1820, %v1821
      %v1823 = vrot.slane %v1821, 4
      %v1824 = vrot.slane %v1722, 5
      %v1825 = vsel %vm1818, %v1823, %v1824
      %v1826 = vrot.slane %v1723, 5
      %v1827 = vrot.slane %v1826, 4
      %v1828 = vrot.slane %v1724, 5
      %v1829 = vsel %vm1818, %v1827, %v1828
      %v1830 = vrot.slane %v1828, 4
      %v1831 = vrot.slane %v1725, 5
      %v1832 = vsel %vm1818, %v1830, %v1831
      %v1833 = vrot.slane %v1726, 5
      %v1834 = vrot.slane %v1833, 4
      %v1835 = vrot.slane %v1727, 5
      %v1836 = vsel %vm1818, %v1834, %v1835
      %v1837 = vrot.slane %v1835, 4
      %v1838 = vrot.slane %v1728, 5
      %v1839 = vsel %vm1818, %v1837, %v1838
      %v1840 = vrot.slane %v1729, 5
      %v1841 = vrot.slane %v1840, 4
      %v1842 = vrot.slane %v1730, 5
      %v1843 = vsel %vm1818, %v1841, %v1842
      %v1844 = vrot.slane %v1842, 4
      %v1845 = vrot.slane %v1731, 5
      %v1846 = vsel %vm1818, %v1844, %v1845
      %v1847 = vrot.slane %v1732, 5
      %v1848 = vrot.slane %v1847, 4
      %v1849 = vrot.slane %v1733, 5
      %v1850 = vsel %vm1818, %v1848, %v1849
      %v1851 = vrot.slane %v1849, 4
      %v1852 = vrot.slane %v1734, 5
      %v1853 = vsel %vm1818, %v1851, %v1852
      %v1854 = vrot.slane %v1735, 5
      %v1855 = vrot.slane %v1854, 4
      %v1856 = vrot.slane %v1736, 5
      %v1857 = vsel %vm1818, %v1855, %v1856
      %v1858 = vrot.slane %v1856, 4
      %v1859 = vrot.slane %v1737, 5
      %v1860 = vsel %vm1818, %v1858, %v1859
      %v1861 = vrot.slane %v1738, 5
      %v1862 = vrot.slane %v1861, 4
      %v1863 = vrot.slane %v1739, 5
      %v1864 = vsel %vm1818, %v1862, %v1863
      %v1865 = vrot.slane %v1863, 4
      %v1866 = vrot.slane %v1740, 5
      %v1867 = vsel %vm1818, %v1865, %v1866
      %v1868 = vrot.slane %v1741, 5
      %v1869 = vrot.slane %v1868, 4
      %v1870 = vrot.slane %v1742, 5
      %v1871 = vsel %vm1818, %v1869, %v1870
      %v1872 = vrot.slane %v1870, 4
      %v1873 = vrot.slane %v1743, 5
      %v1874 = vsel %vm1818, %v1872, %v1873
      %v1875 = vrot.slane %v1744, 5
      %v1876 = vrot.slane %v1875, 4
      %v1877 = vrot.slane %v1745, 5
      %v1878 = vsel %vm1818, %v1876, %v1877
      %v1879 = vrot.slane %v1877, 4
      %v1880 = vrot.slane %v1746, 5
      %v1881 = vsel %vm1818, %v1879, %v1880
      %v1882 = vrot.slane %v1747, 5
      %v1883 = vrot.slane %v1882, 4
      %v1884 = vrot.slane %v1748, 5
      %v1885 = vsel %vm1818, %v1883, %v1884
      %v1886 = vrot.slane %v1884, 4
      %v1887 = vrot.slane %v1749, 5
      %v1888 = vsel %vm1818, %v1886, %v1887
      %v1889 = vrot.slane %v1750, 5
      %v1890 = vrot.slane %v1889, 4
      %v1891 = vrot.slane %v1751, 5
      %v1892 = vsel %vm1818, %v1890, %v1891
      %v1893 = vrot.slane %v1891, 4
      %v1894 = vrot.slane %v1752, 5
      %v1895 = vsel %vm1818, %v1893, %v1894
      %v1896 = vrot.slane %v1753, 5
      %v1897 = vrot.slane %v1896, 4
      %v1898 = vrot.slane %v1754, 5
      %v1899 = vsel %vm1818, %v1897, %v1898
      %v1900 = vrot.slane %v1898, 4
      %v1901 = vrot.slane %v1755, 5
      %v1902 = vsel %vm1818, %v1900, %v1901
      %v1903 = vrot.slane %v1756, 5
      %v1904 = vrot.slane %v1903, 4
      %v1905 = vrot.slane %v1757, 5
      %v1906 = vsel %vm1818, %v1904, %v1905
      %v1907 = vrot.slane %v1905, 4
      %v1908 = vrot.slane %v1758, 5
      %v1909 = vsel %vm1818, %v1907, %v1908
      %v1910 = vrot.slane %v1759, 5
      %v1911 = vrot.slane %v1910, 4
      %v1912 = vrot.slane %v1760, 5
      %v1913 = vsel %vm1818, %v1911, %v1912
      %v1914 = vrot.slane %v1912, 4
      %v1915 = vrot.slane %v1761, 5
      %v1916 = vsel %vm1818, %v1914, %v1915
      %v1917 = vrot.slane %v1762, 5
      %v1918 = vrot.slane %v1917, 4
      %v1919 = vrot.slane %v1763, 5
      %v1920 = vsel %vm1818, %v1918, %v1919
      %v1921 = vrot.slane %v1919, 4
      %v1922 = vrot.slane %v1764, 5
      %v1923 = vsel %vm1818, %v1921, %v1922
      %v1924 = vrot.slane %v1765, 5
      %v1925 = vrot.slane %v1924, 4
      %v1926 = vrot.slane %v1766, 5
      %v1927 = vsel %vm1818, %v1925, %v1926
      %v1928 = vrot.slane %v1926, 4
      %v1929 = vrot.slane %v1767, 5
      %v1930 = vsel %vm1818, %v1928, %v1929
      %s1931 = scalar_lea.vmem %s1, 16
      %v1932 = vld [vmem:[%s1931] sm:$0xf]
      %v1933 = vld [vmem:[%s212] sm:$0xf]
      %v1934 = vld [vmem:[%s212 + $0xc] sm:$0xf]
      %v1935 = vld [vmem:[%s212 + $0x18] sm:$0xf]
      %v1936 = vld [vmem:[%s212 + $0x24] sm:$0xf]
      %v1937 = vld [vmem:[%s212 + $0x30] sm:$0xf]
      %v1938 = vld [vmem:[%s212 + $0x3c] sm:$0xf]
      %v1939 = vld [vmem:[%s212 + $0x48] sm:$0xf]
      %v1940 = vld [vmem:[%s212 + $0x54] sm:$0xf]
      %v1941 = vld [vmem:[%s212 + $0x60] sm:$0xf]
      %v1942 = vld [vmem:[%s212 + $0x6c] sm:$0xf]
      %v1943 = vld [vmem:[%s212 + $0x78] sm:$0xf]
      %v1944 = vld [vmem:[%s212 + $0x84] sm:$0xf]
      %v1945 = vld [vmem:[%s212 + $0x90] sm:$0xf]
      %v1946 = vld [vmem:[%s212 + $0x9c] sm:$0xf]
      %v1947 = vld [vmem:[%s212 + $0xa8] sm:$0xf]
      %v1948 = vld [vmem:[%s212 + $0xb4] sm:$0xf]
      %v1950 = vshrl.u32 %v1933, 16
      %v1952 = vrot.slane %v1950, 4
      %v1953 = vshll.u32 %v1933, 16
      %v1955 = vrot.slane %v1953, 5
      %v1956 = vor.u32 %v1952, %v1955
      %v1957 = vrot.slane %v1956, 4
      %v1959 = vshll.u32 %v1721, 16
      %v1961 = vrot.slane %v1959, 5
      %v1962 = vsel %vm263, %v1957, %v1961
      %v1963 = vshrl.u32 %v1721, 16
      %v1965 = vrot.slane %v1963, 4
      %v1966 = vor.u32 %v1965, %v1961
      %v1967 = vrot.slane %v1966, 4
      %v1969 = vshll.u32 %v1722, 16
      %v1971 = vrot.slane %v1969, 5
      %v1972 = vsel %vm263, %v1967, %v1971
      %v1974 = vshrl.u32 %v1934, 16
      %v1976 = vrot.slane %v1974, 4
      %v1977 = vshll.u32 %v1934, 16
      %v1979 = vrot.slane %v1977, 5
      %v1980 = vor.u32 %v1976, %v1979
      %v1981 = vrot.slane %v1980, 4
      %v1983 = vshll.u32 %v1724, 16
      %v1985 = vrot.slane %v1983, 5
      %v1986 = vsel %vm263, %v1981, %v1985
      %v1987 = vshrl.u32 %v1724, 16
      %v1989 = vrot.slane %v1987, 4
      %v1990 = vor.u32 %v1989, %v1985
      %v1991 = vrot.slane %v1990, 4
      %v1993 = vshll.u32 %v1725, 16
      %v1995 = vrot.slane %v1993, 5
      %v1996 = vsel %vm263, %v1991, %v1995
      %v1998 = vshrl.u32 %v1935, 16
      %v2000 = vrot.slane %v1998, 4
      %v2001 = vshll.u32 %v1935, 16
      %v2003 = vrot.slane %v2001, 5
      %v2004 = vor.u32 %v2000, %v2003
      %v2005 = vrot.slane %v2004, 4
      %v2007 = vshll.u32 %v1727, 16
      %v2009 = vrot.slane %v2007, 5
      %v2010 = vsel %vm263, %v2005, %v2009
      %v2011 = vshrl.u32 %v1727, 16
      %v2013 = vrot.slane %v2011, 4
      %v2014 = vor.u32 %v2013, %v2009
      %v2015 = vrot.slane %v2014, 4
      %v2017 = vshll.u32 %v1728, 16
      %v2019 = vrot.slane %v2017, 5
      %v2020 = vsel %vm263, %v2015, %v2019
      %v2022 = vshrl.u32 %v1936, 16
      %v2024 = vrot.slane %v2022, 4
      %v2025 = vshll.u32 %v1936, 16
      %v2027 = vrot.slane %v2025, 5
      %v2028 = vor.u32 %v2024, %v2027
      %v2029 = vrot.slane %v2028, 4
      %v2031 = vshll.u32 %v1730, 16
      %v2033 = vrot.slane %v2031, 5
      %v2034 = vsel %vm263, %v2029, %v2033
      %v2035 = vshrl.u32 %v1730, 16
      %v2037 = vrot.slane %v2035, 4
      %v2038 = vor.u32 %v2037, %v2033
      %v2039 = vrot.slane %v2038, 4
      %v2041 = vshll.u32 %v1731, 16
      %v2043 = vrot.slane %v2041, 5
      %v2044 = vsel %vm263, %v2039, %v2043
      %v2046 = vshrl.u32 %v1937, 16
      %v2048 = vrot.slane %v2046, 4
      %v2049 = vshll.u32 %v1937, 16
      %v2051 = vrot.slane %v2049, 5
      %v2052 = vor.u32 %v2048, %v2051
      %v2053 = vrot.slane %v2052, 4
      %v2055 = vshll.u32 %v1733, 16
      %v2057 = vrot.slane %v2055, 5
      %v2058 = vsel %vm263, %v2053, %v2057
      %v2059 = vshrl.u32 %v1733, 16
      %v2061 = vrot.slane %v2059, 4
      %v2062 = vor.u32 %v2061, %v2057
      %v2063 = vrot.slane %v2062, 4
      %v2065 = vshll.u32 %v1734, 16
      %v2067 = vrot.slane %v2065, 5
      %v2068 = vsel %vm263, %v2063, %v2067
      %v2070 = vshrl.u32 %v1938, 16
      %v2072 = vrot.slane %v2070, 4
      %v2073 = vshll.u32 %v1938, 16
      %v2075 = vrot.slane %v2073, 5
      %v2076 = vor.u32 %v2072, %v2075
      %v2077 = vrot.slane %v2076, 4
      %v2079 = vshll.u32 %v1736, 16
      %v2081 = vrot.slane %v2079, 5
      %v2082 = vsel %vm263, %v2077, %v2081
      %v2083 = vshrl.u32 %v1736, 16
      %v2085 = vrot.slane %v2083, 4
      %v2086 = vor.u32 %v2085, %v2081
      %v2087 = vrot.slane %v2086, 4
      %v2089 = vshll.u32 %v1737, 16
      %v2091 = vrot.slane %v2089, 5
      %v2092 = vsel %vm263, %v2087, %v2091
      %v2094 = vshrl.u32 %v1939, 16
      %v2096 = vrot.slane %v2094, 4
      %v2097 = vshll.u32 %v1939, 16
      %v2099 = vrot.slane %v2097, 5
      %v2100 = vor.u32 %v2096, %v2099
      %v2101 = vrot.slane %v2100, 4
      %v2103 = vshll.u32 %v1739, 16
      %v2105 = vrot.slane %v2103, 5
      %v2106 = vsel %vm263, %v2101, %v2105
      %v2107 = vshrl.u32 %v1739, 16
      %v2109 = vrot.slane %v2107, 4
      %v2110 = vor.u32 %v2109, %v2105
      %v2111 = vrot.slane %v2110, 4
      %v2113 = vshll.u32 %v1740, 16
      %v2115 = vrot.slane %v2113, 5
      %v2116 = vsel %vm263, %v2111, %v2115
      %v2118 = vshrl.u32 %v1940, 16
      %v2120 = vrot.slane %v2118, 4
      %v2121 = vshll.u32 %v1940, 16
      %v2123 = vrot.slane %v2121, 5
      %v2124 = vor.u32 %v2120, %v2123
      %v2125 = vrot.slane %v2124, 4
      %v2127 = vshll.u32 %v1742, 16
      %v2129 = vrot.slane %v2127, 5
      %v2130 = vsel %vm263, %v2125, %v2129
      %v2131 = vshrl.u32 %v1742, 16
      %v2133 = vrot.slane %v2131, 4
      %v2134 = vor.u32 %v2133, %v2129
      %v2135 = vrot.slane %v2134, 4
      %v2137 = vshll.u32 %v1743, 16
      %v2139 = vrot.slane %v2137, 5
      %v2140 = vsel %vm263, %v2135, %v2139
      %v2142 = vshrl.u32 %v1941, 16
      %v2144 = vrot.slane %v2142, 4
      %v2145 = vshll.u32 %v1941, 16
      %v2147 = vrot.slane %v2145, 5
      %v2148 = vor.u32 %v2144, %v2147
      %v2149 = vrot.slane %v2148, 4
      %v2151 = vshll.u32 %v1745, 16
      %v2153 = vrot.slane %v2151, 5
      %v2154 = vsel %vm263, %v2149, %v2153
      %v2155 = vshrl.u32 %v1745, 16
      %v2157 = vrot.slane %v2155, 4
      %v2158 = vor.u32 %v2157, %v2153
      %v2159 = vrot.slane %v2158, 4
      %v2161 = vshll.u32 %v1746, 16
      %v2163 = vrot.slane %v2161, 5
      %v2164 = vsel %vm263, %v2159, %v2163
      %v2166 = vshrl.u32 %v1942, 16
      %v2168 = vrot.slane %v2166, 4
      %v2169 = vshll.u32 %v1942, 16
      %v2171 = vrot.slane %v2169, 5
      %v2172 = vor.u32 %v2168, %v2171
      %v2173 = vrot.slane %v2172, 4
      %v2175 = vshll.u32 %v1748, 16
      %v2177 = vrot.slane %v2175, 5
      %v2178 = vsel %vm263, %v2173, %v2177
      %v2179 = vshrl.u32 %v1748, 16
      %v2181 = vrot.slane %v2179, 4
      %v2182 = vor.u32 %v2181, %v2177
      %v2183 = vrot.slane %v2182, 4
      %v2185 = vshll.u32 %v1749, 16
      %v2187 = vrot.slane %v2185, 5
      %v2188 = vsel %vm263, %v2183, %v2187
      %v2190 = vshrl.u32 %v1943, 16
      %v2192 = vrot.slane %v2190, 4
      %v2193 = vshll.u32 %v1943, 16
      %v2195 = vrot.slane %v2193, 5
      %v2196 = vor.u32 %v2192, %v2195
      %v2197 = vrot.slane %v2196, 4
      %v2199 = vshll.u32 %v1751, 16
      %v2201 = vrot.slane %v2199, 5
      %v2202 = vsel %vm263, %v2197, %v2201
      %v2203 = vshrl.u32 %v1751, 16
      %v2205 = vrot.slane %v2203, 4
      %v2206 = vor.u32 %v2205, %v2201
      %v2207 = vrot.slane %v2206, 4
      %v2209 = vshll.u32 %v1752, 16
      %v2211 = vrot.slane %v2209, 5
      %v2212 = vsel %vm263, %v2207, %v2211
      %v2214 = vshrl.u32 %v1944, 16
      %v2216 = vrot.slane %v2214, 4
      %v2217 = vshll.u32 %v1944, 16
      %v2219 = vrot.slane %v2217, 5
      %v2220 = vor.u32 %v2216, %v2219
      %v2221 = vrot.slane %v2220, 4
      %v2223 = vshll.u32 %v1754, 16
      %v2225 = vrot.slane %v2223, 5
      %v2226 = vsel %vm263, %v2221, %v2225
      %v2227 = vshrl.u32 %v1754, 16
      %v2229 = vrot.slane %v2227, 4
      %v2230 = vor.u32 %v2229, %v2225
      %v2231 = vrot.slane %v2230, 4
      %v2233 = vshll.u32 %v1755, 16
      %v2235 = vrot.slane %v2233, 5
      %v2236 = vsel %vm263, %v2231, %v2235
      %v2238 = vshrl.u32 %v1945, 16
      %v2240 = vrot.slane %v2238, 4
      %v2241 = vshll.u32 %v1945, 16
      %v2243 = vrot.slane %v2241, 5
      %v2244 = vor.u32 %v2240, %v2243
      %v2245 = vrot.slane %v2244, 4
      %v2247 = vshll.u32 %v1757, 16
      %v2249 = vrot.slane %v2247, 5
      %v2250 = vsel %vm263, %v2245, %v2249
      %v2251 = vshrl.u32 %v1757, 16
      %v2253 = vrot.slane %v2251, 4
      %v2254 = vor.u32 %v2253, %v2249
      %v2255 = vrot.slane %v2254, 4
      %v2257 = vshll.u32 %v1758, 16
      %v2259 = vrot.slane %v2257, 5
      %v2260 = vsel %vm263, %v2255, %v2259
      %v2262 = vshrl.u32 %v1946, 16
      %v2264 = vrot.slane %v2262, 4
      %v2265 = vshll.u32 %v1946, 16
      %v2267 = vrot.slane %v2265, 5
      %v2268 = vor.u32 %v2264, %v2267
      %v2269 = vrot.slane %v2268, 4
      %v2271 = vshll.u32 %v1760, 16
      %v2273 = vrot.slane %v2271, 5
      %v2274 = vsel %vm263, %v2269, %v2273
      %v2275 = vshrl.u32 %v1760, 16
      %v2277 = vrot.slane %v2275, 4
      %v2278 = vor.u32 %v2277, %v2273
      %v2279 = vrot.slane %v2278, 4
      %v2281 = vshll.u32 %v1761, 16
      %v2283 = vrot.slane %v2281, 5
      %v2284 = vsel %vm263, %v2279, %v2283
      %v2286 = vshrl.u32 %v1947, 16
      %v2288 = vrot.slane %v2286, 4
      %v2289 = vshll.u32 %v1947, 16
      %v2291 = vrot.slane %v2289, 5
      %v2292 = vor.u32 %v2288, %v2291
      %v2293 = vrot.slane %v2292, 4
      %v2295 = vshll.u32 %v1763, 16
      %v2297 = vrot.slane %v2295, 5
      %v2298 = vsel %vm263, %v2293, %v2297
      %v2299 = vshrl.u32 %v1763, 16
      %v2301 = vrot.slane %v2299, 4
      %v2302 = vor.u32 %v2301, %v2297
      %v2303 = vrot.slane %v2302, 4
      %v2305 = vshll.u32 %v1764, 16
      %v2307 = vrot.slane %v2305, 5
      %v2308 = vsel %vm263, %v2303, %v2307
      %v2310 = vshrl.u32 %v1948, 16
      %v2312 = vrot.slane %v2310, 4
      %v2313 = vshll.u32 %v1948, 16
      %v2315 = vrot.slane %v2313, 5
      %v2316 = vor.u32 %v2312, %v2315
      %v2317 = vrot.slane %v2316, 4
      %v2319 = vshll.u32 %v1766, 16
      %v2321 = vrot.slane %v2319, 5
      %v2322 = vsel %vm263, %v2317, %v2321
      %v2323 = vshrl.u32 %v1766, 16
      %v2325 = vrot.slane %v2323, 4
      %v2326 = vor.u32 %v2325, %v2321
      %v2327 = vrot.slane %v2326, 4
      %v2329 = vshll.u32 %v1767, 16
      %v2331 = vrot.slane %v2329, 5
      %v2332 = vsel %vm263, %v2327, %v2331
      %s2333 = scalar_lea.vmem %s1, 24
      %v2334 = vld [vmem:[%s2333] sm:$0xf]
      %v2335 = vunpack.c.l.b16 %v1962
      %v2336 = vunpack.c.l.b16 %v1972
      %v2337 = vunpack.c.l.b16 %v1986
      %v2338 = vunpack.c.l.b16 %v1996
      %v2339 = vunpack.c.l.b16 %v2010
      %v2340 = vunpack.c.l.b16 %v2020
      %v2341 = vunpack.c.l.b16 %v2034
      %v2342 = vunpack.c.l.b16 %v2044
      %v2343 = vunpack.c.l.b16 %v2058
      %v2344 = vunpack.c.l.b16 %v2068
      %v2345 = vunpack.c.l.b16 %v2082
      %v2346 = vunpack.c.l.b16 %v2092
      %v2347 = vunpack.c.l.b16 %v2106
      %v2348 = vunpack.c.l.b16 %v2116
      %v2349 = vunpack.c.l.b16 %v2130
      %v2350 = vunpack.c.l.b16 %v2140
      %v2351 = vunpack.c.l.b16 %v2154
      %v2352 = vunpack.c.l.b16 %v2164
      %v2353 = vunpack.c.l.b16 %v2178
      %v2354 = vunpack.c.l.b16 %v2188
      %v2355 = vunpack.c.l.b16 %v2202
      %v2356 = vunpack.c.l.b16 %v2212
      %v2357 = vunpack.c.l.b16 %v2226
      %v2358 = vunpack.c.l.b16 %v2236
      %v2359 = vunpack.c.l.b16 %v2250
      %v2360 = vunpack.c.l.b16 %v2260
      %v2361 = vunpack.c.l.b16 %v2274
      %v2362 = vunpack.c.l.b16 %v2284
      %v2363 = vunpack.c.l.b16 %v2298
      %v2364 = vunpack.c.l.b16 %v2308
      %v2365 = vunpack.c.l.b16 %v2322
      %v2366 = vunpack.c.l.b16 %v2332
      %v2367 = vpack.c.b16 %v2336, %v2335
      %v2368 = vpack.c.b16 %v2338, %v2337
      %v2369 = vpack.c.b16 %v2340, %v2339
      %v2370 = vpack.c.b16 %v2342, %v2341
      %v2371 = vpack.c.b16 %v2344, %v2343
      %v2372 = vpack.c.b16 %v2346, %v2345
      %v2373 = vpack.c.b16 %v2348, %v2347
      %v2374 = vpack.c.b16 %v2350, %v2349
      %v2375 = vpack.c.b16 %v2352, %v2351
      %v2376 = vpack.c.b16 %v2354, %v2353
      %v2377 = vpack.c.b16 %v2356, %v2355
      %v2378 = vpack.c.b16 %v2358, %v2357
      %v2379 = vpack.c.b16 %v2360, %v2359
      %v2380 = vpack.c.b16 %v2362, %v2361
      %v2381 = vpack.c.b16 %v2364, %v2363
      %v2382 = vpack.c.b16 %v2366, %v2365
      %v2384 = vsel %vm732, %v2334, 0
      %v2387 = vsel %vm732, %v2367, 0
      %v2390 = vsel %vm732, %v2368, 0
      %v2393 = vsel %vm732, %v2369, 0
      %v2396 = vsel %vm732, %v2370, 0
      %v2399 = vsel %vm732, %v2371, 0
      %v2402 = vsel %vm732, %v2372, 0
      %v2405 = vsel %vm732, %v2373, 0
      %v2408 = vsel %vm732, %v2374, 0
      %v2411 = vsel %vm732, %v2375, 0
      %v2414 = vsel %vm732, %v2376, 0
      %v2417 = vsel %vm732, %v2377, 0
      %v2420 = vsel %vm732, %v2378, 0
      %v2423 = vsel %vm732, %v2379, 0
      %v2426 = vsel %vm732, %v2380, 0
      %v2429 = vsel %vm732, %v2381, 0
      %v2432 = vsel %vm732, %v2382, 0
      %2434 = vmatpush.bf16.xpose.msra.mxu0 %v2408
      %2435 = vmatpush.bf16.xpose.msra.mxu0 %v2405
      %2436 = vmatpush.bf16.xpose.msra.mxu0 %v2402
      %2437 = vmatpush.bf16.xpose.msra.mxu0 %v2399
      %2438 = vmatpush.bf16.xpose.msra.mxu0 %v2396
      %2439 = vmatpush.bf16.xpose.msra.mxu0 %v2393
      %2440 = vmatpush.bf16.xpose.msra.mxu0 %v2390
      %2441 = vmatpush.bf16.xpose.msra.mxu0 %v2387
      %2442 = vmatmul.bf16.gmra.mxu0 %v2384
      %v2443 = vpop.f32.mrf.mxu0
      %v2444 = vadd.f32 0.0, %v2443
      %v2445 = vpop.f32.mrf.mxu0
      %2446 = vdwg.mxu0
      %2447 = vmatpush.bf16.xpose.msra.mxu0 %v2432
      %2448 = vmatpush.bf16.xpose.msra.mxu0 %v2429
      %2449 = vmatpush.bf16.xpose.msra.mxu0 %v2426
      %2450 = vmatpush.bf16.xpose.msra.mxu0 %v2423
      %2451 = vmatpush.bf16.xpose.msra.mxu0 %v2420
      %2452 = vmatpush.bf16.xpose.msra.mxu0 %v2417
      %2453 = vmatpush.bf16.xpose.msra.mxu0 %v2414
      %2454 = vmatpush.bf16.xpose.msra.mxu0 %v2411
      %2455 = vmatmul.bf16.gmra.mxu0 %v2384
      %v2456 = vpop.f32.mrf.mxu0
      %v2457 = vadd.f32 0.0, %v2456
      %v2458 = vpop.f32.mrf.mxu0
      %2459 = vdwg.mxu0
      %v2460 = vunpack.c.l.b16 %v1822
      %v2461 = vunpack.c.l.b16 %v1825
      %v2462 = vunpack.c.l.b16 %v1829
      %v2463 = vunpack.c.l.b16 %v1832
      %v2464 = vunpack.c.l.b16 %v1836
      %v2465 = vunpack.c.l.b16 %v1839
      %v2466 = vunpack.c.l.b16 %v1843
      %v2467 = vunpack.c.l.b16 %v1846
      %v2468 = vunpack.c.l.b16 %v1850
      %v2469 = vunpack.c.l.b16 %v1853
      %v2470 = vunpack.c.l.b16 %v1857
      %v2471 = vunpack.c.l.b16 %v1860
      %v2472 = vunpack.c.l.b16 %v1864
      %v2473 = vunpack.c.l.b16 %v1867
      %v2474 = vunpack.c.l.b16 %v1871
      %v2475 = vunpack.c.l.b16 %v1874
      %v2476 = vunpack.c.l.b16 %v1878
      %v2477 = vunpack.c.l.b16 %v1881
      %v2478 = vunpack.c.l.b16 %v1885
      %v2479 = vunpack.c.l.b16 %v1888
      %v2480 = vunpack.c.l.b16 %v1892
      %v2481 = vunpack.c.l.b16 %v1895
      %v2482 = vunpack.c.l.b16 %v1899
      %v2483 = vunpack.c.l.b16 %v1902
      %v2484 = vunpack.c.l.b16 %v1906
      %v2485 = vunpack.c.l.b16 %v1909
      %v2486 = vunpack.c.l.b16 %v1913
      %v2487 = vunpack.c.l.b16 %v1916
      %v2488 = vunpack.c.l.b16 %v1920
      %v2489 = vunpack.c.l.b16 %v1923
      %v2490 = vunpack.c.l.b16 %v1927
      %v2491 = vunpack.c.l.b16 %v1930
      %v2492 = vpack.c.b16 %v2461, %v2460
      %v2493 = vpack.c.b16 %v2463, %v2462
      %v2494 = vpack.c.b16 %v2465, %v2464
      %v2495 = vpack.c.b16 %v2467, %v2466
      %v2496 = vpack.c.b16 %v2469, %v2468
      %v2497 = vpack.c.b16 %v2471, %v2470
      %v2498 = vpack.c.b16 %v2473, %v2472
      %v2499 = vpack.c.b16 %v2475, %v2474
      %v2500 = vpack.c.b16 %v2477, %v2476
      %v2501 = vpack.c.b16 %v2479, %v2478
      %v2502 = vpack.c.b16 %v2481, %v2480
      %v2503 = vpack.c.b16 %v2483, %v2482
      %v2504 = vpack.c.b16 %v2485, %v2484
      %v2505 = vpack.c.b16 %v2487, %v2486
      %v2506 = vpack.c.b16 %v2489, %v2488
      %v2507 = vpack.c.b16 %v2491, %v2490
      %v2509 = vsel %vm732, %v1932, 0
      %v2512 = vsel %vm732, %v2492, 0
      %v2515 = vsel %vm732, %v2493, 0
      %v2518 = vsel %vm732, %v2494, 0
      %v2521 = vsel %vm732, %v2495, 0
      %v2524 = vsel %vm732, %v2496, 0
      %v2527 = vsel %vm732, %v2497, 0
      %v2530 = vsel %vm732, %v2498, 0
      %v2533 = vsel %vm732, %v2499, 0
      %v2536 = vsel %vm732, %v2500, 0
      %v2539 = vsel %vm732, %v2501, 0
      %v2542 = vsel %vm732, %v2502, 0
      %v2545 = vsel %vm732, %v2503, 0
      %v2548 = vsel %vm732, %v2504, 0
      %v2551 = vsel %vm732, %v2505, 0
      %v2554 = vsel %vm732, %v2506, 0
      %v2557 = vsel %vm732, %v2507, 0
      %2559 = vmatpush.bf16.xpose.msra.mxu0 %v2533
      %2560 = vmatpush.bf16.xpose.msra.mxu0 %v2530
      %2561 = vmatpush.bf16.xpose.msra.mxu0 %v2527
      %2562 = vmatpush.bf16.xpose.msra.mxu0 %v2524
      %2563 = vmatpush.bf16.xpose.msra.mxu0 %v2521
      %2564 = vmatpush.bf16.xpose.msra.mxu0 %v2518
      %2565 = vmatpush.bf16.xpose.msra.mxu0 %v2515
      %2566 = vmatpush.bf16.xpose.msra.mxu0 %v2512
      %2567 = vmatmul.bf16.gmra.mxu0 %v2509
      %v2568 = vpop.f32.mrf.mxu0
      %v2569 = vadd.f32 %v2444, %v2568
      %v2570 = vpop.f32.mrf.mxu0
      %2571 = vdwg.mxu0
      %2572 = vmatpush.bf16.xpose.msra.mxu0 %v2557
      %2573 = vmatpush.bf16.xpose.msra.mxu0 %v2554
      %2574 = vmatpush.bf16.xpose.msra.mxu0 %v2551
      %2575 = vmatpush.bf16.xpose.msra.mxu0 %v2548
      %2576 = vmatpush.bf16.xpose.msra.mxu0 %v2545
      %2577 = vmatpush.bf16.xpose.msra.mxu0 %v2542
      %2578 = vmatpush.bf16.xpose.msra.mxu0 %v2539
      %2579 = vmatpush.bf16.xpose.msra.mxu0 %v2536
      %2580 = vmatmul.bf16.gmra.mxu0 %v2509
      %v2581 = vpop.f32.mrf.mxu0
      %v2582 = vadd.f32 %v2457, %v2581
      %v2583 = vpop.f32.mrf.mxu0
      %2584 = vdwg.mxu0
      %v2585 = vld [vmem:[%s200] sm:$0xe]
      %v2586 = vld [vmem:[%s200 + $0x4] sm:$0xf]
      %v2587 = vld [vmem:[%s200 + $0x8] sm:$0x1]
      %v2588 = vld [vmem:[%s200 + $0xc] sm:$0xe]
      %v2589 = vld [vmem:[%s200 + $0x10] sm:$0xf]
      %v2590 = vld [vmem:[%s200 + $0x14] sm:$0x1]
      %v2591 = vld [vmem:[%s200 + $0x18] sm:$0xe]
      %v2592 = vld [vmem:[%s200 + $0x1c] sm:$0xf]
      %v2593 = vld [vmem:[%s200 + $0x20] sm:$0x1]
      %v2594 = vld [vmem:[%s200 + $0x24] sm:$0xe]
      %v2595 = vld [vmem:[%s200 + $0x28] sm:$0xf]
      %v2596 = vld [vmem:[%s200 + $0x2c] sm:$0x1]
      %v2597 = vld [vmem:[%s200 + $0x30] sm:$0xe]
      %v2598 = vld [vmem:[%s200 + $0x34] sm:$0xf]
      %v2599 = vld [vmem:[%s200 + $0x38] sm:$0x1]
      %v2600 = vld [vmem:[%s200 + $0x3c] sm:$0xe]
      %v2601 = vld [vmem:[%s200 + $0x40] sm:$0xf]
      %v2602 = vld [vmem:[%s200 + $0x44] sm:$0x1]
      %v2603 = vld [vmem:[%s200 + $0x48] sm:$0xe]
      %v2604 = vld [vmem:[%s200 + $0x4c] sm:$0xf]
      %v2605 = vld [vmem:[%s200 + $0x50] sm:$0x1]
      %v2606 = vld [vmem:[%s200 + $0x54] sm:$0xe]
      %v2607 = vld [vmem:[%s200 + $0x58] sm:$0xf]
      %v2608 = vld [vmem:[%s200 + $0x5c] sm:$0x1]
      %v2609 = vld [vmem:[%s200 + $0x60] sm:$0xe]
      %v2610 = vld [vmem:[%s200 + $0x64] sm:$0xf]
      %v2611 = vld [vmem:[%s200 + $0x68] sm:$0x1]
      %v2612 = vld [vmem:[%s200 + $0x6c] sm:$0xe]
      %v2613 = vld [vmem:[%s200 + $0x70] sm:$0xf]
      %v2614 = vld [vmem:[%s200 + $0x74] sm:$0x1]
      %v2615 = vld [vmem:[%s200 + $0x78] sm:$0xe]
      %v2616 = vld [vmem:[%s200 + $0x7c] sm:$0xf]
      %v2617 = vld [vmem:[%s200 + $0x80] sm:$0x1]
      %v2618 = vld [vmem:[%s200 + $0x84] sm:$0xe]
      %v2619 = vld [vmem:[%s200 + $0x88] sm:$0xf]
      %v2620 = vld [vmem:[%s200 + $0x8c] sm:$0x1]
      %v2621 = vld [vmem:[%s200 + $0x90] sm:$0xe]
      %v2622 = vld [vmem:[%s200 + $0x94] sm:$0xf]
      %v2623 = vld [vmem:[%s200 + $0x98] sm:$0x1]
      %v2624 = vld [vmem:[%s200 + $0x9c] sm:$0xe]
      %v2625 = vld [vmem:[%s200 + $0xa0] sm:$0xf]
      %v2626 = vld [vmem:[%s200 + $0xa4] sm:$0x1]
      %v2627 = vld [vmem:[%s200 + $0xa8] sm:$0xe]
      %v2628 = vld [vmem:[%s200 + $0xac] sm:$0xf]
      %v2629 = vld [vmem:[%s200 + $0xb0] sm:$0x1]
      %v2630 = vld [vmem:[%s200 + $0xb4] sm:$0xe]
      %v2631 = vld [vmem:[%s200 + $0xb8] sm:$0xf]
      %v2632 = vld [vmem:[%s200 + $0xbc] sm:$0x1]
      %v2681 = vrot.slane %v2585, 5
      %v2682 = vrot.slane %v2681, 4
      %v2683 = vrot.slane %v2586, 5
      %v2684 = vsel %vm1818, %v2682, %v2683
      %v2685 = vrot.slane %v2683, 4
      %v2686 = vrot.slane %v2587, 5
      %v2687 = vsel %vm1818, %v2685, %v2686
      %v2688 = vrot.slane %v2588, 5
      %v2689 = vrot.slane %v2688, 4
      %v2690 = vrot.slane %v2589, 5
      %v2691 = vsel %vm1818, %v2689, %v2690
      %v2692 = vrot.slane %v2690, 4
      %v2693 = vrot.slane %v2590, 5
      %v2694 = vsel %vm1818, %v2692, %v2693
      %v2695 = vrot.slane %v2591, 5
      %v2696 = vrot.slane %v2695, 4
      %v2697 = vrot.slane %v2592, 5
      %v2698 = vsel %vm1818, %v2696, %v2697
      %v2699 = vrot.slane %v2697, 4
      %v2700 = vrot.slane %v2593, 5
      %v2701 = vsel %vm1818, %v2699, %v2700
      %v2702 = vrot.slane %v2594, 5
      %v2703 = vrot.slane %v2702, 4
      %v2704 = vrot.slane %v2595, 5
      %v2705 = vsel %vm1818, %v2703, %v2704
      %v2706 = vrot.slane %v2704, 4
      %v2707 = vrot.slane %v2596, 5
      %v2708 = vsel %vm1818, %v2706, %v2707
      %v2709 = vrot.slane %v2597, 5
      %v2710 = vrot.slane %v2709, 4
      %v2711 = vrot.slane %v2598, 5
      %v2712 = vsel %vm1818, %v2710, %v2711
      %v2713 = vrot.slane %v2711, 4
      %v2714 = vrot.slane %v2599, 5
      %v2715 = vsel %vm1818, %v2713, %v2714
      %v2716 = vrot.slane %v2600, 5
      %v2717 = vrot.slane %v2716, 4
      %v2718 = vrot.slane %v2601, 5
      %v2719 = vsel %vm1818, %v2717, %v2718
      %v2720 = vrot.slane %v2718, 4
      %v2721 = vrot.slane %v2602, 5
      %v2722 = vsel %vm1818, %v2720, %v2721
      %v2723 = vrot.slane %v2603, 5
      %v2724 = vrot.slane %v2723, 4
      %v2725 = vrot.slane %v2604, 5
      %v2726 = vsel %vm1818, %v2724, %v2725
      %v2727 = vrot.slane %v2725, 4
      %v2728 = vrot.slane %v2605, 5
      %v2729 = vsel %vm1818, %v2727, %v2728
      %v2730 = vrot.slane %v2606, 5
      %v2731 = vrot.slane %v2730, 4
      %v2732 = vrot.slane %v2607, 5
      %v2733 = vsel %vm1818, %v2731, %v2732
      %v2734 = vrot.slane %v2732, 4
      %v2735 = vrot.slane %v2608, 5
      %v2736 = vsel %vm1818, %v2734, %v2735
      %v2737 = vrot.slane %v2609, 5
      %v2738 = vrot.slane %v2737, 4
      %v2739 = vrot.slane %v2610, 5
      %v2740 = vsel %vm1818, %v2738, %v2739
      %v2741 = vrot.slane %v2739, 4
      %v2742 = vrot.slane %v2611, 5
      %v2743 = vsel %vm1818, %v2741, %v2742
      %v2744 = vrot.slane %v2612, 5
      %v2745 = vrot.slane %v2744, 4
      %v2746 = vrot.slane %v2613, 5
      %v2747 = vsel %vm1818, %v2745, %v2746
      %v2748 = vrot.slane %v2746, 4
      %v2749 = vrot.slane %v2614, 5
      %v2750 = vsel %vm1818, %v2748, %v2749
      %v2751 = vrot.slane %v2615, 5
      %v2752 = vrot.slane %v2751, 4
      %v2753 = vrot.slane %v2616, 5
      %v2754 = vsel %vm1818, %v2752, %v2753
      %v2755 = vrot.slane %v2753, 4
      %v2756 = vrot.slane %v2617, 5
      %v2757 = vsel %vm1818, %v2755, %v2756
      %v2758 = vrot.slane %v2618, 5
      %v2759 = vrot.slane %v2758, 4
      %v2760 = vrot.slane %v2619, 5
      %v2761 = vsel %vm1818, %v2759, %v2760
      %v2762 = vrot.slane %v2760, 4
      %v2763 = vrot.slane %v2620, 5
      %v2764 = vsel %vm1818, %v2762, %v2763
      %v2765 = vrot.slane %v2621, 5
      %v2766 = vrot.slane %v2765, 4
      %v2767 = vrot.slane %v2622, 5
      %v2768 = vsel %vm1818, %v2766, %v2767
      %v2769 = vrot.slane %v2767, 4
      %v2770 = vrot.slane %v2623, 5
      %v2771 = vsel %vm1818, %v2769, %v2770
      %v2772 = vrot.slane %v2624, 5
      %v2773 = vrot.slane %v2772, 4
      %v2774 = vrot.slane %v2625, 5
      %v2775 = vsel %vm1818, %v2773, %v2774
      %v2776 = vrot.slane %v2774, 4
      %v2777 = vrot.slane %v2626, 5
      %v2778 = vsel %vm1818, %v2776, %v2777
      %v2779 = vrot.slane %v2627, 5
      %v2780 = vrot.slane %v2779, 4
      %v2781 = vrot.slane %v2628, 5
      %v2782 = vsel %vm1818, %v2780, %v2781
      %v2783 = vrot.slane %v2781, 4
      %v2784 = vrot.slane %v2629, 5
      %v2785 = vsel %vm1818, %v2783, %v2784
      %v2786 = vrot.slane %v2630, 5
      %v2787 = vrot.slane %v2786, 4
      %v2788 = vrot.slane %v2631, 5
      %v2789 = vsel %vm1818, %v2787, %v2788
      %v2790 = vrot.slane %v2788, 4
      %v2791 = vrot.slane %v2632, 5
      %v2792 = vsel %vm1818, %v2790, %v2791
      %s2793 = scalar_lea.vmem %s1, 48
      %v2794 = vld [vmem:[%s2793] sm:$0xf]
      %v2795 = vunpack.c.l.b16 %v2684
      %v2796 = vunpack.c.l.b16 %v2687
      %v2797 = vunpack.c.l.b16 %v2691
      %v2798 = vunpack.c.l.b16 %v2694
      %v2799 = vunpack.c.l.b16 %v2698
      %v2800 = vunpack.c.l.b16 %v2701
      %v2801 = vunpack.c.l.b16 %v2705
      %v2802 = vunpack.c.l.b16 %v2708
      %v2803 = vunpack.c.l.b16 %v2712
      %v2804 = vunpack.c.l.b16 %v2715
      %v2805 = vunpack.c.l.b16 %v2719
      %v2806 = vunpack.c.l.b16 %v2722
      %v2807 = vunpack.c.l.b16 %v2726
      %v2808 = vunpack.c.l.b16 %v2729
      %v2809 = vunpack.c.l.b16 %v2733
      %v2810 = vunpack.c.l.b16 %v2736
      %v2811 = vunpack.c.l.b16 %v2740
      %v2812 = vunpack.c.l.b16 %v2743
      %v2813 = vunpack.c.l.b16 %v2747
      %v2814 = vunpack.c.l.b16 %v2750
      %v2815 = vunpack.c.l.b16 %v2754
      %v2816 = vunpack.c.l.b16 %v2757
      %v2817 = vunpack.c.l.b16 %v2761
      %v2818 = vunpack.c.l.b16 %v2764
      %v2819 = vunpack.c.l.b16 %v2768
      %v2820 = vunpack.c.l.b16 %v2771
      %v2821 = vunpack.c.l.b16 %v2775
      %v2822 = vunpack.c.l.b16 %v2778
      %v2823 = vunpack.c.l.b16 %v2782
      %v2824 = vunpack.c.l.b16 %v2785
      %v2825 = vunpack.c.l.b16 %v2789
      %v2826 = vunpack.c.l.b16 %v2792
      %v2827 = vpack.c.b16 %v2796, %v2795
      %v2828 = vpack.c.b16 %v2798, %v2797
      %v2829 = vpack.c.b16 %v2800, %v2799
      %v2830 = vpack.c.b16 %v2802, %v2801
      %v2831 = vpack.c.b16 %v2804, %v2803
      %v2832 = vpack.c.b16 %v2806, %v2805
      %v2833 = vpack.c.b16 %v2808, %v2807
      %v2834 = vpack.c.b16 %v2810, %v2809
      %v2835 = vpack.c.b16 %v2812, %v2811
      %v2836 = vpack.c.b16 %v2814, %v2813
      %v2837 = vpack.c.b16 %v2816, %v2815
      %v2838 = vpack.c.b16 %v2818, %v2817
      %v2839 = vpack.c.b16 %v2820, %v2819
      %v2840 = vpack.c.b16 %v2822, %v2821
      %v2841 = vpack.c.b16 %v2824, %v2823
      %v2842 = vpack.c.b16 %v2826, %v2825
      %v2844 = vsel %vm732, %v2794, 0
      %v2847 = vsel %vm732, %v2827, 0
      %v2850 = vsel %vm732, %v2828, 0
      %v2853 = vsel %vm732, %v2829, 0
      %v2856 = vsel %vm732, %v2830, 0
      %v2859 = vsel %vm732, %v2831, 0
      %v2862 = vsel %vm732, %v2832, 0
      %v2865 = vsel %vm732, %v2833, 0
      %v2868 = vsel %vm732, %v2834, 0
      %v2871 = vsel %vm732, %v2835, 0
      %v2874 = vsel %vm732, %v2836, 0
      %v2877 = vsel %vm732, %v2837, 0
      %v2880 = vsel %vm732, %v2838, 0
      %v2883 = vsel %vm732, %v2839, 0
      %v2886 = vsel %vm732, %v2840, 0
      %v2889 = vsel %vm732, %v2841, 0
      %v2892 = vsel %vm732, %v2842, 0
      %2894 = vmatpush.bf16.xpose.msra.mxu0 %v2868
      %2895 = vmatpush.bf16.xpose.msra.mxu0 %v2865
      %2896 = vmatpush.bf16.xpose.msra.mxu0 %v2862
      %2897 = vmatpush.bf16.xpose.msra.mxu0 %v2859
      %2898 = vmatpush.bf16.xpose.msra.mxu0 %v2856
      %2899 = vmatpush.bf16.xpose.msra.mxu0 %v2853
      %2900 = vmatpush.bf16.xpose.msra.mxu0 %v2850
      %2901 = vmatpush.bf16.xpose.msra.mxu0 %v2847
      %2902 = vmatmul.bf16.gmra.mxu0 %v2844
      %v2903 = vpop.f32.mrf.mxu0
      %v2904 = vadd.f32 0.0, %v2903
      %v2905 = vpop.f32.mrf.mxu0
      %2906 = vdwg.mxu0
      %2907 = vmatpush.bf16.xpose.msra.mxu0 %v2892
      %2908 = vmatpush.bf16.xpose.msra.mxu0 %v2889
      %2909 = vmatpush.bf16.xpose.msra.mxu0 %v2886
      %2910 = vmatpush.bf16.xpose.msra.mxu0 %v2883
      %2911 = vmatpush.bf16.xpose.msra.mxu0 %v2880
      %2912 = vmatpush.bf16.xpose.msra.mxu0 %v2877
      %2913 = vmatpush.bf16.xpose.msra.mxu0 %v2874
      %2914 = vmatpush.bf16.xpose.msra.mxu0 %v2871
      %2915 = vmatmul.bf16.gmra.mxu0 %v2844
      %v2916 = vpop.f32.mrf.mxu0
      %v2917 = vadd.f32 0.0, %v2916
      %v2918 = vpop.f32.mrf.mxu0
      %2919 = vdwg.mxu0
      %v2920 = vadd.f32 %v2569, %v2904
      %v2921 = vadd.f32 %v2582, %v2917
      %v2922 = vld [vmem:[%s200] sm:$0xf]
      %v2923 = vld [vmem:[%s200 + $0xc] sm:$0xf]
      %v2924 = vld [vmem:[%s200 + $0x18] sm:$0xf]
      %v2925 = vld [vmem:[%s200 + $0x24] sm:$0xf]
      %v2926 = vld [vmem:[%s200 + $0x30] sm:$0xf]
      %v2927 = vld [vmem:[%s200 + $0x3c] sm:$0xf]
      %v2928 = vld [vmem:[%s200 + $0x48] sm:$0xf]
      %v2929 = vld [vmem:[%s200 + $0x54] sm:$0xf]
      %v2930 = vld [vmem:[%s200 + $0x60] sm:$0xf]
      %v2931 = vld [vmem:[%s200 + $0x6c] sm:$0xf]
      %v2932 = vld [vmem:[%s200 + $0x78] sm:$0xf]
      %v2933 = vld [vmem:[%s200 + $0x84] sm:$0xf]
      %v2934 = vld [vmem:[%s200 + $0x90] sm:$0xf]
      %v2935 = vld [vmem:[%s200 + $0x9c] sm:$0xf]
      %v2936 = vld [vmem:[%s200 + $0xa8] sm:$0xf]
      %v2937 = vld [vmem:[%s200 + $0xb4] sm:$0xf]
      %v2939 = vshrl.u32 %v2922, 16
      %v2941 = vrot.slane %v2939, 4
      %v2942 = vshll.u32 %v2922, 16
      %v2944 = vrot.slane %v2942, 5
      %v2945 = vor.u32 %v2941, %v2944
      %v2946 = vrot.slane %v2945, 4
      %v2948 = vshll.u32 %v2586, 16
      %v2950 = vrot.slane %v2948, 5
      %v2951 = vsel %vm263, %v2946, %v2950
      %v2952 = vshrl.u32 %v2586, 16
      %v2954 = vrot.slane %v2952, 4
      %v2955 = vor.u32 %v2954, %v2950
      %v2956 = vrot.slane %v2955, 4
      %v2958 = vshll.u32 %v2587, 16
      %v2960 = vrot.slane %v2958, 5
      %v2961 = vsel %vm263, %v2956, %v2960
      %v2963 = vshrl.u32 %v2923, 16
      %v2965 = vrot.slane %v2963, 4
      %v2966 = vshll.u32 %v2923, 16
      %v2968 = vrot.slane %v2966, 5
      %v2969 = vor.u32 %v2965, %v2968
      %v2970 = vrot.slane %v2969, 4
      %v2972 = vshll.u32 %v2589, 16
      %v2974 = vrot.slane %v2972, 5
      %v2975 = vsel %vm263, %v2970, %v2974
      %v2976 = vshrl.u32 %v2589, 16
      %v2978 = vrot.slane %v2976, 4
      %v2979 = vor.u32 %v2978, %v2974
      %v2980 = vrot.slane %v2979, 4
      %v2982 = vshll.u32 %v2590, 16
      %v2984 = vrot.slane %v2982, 5
      %v2985 = vsel %vm263, %v2980, %v2984
      %v2987 = vshrl.u32 %v2924, 16
      %v2989 = vrot.slane %v2987, 4
      %v2990 = vshll.u32 %v2924, 16
      %v2992 = vrot.slane %v2990, 5
      %v2993 = vor.u32 %v2989, %v2992
      %v2994 = vrot.slane %v2993, 4
      %v2996 = vshll.u32 %v2592, 16
      %v2998 = vrot.slane %v2996, 5
      %v2999 = vsel %vm263, %v2994, %v2998
      %v3000 = vshrl.u32 %v2592, 16
      %v3002 = vrot.slane %v3000, 4
      %v3003 = vor.u32 %v3002, %v2998
      %v3004 = vrot.slane %v3003, 4
      %v3006 = vshll.u32 %v2593, 16
      %v3008 = vrot.slane %v3006, 5
      %v3009 = vsel %vm263, %v3004, %v3008
      %v3011 = vshrl.u32 %v2925, 16
      %v3013 = vrot.slane %v3011, 4
      %v3014 = vshll.u32 %v2925, 16
      %v3016 = vrot.slane %v3014, 5
      %v3017 = vor.u32 %v3013, %v3016
      %v3018 = vrot.slane %v3017, 4
      %v3020 = vshll.u32 %v2595, 16
      %v3022 = vrot.slane %v3020, 5
      %v3023 = vsel %vm263, %v3018, %v3022
      %v3024 = vshrl.u32 %v2595, 16
      %v3026 = vrot.slane %v3024, 4
      %v3027 = vor.u32 %v3026, %v3022
      %v3028 = vrot.slane %v3027, 4
      %v3030 = vshll.u32 %v2596, 16
      %v3032 = vrot.slane %v3030, 5
      %v3033 = vsel %vm263, %v3028, %v3032
      %v3035 = vshrl.u32 %v2926, 16
      %v3037 = vrot.slane %v3035, 4
      %v3038 = vshll.u32 %v2926, 16
      %v3040 = vrot.slane %v3038, 5
      %v3041 = vor.u32 %v3037, %v3040
      %v3042 = vrot.slane %v3041, 4
      %v3044 = vshll.u32 %v2598, 16
      %v3046 = vrot.slane %v3044, 5
      %v3047 = vsel %vm263, %v3042, %v3046
      %v3048 = vshrl.u32 %v2598, 16
      %v3050 = vrot.slane %v3048, 4
      %v3051 = vor.u32 %v3050, %v3046
      %v3052 = vrot.slane %v3051, 4
      %v3054 = vshll.u32 %v2599, 16
      %v3056 = vrot.slane %v3054, 5
      %v3057 = vsel %vm263, %v3052, %v3056
      %v3059 = vshrl.u32 %v2927, 16
      %v3061 = vrot.slane %v3059, 4
      %v3062 = vshll.u32 %v2927, 16
      %v3064 = vrot.slane %v3062, 5
      %v3065 = vor.u32 %v3061, %v3064
      %v3066 = vrot.slane %v3065, 4
      %v3068 = vshll.u32 %v2601, 16
      %v3070 = vrot.slane %v3068, 5
      %v3071 = vsel %vm263, %v3066, %v3070
      %v3072 = vshrl.u32 %v2601, 16
      %v3074 = vrot.slane %v3072, 4
      %v3075 = vor.u32 %v3074, %v3070
      %v3076 = vrot.slane %v3075, 4
      %v3078 = vshll.u32 %v2602, 16
      %v3080 = vrot.slane %v3078, 5
      %v3081 = vsel %vm263, %v3076, %v3080
      %v3083 = vshrl.u32 %v2928, 16
      %v3085 = vrot.slane %v3083, 4
      %v3086 = vshll.u32 %v2928, 16
      %v3088 = vrot.slane %v3086, 5
      %v3089 = vor.u32 %v3085, %v3088
      %v3090 = vrot.slane %v3089, 4
      %v3092 = vshll.u32 %v2604, 16
      %v3094 = vrot.slane %v3092, 5
      %v3095 = vsel %vm263, %v3090, %v3094
      %v3096 = vshrl.u32 %v2604, 16
      %v3098 = vrot.slane %v3096, 4
      %v3099 = vor.u32 %v3098, %v3094
      %v3100 = vrot.slane %v3099, 4
      %v3102 = vshll.u32 %v2605, 16
      %v3104 = vrot.slane %v3102, 5
      %v3105 = vsel %vm263, %v3100, %v3104
      %v3107 = vshrl.u32 %v2929, 16
      %v3109 = vrot.slane %v3107, 4
      %v3110 = vshll.u32 %v2929, 16
      %v3112 = vrot.slane %v3110, 5
      %v3113 = vor.u32 %v3109, %v3112
      %v3114 = vrot.slane %v3113, 4
      %v3116 = vshll.u32 %v2607, 16
      %v3118 = vrot.slane %v3116, 5
      %v3119 = vsel %vm263, %v3114, %v3118
      %v3120 = vshrl.u32 %v2607, 16
      %v3122 = vrot.slane %v3120, 4
      %v3123 = vor.u32 %v3122, %v3118
      %v3124 = vrot.slane %v3123, 4
      %v3126 = vshll.u32 %v2608, 16
      %v3128 = vrot.slane %v3126, 5
      %v3129 = vsel %vm263, %v3124, %v3128
      %v3131 = vshrl.u32 %v2930, 16
      %v3133 = vrot.slane %v3131, 4
      %v3134 = vshll.u32 %v2930, 16
      %v3136 = vrot.slane %v3134, 5
      %v3137 = vor.u32 %v3133, %v3136
      %v3138 = vrot.slane %v3137, 4
      %v3140 = vshll.u32 %v2610, 16
      %v3142 = vrot.slane %v3140, 5
      %v3143 = vsel %vm263, %v3138, %v3142
      %v3144 = vshrl.u32 %v2610, 16
      %v3146 = vrot.slane %v3144, 4
      %v3147 = vor.u32 %v3146, %v3142
      %v3148 = vrot.slane %v3147, 4
      %v3150 = vshll.u32 %v2611, 16
      %v3152 = vrot.slane %v3150, 5
      %v3153 = vsel %vm263, %v3148, %v3152
      %v3155 = vshrl.u32 %v2931, 16
      %v3157 = vrot.slane %v3155, 4
      %v3158 = vshll.u32 %v2931, 16
      %v3160 = vrot.slane %v3158, 5
      %v3161 = vor.u32 %v3157, %v3160
      %v3162 = vrot.slane %v3161, 4
      %v3164 = vshll.u32 %v2613, 16
      %v3166 = vrot.slane %v3164, 5
      %v3167 = vsel %vm263, %v3162, %v3166
      %v3168 = vshrl.u32 %v2613, 16
      %v3170 = vrot.slane %v3168, 4
      %v3171 = vor.u32 %v3170, %v3166
      %v3172 = vrot.slane %v3171, 4
      %v3174 = vshll.u32 %v2614, 16
      %v3176 = vrot.slane %v3174, 5
      %v3177 = vsel %vm263, %v3172, %v3176
      %v3179 = vshrl.u32 %v2932, 16
      %v3181 = vrot.slane %v3179, 4
      %v3182 = vshll.u32 %v2932, 16
      %v3184 = vrot.slane %v3182, 5
      %v3185 = vor.u32 %v3181, %v3184
      %v3186 = vrot.slane %v3185, 4
      %v3188 = vshll.u32 %v2616, 16
      %v3190 = vrot.slane %v3188, 5
      %v3191 = vsel %vm263, %v3186, %v3190
      %v3192 = vshrl.u32 %v2616, 16
      %v3194 = vrot.slane %v3192, 4
      %v3195 = vor.u32 %v3194, %v3190
      %v3196 = vrot.slane %v3195, 4
      %v3198 = vshll.u32 %v2617, 16
      %v3200 = vrot.slane %v3198, 5
      %v3201 = vsel %vm263, %v3196, %v3200
      %v3203 = vshrl.u32 %v2933, 16
      %v3205 = vrot.slane %v3203, 4
      %v3206 = vshll.u32 %v2933, 16
      %v3208 = vrot.slane %v3206, 5
      %v3209 = vor.u32 %v3205, %v3208
      %v3210 = vrot.slane %v3209, 4
      %v3212 = vshll.u32 %v2619, 16
      %v3214 = vrot.slane %v3212, 5
      %v3215 = vsel %vm263, %v3210, %v3214
      %v3216 = vshrl.u32 %v2619, 16
      %v3218 = vrot.slane %v3216, 4
      %v3219 = vor.u32 %v3218, %v3214
      %v3220 = vrot.slane %v3219, 4
      %v3222 = vshll.u32 %v2620, 16
      %v3224 = vrot.slane %v3222, 5
      %v3225 = vsel %vm263, %v3220, %v3224
      %v3227 = vshrl.u32 %v2934, 16
      %v3229 = vrot.slane %v3227, 4
      %v3230 = vshll.u32 %v2934, 16
      %v3232 = vrot.slane %v3230, 5
      %v3233 = vor.u32 %v3229, %v3232
      %v3234 = vrot.slane %v3233, 4
      %v3236 = vshll.u32 %v2622, 16
      %v3238 = vrot.slane %v3236, 5
      %v3239 = vsel %vm263, %v3234, %v3238
      %v3240 = vshrl.u32 %v2622, 16
      %v3242 = vrot.slane %v3240, 4
      %v3243 = vor.u32 %v3242, %v3238
      %v3244 = vrot.slane %v3243, 4
      %v3246 = vshll.u32 %v2623, 16
      %v3248 = vrot.slane %v3246, 5
      %v3249 = vsel %vm263, %v3244, %v3248
      %v3251 = vshrl.u32 %v2935, 16
      %v3253 = vrot.slane %v3251, 4
      %v3254 = vshll.u32 %v2935, 16
      %v3256 = vrot.slane %v3254, 5
      %v3257 = vor.u32 %v3253, %v3256
      %v3258 = vrot.slane %v3257, 4
      %v3260 = vshll.u32 %v2625, 16
      %v3262 = vrot.slane %v3260, 5
      %v3263 = vsel %vm263, %v3258, %v3262
      %v3264 = vshrl.u32 %v2625, 16
      %v3266 = vrot.slane %v3264, 4
      %v3267 = vor.u32 %v3266, %v3262
      %v3268 = vrot.slane %v3267, 4
      %v3270 = vshll.u32 %v2626, 16
      %v3272 = vrot.slane %v3270, 5
      %v3273 = vsel %vm263, %v3268, %v3272
      %v3275 = vshrl.u32 %v2936, 16
      %v3277 = vrot.slane %v3275, 4
      %v3278 = vshll.u32 %v2936, 16
      %v3280 = vrot.slane %v3278, 5
      %v3281 = vor.u32 %v3277, %v3280
      %v3282 = vrot.slane %v3281, 4
      %v3284 = vshll.u32 %v2628, 16
      %v3286 = vrot.slane %v3284, 5
      %v3287 = vsel %vm263, %v3282, %v3286
      %v3288 = vshrl.u32 %v2628, 16
      %v3290 = vrot.slane %v3288, 4
      %v3291 = vor.u32 %v3290, %v3286
      %v3292 = vrot.slane %v3291, 4
      %v3294 = vshll.u32 %v2629, 16
      %v3296 = vrot.slane %v3294, 5
      %v3297 = vsel %vm263, %v3292, %v3296
      %v3299 = vshrl.u32 %v2937, 16
      %v3301 = vrot.slane %v3299, 4
      %v3302 = vshll.u32 %v2937, 16
      %v3304 = vrot.slane %v3302, 5
      %v3305 = vor.u32 %v3301, %v3304
      %v3306 = vrot.slane %v3305, 4
      %v3308 = vshll.u32 %v2631, 16
      %v3310 = vrot.slane %v3308, 5
      %v3311 = vsel %vm263, %v3306, %v3310
      %v3312 = vshrl.u32 %v2631, 16
      %v3314 = vrot.slane %v3312, 4
      %v3315 = vor.u32 %v3314, %v3310
      %v3316 = vrot.slane %v3315, 4
      %v3318 = vshll.u32 %v2632, 16
      %v3320 = vrot.slane %v3318, 5
      %v3321 = vsel %vm263, %v3316, %v3320
      %s3322 = scalar_lea.vmem %s1, 56
      %v3323 = vld [vmem:[%s3322] sm:$0xf]
      %v3324 = vunpack.c.l.b16 %v2951
      %v3325 = vunpack.c.l.b16 %v2961
      %v3326 = vunpack.c.l.b16 %v2975
      %v3327 = vunpack.c.l.b16 %v2985
      %v3328 = vunpack.c.l.b16 %v2999
      %v3329 = vunpack.c.l.b16 %v3009
      %v3330 = vunpack.c.l.b16 %v3023
      %v3331 = vunpack.c.l.b16 %v3033
      %v3332 = vunpack.c.l.b16 %v3047
      %v3333 = vunpack.c.l.b16 %v3057
      %v3334 = vunpack.c.l.b16 %v3071
      %v3335 = vunpack.c.l.b16 %v3081
      %v3336 = vunpack.c.l.b16 %v3095
      %v3337 = vunpack.c.l.b16 %v3105
      %v3338 = vunpack.c.l.b16 %v3119
      %v3339 = vunpack.c.l.b16 %v3129
      %v3340 = vunpack.c.l.b16 %v3143
      %v3341 = vunpack.c.l.b16 %v3153
      %v3342 = vunpack.c.l.b16 %v3167
      %v3343 = vunpack.c.l.b16 %v3177
      %v3344 = vunpack.c.l.b16 %v3191
      %v3345 = vunpack.c.l.b16 %v3201
      %v3346 = vunpack.c.l.b16 %v3215
      %v3347 = vunpack.c.l.b16 %v3225
      %v3348 = vunpack.c.l.b16 %v3239
      %v3349 = vunpack.c.l.b16 %v3249
      %v3350 = vunpack.c.l.b16 %v3263
      %v3351 = vunpack.c.l.b16 %v3273
      %v3352 = vunpack.c.l.b16 %v3287
      %v3353 = vunpack.c.l.b16 %v3297
      %v3354 = vunpack.c.l.b16 %v3311
      %v3355 = vunpack.c.l.b16 %v3321
      %v3356 = vpack.c.b16 %v3325, %v3324
      %v3357 = vpack.c.b16 %v3327, %v3326
      %v3358 = vpack.c.b16 %v3329, %v3328
      %v3359 = vpack.c.b16 %v3331, %v3330
      %v3360 = vpack.c.b16 %v3333, %v3332
      %v3361 = vpack.c.b16 %v3335, %v3334
      %v3362 = vpack.c.b16 %v3337, %v3336
      %v3363 = vpack.c.b16 %v3339, %v3338
      %v3364 = vpack.c.b16 %v3341, %v3340
      %v3365 = vpack.c.b16 %v3343, %v3342
      %v3366 = vpack.c.b16 %v3345, %v3344
      %v3367 = vpack.c.b16 %v3347, %v3346
      %v3368 = vpack.c.b16 %v3349, %v3348
      %v3369 = vpack.c.b16 %v3351, %v3350
      %v3370 = vpack.c.b16 %v3353, %v3352
      %v3371 = vpack.c.b16 %v3355, %v3354
      %v3373 = vsel %vm732, %v3323, 0
      %v3376 = vsel %vm732, %v3356, 0
      %v3379 = vsel %vm732, %v3357, 0
      %v3382 = vsel %vm732, %v3358, 0
      %v3385 = vsel %vm732, %v3359, 0
      %v3388 = vsel %vm732, %v3360, 0
      %v3391 = vsel %vm732, %v3361, 0
      %v3394 = vsel %vm732, %v3362, 0
      %v3397 = vsel %vm732, %v3363, 0
      %v3400 = vsel %vm732, %v3364, 0
      %v3403 = vsel %vm732, %v3365, 0
      %v3406 = vsel %vm732, %v3366, 0
      %v3409 = vsel %vm732, %v3367, 0
      %v3412 = vsel %vm732, %v3368, 0
      %v3415 = vsel %vm732, %v3369, 0
      %v3418 = vsel %vm732, %v3370, 0
      %v3421 = vsel %vm732, %v3371, 0
      %3423 = vmatpush.bf16.xpose.msra.mxu0 %v3397
      %3424 = vmatpush.bf16.xpose.msra.mxu0 %v3394
      %3425 = vmatpush.bf16.xpose.msra.mxu0 %v3391
      %3426 = vmatpush.bf16.xpose.msra.mxu0 %v3388
      %3427 = vmatpush.bf16.xpose.msra.mxu0 %v3385
      %3428 = vmatpush.bf16.xpose.msra.mxu0 %v3382
      %3429 = vmatpush.bf16.xpose.msra.mxu0 %v3379
      %3430 = vmatpush.bf16.xpose.msra.mxu0 %v3376
      %3431 = vmatmul.bf16.gmra.mxu0 %v3373
      %v3432 = vpop.f32.mrf.mxu0
      %v3433 = vadd.f32 0.0, %v3432
      %v3434 = vpop.f32.mrf.mxu0
      %3435 = vdwg.mxu0
      %3436 = vmatpush.bf16.xpose.msra.mxu0 %v3421
      %3437 = vmatpush.bf16.xpose.msra.mxu0 %v3418
      %3438 = vmatpush.bf16.xpose.msra.mxu0 %v3415
      %3439 = vmatpush.bf16.xpose.msra.mxu0 %v3412
      %3440 = vmatpush.bf16.xpose.msra.mxu0 %v3409
      %3441 = vmatpush.bf16.xpose.msra.mxu0 %v3406
      %3442 = vmatpush.bf16.xpose.msra.mxu0 %v3403
      %3443 = vmatpush.bf16.xpose.msra.mxu0 %v3400
      %3444 = vmatmul.bf16.gmra.mxu0 %v3373
      %v3445 = vpop.f32.mrf.mxu0
      %v3446 = vadd.f32 0.0, %v3445
      %v3447 = vpop.f32.mrf.mxu0
      %3448 = vdwg.mxu0
      %v3449 = vadd.f32 %v2920, %v3433
      %v3450 = vadd.f32 %v2921, %v3446
      %v3451 = vadd.f32 %v3449, %v1692
      %v3452 = vadd.f32 %v3450, %v1692
      %v3453 = vadd.f32 %v3451, %v3452
      %3454 = vadd.xlane.f32.xlu0 %v3453
      %v3455 = vpop.xlane.xlu0 %3454
      %v3456 = vmul.f32 %v3455, %v1705
      %v3457 = vsub.f32 %v3451, %v3456
      %v3458 = vsub.f32 %v3452, %v3456
      %v3459 = vmul.f32 %v3457, %v3457
      %v3460 = vmul.f32 %v3458, %v3458
      %v3461 = vadd.f32 %v3459, %v3460
      %3462 = vadd.xlane.f32.xlu0 %v3461
      %v3463 = vpop.xlane.xlu0 %3462
      %v3464 = vsel %vm1714, %v3456, %v3463
      %s3465 = scalar_lea.vmem %s210, 8
      %3466 = vst.msk [vmem:[%s3465] sm:$0xff] %vm1716, %v3464
      %v3467 = vpack.c.bf16 %v3452, %v3451
      %s3468 = scalar_lea.vmem %s205, 8
      %3469 = vst [vmem:[%s3468] sm:$0xff] %v3467
      %s3470 = scalar_lea.vmem %s200, 24
      %v3471 = vld [vmem:[%s3470] sm:$0xf]
      %v3472 = vld [vmem:[%s3470 + $0x4] sm:$0xf]
      %v3473 = vld [vmem:[%s3470 + $0x8] sm:$0x1]
      %v3474 = vld [vmem:[%s3470 + $0xc] sm:$0xf]
      %v3475 = vld [vmem:[%s3470 + $0x10] sm:$0xf]
      %v3476 = vld [vmem:[%s3470 + $0x14] sm:$0x1]
      %v3477 = vld [vmem:[%s3470 + $0x18] sm:$0xf]
      %v3478 = vld [vmem:[%s3470 + $0x1c] sm:$0xf]
      %v3479 = vld [vmem:[%s3470 + $0x20] sm:$0x1]
      %v3480 = vld [vmem:[%s3470 + $0x24] sm:$0xf]
      %v3481 = vld [vmem:[%s3470 + $0x28] sm:$0xf]
      %v3482 = vld [vmem:[%s3470 + $0x2c] sm:$0x1]
      %v3483 = vld [vmem:[%s3470 + $0x30] sm:$0xf]
      %v3484 = vld [vmem:[%s3470 + $0x34] sm:$0xf]
      %v3485 = vld [vmem:[%s3470 + $0x38] sm:$0x1]
      %v3486 = vld [vmem:[%s3470 + $0x3c] sm:$0xf]
      %v3487 = vld [vmem:[%s3470 + $0x40] sm:$0xf]
      %v3488 = vld [vmem:[%s3470 + $0x44] sm:$0x1]
      %v3489 = vld [vmem:[%s3470 + $0x48] sm:$0xf]
      %v3490 = vld [vmem:[%s3470 + $0x4c] sm:$0xf]
      %v3491 = vld [vmem:[%s3470 + $0x50] sm:$0x1]
      %v3492 = vld [vmem:[%s3470 + $0x54] sm:$0xf]
      %v3493 = vld [vmem:[%s3470 + $0x58] sm:$0xf]
      %v3494 = vld [vmem:[%s3470 + $0x5c] sm:$0x1]
      %v3495 = vld [vmem:[%s3470 + $0x60] sm:$0xf]
      %v3496 = vld [vmem:[%s3470 + $0x64] sm:$0xf]
      %v3497 = vld [vmem:[%s3470 + $0x68] sm:$0x1]
      %v3498 = vld [vmem:[%s3470 + $0x6c] sm:$0xf]
      %v3499 = vld [vmem:[%s3470 + $0x70] sm:$0xf]
      %v3500 = vld [vmem:[%s3470 + $0x74] sm:$0x1]
      %v3501 = vld [vmem:[%s3470 + $0x78] sm:$0xf]
      %v3502 = vld [vmem:[%s3470 + $0x7c] sm:$0xf]
      %v3503 = vld [vmem:[%s3470 + $0x80] sm:$0x1]
      %v3504 = vld [vmem:[%s3470 + $0x84] sm:$0xf]
      %v3505 = vld [vmem:[%s3470 + $0x88] sm:$0xf]
      %v3506 = vld [vmem:[%s3470 + $0x8c] sm:$0x1]
      %v3507 = vld [vmem:[%s3470 + $0x90] sm:$0xf]
      %v3508 = vld [vmem:[%s3470 + $0x94] sm:$0xf]
      %v3509 = vld [vmem:[%s3470 + $0x98] sm:$0x1]
      %v3510 = vld [vmem:[%s3470 + $0x9c] sm:$0xf]
      %v3511 = vld [vmem:[%s3470 + $0xa0] sm:$0xf]
      %v3512 = vld [vmem:[%s3470 + $0xa4] sm:$0x1]
      %v3513 = vld [vmem:[%s3470 + $0xa8] sm:$0xf]
      %v3514 = vld [vmem:[%s3470 + $0xac] sm:$0xf]
      %v3515 = vld [vmem:[%s3470 + $0xb0] sm:$0x1]
      %v3516 = vld [vmem:[%s3470 + $0xb4] sm:$0xf]
      %v3517 = vld [vmem:[%s3470 + $0xb8] sm:$0xf]
      %v3518 = vld [vmem:[%s3470 + $0xbc] sm:$0x1]
      %v3520 = vshrl.u32 %v3471, 16
      %v3522 = vrot.slane %v3520, 4
      %v3523 = vshll.u32 %v3471, 16
      %v3525 = vrot.slane %v3523, 5
      %v3526 = vor.u32 %v3522, %v3525
      %v3527 = vrot.slane %v3526, 4
      %v3529 = vshll.u32 %v3472, 16
      %v3531 = vrot.slane %v3529, 5
      %v3532 = vsel %vm263, %v3527, %v3531
      %v3533 = vshrl.u32 %v3472, 16
      %v3535 = vrot.slane %v3533, 4
      %v3536 = vor.u32 %v3535, %v3531
      %v3537 = vrot.slane %v3536, 4
      %v3539 = vshll.u32 %v3473, 16
      %v3541 = vrot.slane %v3539, 5
      %v3542 = vsel %vm263, %v3537, %v3541
      %v3544 = vshrl.u32 %v3474, 16
      %v3546 = vrot.slane %v3544, 4
      %v3547 = vshll.u32 %v3474, 16
      %v3549 = vrot.slane %v3547, 5
      %v3550 = vor.u32 %v3546, %v3549
      %v3551 = vrot.slane %v3550, 4
      %v3553 = vshll.u32 %v3475, 16
      %v3555 = vrot.slane %v3553, 5
      %v3556 = vsel %vm263, %v3551, %v3555
      %v3557 = vshrl.u32 %v3475, 16
      %v3559 = vrot.slane %v3557, 4
      %v3560 = vor.u32 %v3559, %v3555
      %v3561 = vrot.slane %v3560, 4
      %v3563 = vshll.u32 %v3476, 16
      %v3565 = vrot.slane %v3563, 5
      %v3566 = vsel %vm263, %v3561, %v3565
      %v3568 = vshrl.u32 %v3477, 16
      %v3570 = vrot.slane %v3568, 4
      %v3571 = vshll.u32 %v3477, 16
      %v3573 = vrot.slane %v3571, 5
      %v3574 = vor.u32 %v3570, %v3573
      %v3575 = vrot.slane %v3574, 4
      %v3577 = vshll.u32 %v3478, 16
      %v3579 = vrot.slane %v3577, 5
      %v3580 = vsel %vm263, %v3575, %v3579
      %v3581 = vshrl.u32 %v3478, 16
      %v3583 = vrot.slane %v3581, 4
      %v3584 = vor.u32 %v3583, %v3579
      %v3585 = vrot.slane %v3584, 4
      %v3587 = vshll.u32 %v3479, 16
      %v3589 = vrot.slane %v3587, 5
      %v3590 = vsel %vm263, %v3585, %v3589
      %v3592 = vshrl.u32 %v3480, 16
      %v3594 = vrot.slane %v3592, 4
      %v3595 = vshll.u32 %v3480, 16
      %v3597 = vrot.slane %v3595, 5
      %v3598 = vor.u32 %v3594, %v3597
      %v3599 = vrot.slane %v3598, 4
      %v3601 = vshll.u32 %v3481, 16
      %v3603 = vrot.slane %v3601, 5
      %v3604 = vsel %vm263, %v3599, %v3603
      %v3605 = vshrl.u32 %v3481, 16
      %v3607 = vrot.slane %v3605, 4
      %v3608 = vor.u32 %v3607, %v3603
      %v3609 = vrot.slane %v3608, 4
      %v3611 = vshll.u32 %v3482, 16
      %v3613 = vrot.slane %v3611, 5
      %v3614 = vsel %vm263, %v3609, %v3613
      %v3616 = vshrl.u32 %v3483, 16
      %v3618 = vrot.slane %v3616, 4
      %v3619 = vshll.u32 %v3483, 16
      %v3621 = vrot.slane %v3619, 5
      %v3622 = vor.u32 %v3618, %v3621
      %v3623 = vrot.slane %v3622, 4
      %v3625 = vshll.u32 %v3484, 16
      %v3627 = vrot.slane %v3625, 5
      %v3628 = vsel %vm263, %v3623, %v3627
      %v3629 = vshrl.u32 %v3484, 16
      %v3631 = vrot.slane %v3629, 4
      %v3632 = vor.u32 %v3631, %v3627
      %v3633 = vrot.slane %v3632, 4
      %v3635 = vshll.u32 %v3485, 16
      %v3637 = vrot.slane %v3635, 5
      %v3638 = vsel %vm263, %v3633, %v3637
      %v3640 = vshrl.u32 %v3486, 16
      %v3642 = vrot.slane %v3640, 4
      %v3643 = vshll.u32 %v3486, 16
      %v3645 = vrot.slane %v3643, 5
      %v3646 = vor.u32 %v3642, %v3645
      %v3647 = vrot.slane %v3646, 4
      %v3649 = vshll.u32 %v3487, 16
      %v3651 = vrot.slane %v3649, 5
      %v3652 = vsel %vm263, %v3647, %v3651
      %v3653 = vshrl.u32 %v3487, 16
      %v3655 = vrot.slane %v3653, 4
      %v3656 = vor.u32 %v3655, %v3651
      %v3657 = vrot.slane %v3656, 4
      %v3659 = vshll.u32 %v3488, 16
      %v3661 = vrot.slane %v3659, 5
      %v3662 = vsel %vm263, %v3657, %v3661
      %v3664 = vshrl.u32 %v3489, 16
      %v3666 = vrot.slane %v3664, 4
      %v3667 = vshll.u32 %v3489, 16
      %v3669 = vrot.slane %v3667, 5
      %v3670 = vor.u32 %v3666, %v3669
      %v3671 = vrot.slane %v3670, 4
      %v3673 = vshll.u32 %v3490, 16
      %v3675 = vrot.slane %v3673, 5
      %v3676 = vsel %vm263, %v3671, %v3675
      %v3677 = vshrl.u32 %v3490, 16
      %v3679 = vrot.slane %v3677, 4
      %v3680 = vor.u32 %v3679, %v3675
      %v3681 = vrot.slane %v3680, 4
      %v3683 = vshll.u32 %v3491, 16
      %v3685 = vrot.slane %v3683, 5
      %v3686 = vsel %vm263, %v3681, %v3685
      %v3688 = vshrl.u32 %v3492, 16
      %v3690 = vrot.slane %v3688, 4
      %v3691 = vshll.u32 %v3492, 16
      %v3693 = vrot.slane %v3691, 5
      %v3694 = vor.u32 %v3690, %v3693
      %v3695 = vrot.slane %v3694, 4
      %v3697 = vshll.u32 %v3493, 16
      %v3699 = vrot.slane %v3697, 5
      %v3700 = vsel %vm263, %v3695, %v3699
      %v3701 = vshrl.u32 %v3493, 16
      %v3703 = vrot.slane %v3701, 4
      %v3704 = vor.u32 %v3703, %v3699
      %v3705 = vrot.slane %v3704, 4
      %v3707 = vshll.u32 %v3494, 16
      %v3709 = vrot.slane %v3707, 5
      %v3710 = vsel %vm263, %v3705, %v3709
      %v3712 = vshrl.u32 %v3495, 16
      %v3714 = vrot.slane %v3712, 4
      %v3715 = vshll.u32 %v3495, 16
      %v3717 = vrot.slane %v3715, 5
      %v3718 = vor.u32 %v3714, %v3717
      %v3719 = vrot.slane %v3718, 4
      %v3721 = vshll.u32 %v3496, 16
      %v3723 = vrot.slane %v3721, 5
      %v3724 = vsel %vm263, %v3719, %v3723
      %v3725 = vshrl.u32 %v3496, 16
      %v3727 = vrot.slane %v3725, 4
      %v3728 = vor.u32 %v3727, %v3723
      %v3729 = vrot.slane %v3728, 4
      %v3731 = vshll.u32 %v3497, 16
      %v3733 = vrot.slane %v3731, 5
      %v3734 = vsel %vm263, %v3729, %v3733
      %v3736 = vshrl.u32 %v3498, 16
      %v3738 = vrot.slane %v3736, 4
      %v3739 = vshll.u32 %v3498, 16
      %v3741 = vrot.slane %v3739, 5
      %v3742 = vor.u32 %v3738, %v3741
      %v3743 = vrot.slane %v3742, 4
      %v3745 = vshll.u32 %v3499, 16
      %v3747 = vrot.slane %v3745, 5
      %v3748 = vsel %vm263, %v3743, %v3747
      %v3749 = vshrl.u32 %v3499, 16
      %v3751 = vrot.slane %v3749, 4
      %v3752 = vor.u32 %v3751, %v3747
      %v3753 = vrot.slane %v3752, 4
      %v3755 = vshll.u32 %v3500, 16
      %v3757 = vrot.slane %v3755, 5
      %v3758 = vsel %vm263, %v3753, %v3757
      %v3760 = vshrl.u32 %v3501, 16
      %v3762 = vrot.slane %v3760, 4
      %v3763 = vshll.u32 %v3501, 16
      %v3765 = vrot.slane %v3763, 5
      %v3766 = vor.u32 %v3762, %v3765
      %v3767 = vrot.slane %v3766, 4
      %v3769 = vshll.u32 %v3502, 16
      %v3771 = vrot.slane %v3769, 5
      %v3772 = vsel %vm263, %v3767, %v3771
      %v3773 = vshrl.u32 %v3502, 16
      %v3775 = vrot.slane %v3773, 4
      %v3776 = vor.u32 %v3775, %v3771
      %v3777 = vrot.slane %v3776, 4
      %v3779 = vshll.u32 %v3503, 16
      %v3781 = vrot.slane %v3779, 5
      %v3782 = vsel %vm263, %v3777, %v3781
      %v3784 = vshrl.u32 %v3504, 16
      %v3786 = vrot.slane %v3784, 4
      %v3787 = vshll.u32 %v3504, 16
      %v3789 = vrot.slane %v3787, 5
      %v3790 = vor.u32 %v3786, %v3789
      %v3791 = vrot.slane %v3790, 4
      %v3793 = vshll.u32 %v3505, 16
      %v3795 = vrot.slane %v3793, 5
      %v3796 = vsel %vm263, %v3791, %v3795
      %v3797 = vshrl.u32 %v3505, 16
      %v3799 = vrot.slane %v3797, 4
      %v3800 = vor.u32 %v3799, %v3795
      %v3801 = vrot.slane %v3800, 4
      %v3803 = vshll.u32 %v3506, 16
      %v3805 = vrot.slane %v3803, 5
      %v3806 = vsel %vm263, %v3801, %v3805
      %v3808 = vshrl.u32 %v3507, 16
      %v3810 = vrot.slane %v3808, 4
      %v3811 = vshll.u32 %v3507, 16
      %v3813 = vrot.slane %v3811, 5
      %v3814 = vor.u32 %v3810, %v3813
      %v3815 = vrot.slane %v3814, 4
      %v3817 = vshll.u32 %v3508, 16
      %v3819 = vrot.slane %v3817, 5
      %v3820 = vsel %vm263, %v3815, %v3819
      %v3821 = vshrl.u32 %v3508, 16
      %v3823 = vrot.slane %v3821, 4
      %v3824 = vor.u32 %v3823, %v3819
      %v3825 = vrot.slane %v3824, 4
      %v3827 = vshll.u32 %v3509, 16
      %v3829 = vrot.slane %v3827, 5
      %v3830 = vsel %vm263, %v3825, %v3829
      %v3832 = vshrl.u32 %v3510, 16
      %v3834 = vrot.slane %v3832, 4
      %v3835 = vshll.u32 %v3510, 16
      %v3837 = vrot.slane %v3835, 5
      %v3838 = vor.u32 %v3834, %v3837
      %v3839 = vrot.slane %v3838, 4
      %v3841 = vshll.u32 %v3511, 16
      %v3843 = vrot.slane %v3841, 5
      %v3844 = vsel %vm263, %v3839, %v3843
      %v3845 = vshrl.u32 %v3511, 16
      %v3847 = vrot.slane %v3845, 4
      %v3848 = vor.u32 %v3847, %v3843
      %v3849 = vrot.slane %v3848, 4
      %v3851 = vshll.u32 %v3512, 16
      %v3853 = vrot.slane %v3851, 5
      %v3854 = vsel %vm263, %v3849, %v3853
      %v3856 = vshrl.u32 %v3513, 16
      %v3858 = vrot.slane %v3856, 4
      %v3859 = vshll.u32 %v3513, 16
      %v3861 = vrot.slane %v3859, 5
      %v3862 = vor.u32 %v3858, %v3861
      %v3863 = vrot.slane %v3862, 4
      %v3865 = vshll.u32 %v3514, 16
      %v3867 = vrot.slane %v3865, 5
      %v3868 = vsel %vm263, %v3863, %v3867
      %v3869 = vshrl.u32 %v3514, 16
      %v3871 = vrot.slane %v3869, 4
      %v3872 = vor.u32 %v3871, %v3867
      %v3873 = vrot.slane %v3872, 4
      %v3875 = vshll.u32 %v3515, 16
      %v3877 = vrot.slane %v3875, 5
      %v3878 = vsel %vm263, %v3873, %v3877
      %v3880 = vshrl.u32 %v3516, 16
      %v3882 = vrot.slane %v3880, 4
      %v3883 = vshll.u32 %v3516, 16
      %v3885 = vrot.slane %v3883, 5
      %v3886 = vor.u32 %v3882, %v3885
      %v3887 = vrot.slane %v3886, 4
      %v3889 = vshll.u32 %v3517, 16
      %v3891 = vrot.slane %v3889, 5
      %v3892 = vsel %vm263, %v3887, %v3891
      %v3893 = vshrl.u32 %v3517, 16
      %v3895 = vrot.slane %v3893, 4
      %v3896 = vor.u32 %v3895, %v3891
      %v3897 = vrot.slane %v3896, 4
      %v3899 = vshll.u32 %v3518, 16
      %v3901 = vrot.slane %v3899, 5
      %v3902 = vsel %vm263, %v3897, %v3901
      %s3903 = scalar_lea.vmem %s1, 4
      %v3904 = vld [vmem:[%s3903] sm:$0xf]
      %s3905 = scalar_lea.vmem %s1, 12
      %v3906 = vld [vmem:[%s3905] sm:$0xf]
      %v3939 = vunpack.c.l.b16 %v3471
      %v3940 = vunpack.c.l.b16 %v3472
      %v3941 = vunpack.c.l.b16 %v3474
      %v3942 = vunpack.c.l.b16 %v3475
      %v3943 = vunpack.c.l.b16 %v3477
      %v3944 = vunpack.c.l.b16 %v3478
      %v3945 = vunpack.c.l.b16 %v3480
      %v3946 = vunpack.c.l.b16 %v3481
      %v3947 = vunpack.c.l.b16 %v3483
      %v3948 = vunpack.c.l.b16 %v3484
      %v3949 = vunpack.c.l.b16 %v3486
      %v3950 = vunpack.c.l.b16 %v3487
      %v3951 = vunpack.c.l.b16 %v3489
      %v3952 = vunpack.c.l.b16 %v3490
      %v3953 = vunpack.c.l.b16 %v3492
      %v3954 = vunpack.c.l.b16 %v3493
      %v3955 = vunpack.c.l.b16 %v3495
      %v3956 = vunpack.c.l.b16 %v3496
      %v3957 = vunpack.c.l.b16 %v3498
      %v3958 = vunpack.c.l.b16 %v3499
      %v3959 = vunpack.c.l.b16 %v3501
      %v3960 = vunpack.c.l.b16 %v3502
      %v3961 = vunpack.c.l.b16 %v3504
      %v3962 = vunpack.c.l.b16 %v3505
      %v3963 = vunpack.c.l.b16 %v3507
      %v3964 = vunpack.c.l.b16 %v3508
      %v3965 = vunpack.c.l.b16 %v3510
      %v3966 = vunpack.c.l.b16 %v3511
      %v3967 = vunpack.c.l.b16 %v3513
      %v3968 = vunpack.c.l.b16 %v3514
      %v3969 = vunpack.c.l.b16 %v3516
      %v3970 = vunpack.c.l.b16 %v3517
      %v3971 = vpack.c.b16 %v3940, %v3939
      %v3972 = vpack.c.b16 %v3942, %v3941
      %v3973 = vpack.c.b16 %v3944, %v3943
      %v3974 = vpack.c.b16 %v3946, %v3945
      %v3975 = vpack.c.b16 %v3948, %v3947
      %v3976 = vpack.c.b16 %v3950, %v3949
      %v3977 = vpack.c.b16 %v3952, %v3951
      %v3978 = vpack.c.b16 %v3954, %v3953
      %v3979 = vpack.c.b16 %v3956, %v3955
      %v3980 = vpack.c.b16 %v3958, %v3957
      %v3981 = vpack.c.b16 %v3960, %v3959
      %v3982 = vpack.c.b16 %v3962, %v3961
      %v3983 = vpack.c.b16 %v3964, %v3963
      %v3984 = vpack.c.b16 %v3966, %v3965
      %v3985 = vpack.c.b16 %v3968, %v3967
      %v3986 = vpack.c.b16 %v3970, %v3969
      %v3988 = vsel %vm732, %v3906, 0
      %v3991 = vsel %vm732, %v3971, 0
      %v3994 = vsel %vm732, %v3972, 0
      %v3997 = vsel %vm732, %v3973, 0
      %v4000 = vsel %vm732, %v3974, 0
      %v4003 = vsel %vm732, %v3975, 0
      %v4006 = vsel %vm732, %v3976, 0
      %v4009 = vsel %vm732, %v3977, 0
      %v4012 = vsel %vm732, %v3978, 0
      %v4015 = vsel %vm732, %v3979, 0
      %v4018 = vsel %vm732, %v3980, 0
      %v4021 = vsel %vm732, %v3981, 0
      %v4024 = vsel %vm732, %v3982, 0
      %v4027 = vsel %vm732, %v3983, 0
      %v4030 = vsel %vm732, %v3984, 0
      %v4033 = vsel %vm732, %v3985, 0
      %v4036 = vsel %vm732, %v3986, 0
      %4038 = vmatpush.bf16.xpose.msra.mxu0 %v4012
      %4039 = vmatpush.bf16.xpose.msra.mxu0 %v4009
      %4040 = vmatpush.bf16.xpose.msra.mxu0 %v4006
      %4041 = vmatpush.bf16.xpose.msra.mxu0 %v4003
      %4042 = vmatpush.bf16.xpose.msra.mxu0 %v4000
      %4043 = vmatpush.bf16.xpose.msra.mxu0 %v3997
      %4044 = vmatpush.bf16.xpose.msra.mxu0 %v3994
      %4045 = vmatpush.bf16.xpose.msra.mxu0 %v3991
      %4046 = vmatmul.bf16.gmra.mxu0 %v3988
      %v4047 = vpop.f32.mrf.mxu0
      %v4048 = vadd.f32 0.0, %v4047
      %v4049 = vpop.f32.mrf.mxu0
      %4050 = vdwg.mxu0
      %4051 = vmatpush.bf16.xpose.msra.mxu0 %v4036
      %4052 = vmatpush.bf16.xpose.msra.mxu0 %v4033
      %4053 = vmatpush.bf16.xpose.msra.mxu0 %v4030
      %4054 = vmatpush.bf16.xpose.msra.mxu0 %v4027
      %4055 = vmatpush.bf16.xpose.msra.mxu0 %v4024
      %4056 = vmatpush.bf16.xpose.msra.mxu0 %v4021
      %4057 = vmatpush.bf16.xpose.msra.mxu0 %v4018
      %4058 = vmatpush.bf16.xpose.msra.mxu0 %v4015
      %4059 = vmatmul.bf16.gmra.mxu0 %v3988
      %v4060 = vpop.f32.mrf.mxu0
      %v4061 = vadd.f32 0.0, %v4060
      %v4062 = vpop.f32.mrf.mxu0
      %4063 = vdwg.mxu0
      %v4064 = vunpack.c.l.b16 %v3532
      %v4065 = vunpack.c.l.b16 %v3542
      %v4066 = vunpack.c.l.b16 %v3556
      %v4067 = vunpack.c.l.b16 %v3566
      %v4068 = vunpack.c.l.b16 %v3580
      %v4069 = vunpack.c.l.b16 %v3590
      %v4070 = vunpack.c.l.b16 %v3604
      %v4071 = vunpack.c.l.b16 %v3614
      %v4072 = vunpack.c.l.b16 %v3628
      %v4073 = vunpack.c.l.b16 %v3638
      %v4074 = vunpack.c.l.b16 %v3652
      %v4075 = vunpack.c.l.b16 %v3662
      %v4076 = vunpack.c.l.b16 %v3676
      %v4077 = vunpack.c.l.b16 %v3686
      %v4078 = vunpack.c.l.b16 %v3700
      %v4079 = vunpack.c.l.b16 %v3710
      %v4080 = vunpack.c.l.b16 %v3724
      %v4081 = vunpack.c.l.b16 %v3734
      %v4082 = vunpack.c.l.b16 %v3748
      %v4083 = vunpack.c.l.b16 %v3758
      %v4084 = vunpack.c.l.b16 %v3772
      %v4085 = vunpack.c.l.b16 %v3782
      %v4086 = vunpack.c.l.b16 %v3796
      %v4087 = vunpack.c.l.b16 %v3806
      %v4088 = vunpack.c.l.b16 %v3820
      %v4089 = vunpack.c.l.b16 %v3830
      %v4090 = vunpack.c.l.b16 %v3844
      %v4091 = vunpack.c.l.b16 %v3854
      %v4092 = vunpack.c.l.b16 %v3868
      %v4093 = vunpack.c.l.b16 %v3878
      %v4094 = vunpack.c.l.b16 %v3892
      %v4095 = vunpack.c.l.b16 %v3902
      %v4096 = vpack.c.b16 %v4065, %v4064
      %v4097 = vpack.c.b16 %v4067, %v4066
      %v4098 = vpack.c.b16 %v4069, %v4068
      %v4099 = vpack.c.b16 %v4071, %v4070
      %v4100 = vpack.c.b16 %v4073, %v4072
      %v4101 = vpack.c.b16 %v4075, %v4074
      %v4102 = vpack.c.b16 %v4077, %v4076
      %v4103 = vpack.c.b16 %v4079, %v4078
      %v4104 = vpack.c.b16 %v4081, %v4080
      %v4105 = vpack.c.b16 %v4083, %v4082
      %v4106 = vpack.c.b16 %v4085, %v4084
      %v4107 = vpack.c.b16 %v4087, %v4086
      %v4108 = vpack.c.b16 %v4089, %v4088
      %v4109 = vpack.c.b16 %v4091, %v4090
      %v4110 = vpack.c.b16 %v4093, %v4092
      %v4111 = vpack.c.b16 %v4095, %v4094
      %v4113 = vsel %vm732, %v3904, 0
      %v4116 = vsel %vm732, %v4096, 0
      %v4119 = vsel %vm732, %v4097, 0
      %v4122 = vsel %vm732, %v4098, 0
      %v4125 = vsel %vm732, %v4099, 0
      %v4128 = vsel %vm732, %v4100, 0
      %v4131 = vsel %vm732, %v4101, 0
      %v4134 = vsel %vm732, %v4102, 0
      %v4137 = vsel %vm732, %v4103, 0
      %v4140 = vsel %vm732, %v4104, 0
      %v4143 = vsel %vm732, %v4105, 0
      %v4146 = vsel %vm732, %v4106, 0
      %v4149 = vsel %vm732, %v4107, 0
      %v4152 = vsel %vm732, %v4108, 0
      %v4155 = vsel %vm732, %v4109, 0
      %v4158 = vsel %vm732, %v4110, 0
      %v4161 = vsel %vm732, %v4111, 0
      %4163 = vmatpush.bf16.xpose.msra.mxu0 %v4137
      %4164 = vmatpush.bf16.xpose.msra.mxu0 %v4134
      %4165 = vmatpush.bf16.xpose.msra.mxu0 %v4131
      %4166 = vmatpush.bf16.xpose.msra.mxu0 %v4128
      %4167 = vmatpush.bf16.xpose.msra.mxu0 %v4125
      %4168 = vmatpush.bf16.xpose.msra.mxu0 %v4122
      %4169 = vmatpush.bf16.xpose.msra.mxu0 %v4119
      %4170 = vmatpush.bf16.xpose.msra.mxu0 %v4116
      %4171 = vmatmul.bf16.gmra.mxu0 %v4113
      %v4172 = vpop.f32.mrf.mxu0
      %v4173 = vadd.f32 %v4048, %v4172
      %v4174 = vpop.f32.mrf.mxu0
      %4175 = vdwg.mxu0
      %4176 = vmatpush.bf16.xpose.msra.mxu0 %v4161
      %4177 = vmatpush.bf16.xpose.msra.mxu0 %v4158
      %4178 = vmatpush.bf16.xpose.msra.mxu0 %v4155
      %4179 = vmatpush.bf16.xpose.msra.mxu0 %v4152
      %4180 = vmatpush.bf16.xpose.msra.mxu0 %v4149
      %4181 = vmatpush.bf16.xpose.msra.mxu0 %v4146
      %4182 = vmatpush.bf16.xpose.msra.mxu0 %v4143
      %4183 = vmatpush.bf16.xpose.msra.mxu0 %v4140
      %4184 = vmatmul.bf16.gmra.mxu0 %v4113
      %v4185 = vpop.f32.mrf.mxu0
      %v4186 = vadd.f32 %v4061, %v4185
      %v4187 = vpop.f32.mrf.mxu0
      %4188 = vdwg.mxu0
      %v4189 = vld [vmem:[%s212] sm:$0xf]
      %v4190 = vld [vmem:[%s212 + $0x4] sm:$0xf]
      %v4191 = vld [vmem:[%s212 + $0x8] sm:$0x1]
      %v4192 = vld [vmem:[%s212 + $0xc] sm:$0xf]
      %v4193 = vld [vmem:[%s212 + $0x10] sm:$0xf]
      %v4194 = vld [vmem:[%s212 + $0x14] sm:$0x1]
      %v4195 = vld [vmem:[%s212 + $0x18] sm:$0xf]
      %v4196 = vld [vmem:[%s212 + $0x1c] sm:$0xf]
      %v4197 = vld [vmem:[%s212 + $0x20] sm:$0x1]
      %v4198 = vld [vmem:[%s212 + $0x24] sm:$0xf]
      %v4199 = vld [vmem:[%s212 + $0x28] sm:$0xf]
      %v4200 = vld [vmem:[%s212 + $0x2c] sm:$0x1]
      %v4201 = vld [vmem:[%s212 + $0x30] sm:$0xf]
      %v4202 = vld [vmem:[%s212 + $0x34] sm:$0xf]
      %v4203 = vld [vmem:[%s212 + $0x38] sm:$0x1]
      %v4204 = vld [vmem:[%s212 + $0x3c] sm:$0xf]
      %v4205 = vld [vmem:[%s212 + $0x40] sm:$0xf]
      %v4206 = vld [vmem:[%s212 + $0x44] sm:$0x1]
      %v4207 = vld [vmem:[%s212 + $0x48] sm:$0xf]
      %v4208 = vld [vmem:[%s212 + $0x4c] sm:$0xf]
      %v4209 = vld [vmem:[%s212 + $0x50] sm:$0x1]
      %v4210 = vld [vmem:[%s212 + $0x54] sm:$0xf]
      %v4211 = vld [vmem:[%s212 + $0x58] sm:$0xf]
      %v4212 = vld [vmem:[%s212 + $0x5c] sm:$0x1]
      %v4213 = vld [vmem:[%s212 + $0x60] sm:$0xf]
      %v4214 = vld [vmem:[%s212 + $0x64] sm:$0xf]
      %v4215 = vld [vmem:[%s212 + $0x68] sm:$0x1]
      %v4216 = vld [vmem:[%s212 + $0x6c] sm:$0xf]
      %v4217 = vld [vmem:[%s212 + $0x70] sm:$0xf]
      %v4218 = vld [vmem:[%s212 + $0x74] sm:$0x1]
      %v4219 = vld [vmem:[%s212 + $0x78] sm:$0xf]
      %v4220 = vld [vmem:[%s212 + $0x7c] sm:$0xf]
      %v4221 = vld [vmem:[%s212 + $0x80] sm:$0x1]
      %v4222 = vld [vmem:[%s212 + $0x84] sm:$0xf]
      %v4223 = vld [vmem:[%s212 + $0x88] sm:$0xf]
      %v4224 = vld [vmem:[%s212 + $0x8c] sm:$0x1]
      %v4225 = vld [vmem:[%s212 + $0x90] sm:$0xf]
      %v4226 = vld [vmem:[%s212 + $0x94] sm:$0xf]
      %v4227 = vld [vmem:[%s212 + $0x98] sm:$0x1]
      %v4228 = vld [vmem:[%s212 + $0x9c] sm:$0xf]
      %v4229 = vld [vmem:[%s212 + $0xa0] sm:$0xf]
      %v4230 = vld [vmem:[%s212 + $0xa4] sm:$0x1]
      %v4231 = vld [vmem:[%s212 + $0xa8] sm:$0xf]
      %v4232 = vld [vmem:[%s212 + $0xac] sm:$0xf]
      %v4233 = vld [vmem:[%s212 + $0xb0] sm:$0x1]
      %v4234 = vld [vmem:[%s212 + $0xb4] sm:$0xf]
      %v4235 = vld [vmem:[%s212 + $0xb8] sm:$0xf]
      %v4236 = vld [vmem:[%s212 + $0xbc] sm:$0x1]
      %v4238 = vshrl.u32 %v4189, 16
      %v4240 = vrot.slane %v4238, 4
      %v4241 = vshll.u32 %v4189, 16
      %v4243 = vrot.slane %v4241, 5
      %v4244 = vor.u32 %v4240, %v4243
      %v4245 = vrot.slane %v4244, 4
      %v4247 = vshll.u32 %v4190, 16
      %v4249 = vrot.slane %v4247, 5
      %v4250 = vsel %vm263, %v4245, %v4249
      %v4251 = vshrl.u32 %v4190, 16
      %v4253 = vrot.slane %v4251, 4
      %v4254 = vor.u32 %v4253, %v4249
      %v4255 = vrot.slane %v4254, 4
      %v4257 = vshll.u32 %v4191, 16
      %v4259 = vrot.slane %v4257, 5
      %v4260 = vsel %vm263, %v4255, %v4259
      %v4262 = vshrl.u32 %v4192, 16
      %v4264 = vrot.slane %v4262, 4
      %v4265 = vshll.u32 %v4192, 16
      %v4267 = vrot.slane %v4265, 5
      %v4268 = vor.u32 %v4264, %v4267
      %v4269 = vrot.slane %v4268, 4
      %v4271 = vshll.u32 %v4193, 16
      %v4273 = vrot.slane %v4271, 5
      %v4274 = vsel %vm263, %v4269, %v4273
      %v4275 = vshrl.u32 %v4193, 16
      %v4277 = vrot.slane %v4275, 4
      %v4278 = vor.u32 %v4277, %v4273
      %v4279 = vrot.slane %v4278, 4
      %v4281 = vshll.u32 %v4194, 16
      %v4283 = vrot.slane %v4281, 5
      %v4284 = vsel %vm263, %v4279, %v4283
      %v4286 = vshrl.u32 %v4195, 16
      %v4288 = vrot.slane %v4286, 4
      %v4289 = vshll.u32 %v4195, 16
      %v4291 = vrot.slane %v4289, 5
      %v4292 = vor.u32 %v4288, %v4291
      %v4293 = vrot.slane %v4292, 4
      %v4295 = vshll.u32 %v4196, 16
      %v4297 = vrot.slane %v4295, 5
      %v4298 = vsel %vm263, %v4293, %v4297
      %v4299 = vshrl.u32 %v4196, 16
      %v4301 = vrot.slane %v4299, 4
      %v4302 = vor.u32 %v4301, %v4297
      %v4303 = vrot.slane %v4302, 4
      %v4305 = vshll.u32 %v4197, 16
      %v4307 = vrot.slane %v4305, 5
      %v4308 = vsel %vm263, %v4303, %v4307
      %v4310 = vshrl.u32 %v4198, 16
      %v4312 = vrot.slane %v4310, 4
      %v4313 = vshll.u32 %v4198, 16
      %v4315 = vrot.slane %v4313, 5
      %v4316 = vor.u32 %v4312, %v4315
      %v4317 = vrot.slane %v4316, 4
      %v4319 = vshll.u32 %v4199, 16
      %v4321 = vrot.slane %v4319, 5
      %v4322 = vsel %vm263, %v4317, %v4321
      %v4323 = vshrl.u32 %v4199, 16
      %v4325 = vrot.slane %v4323, 4
      %v4326 = vor.u32 %v4325, %v4321
      %v4327 = vrot.slane %v4326, 4
      %v4329 = vshll.u32 %v4200, 16
      %v4331 = vrot.slane %v4329, 5
      %v4332 = vsel %vm263, %v4327, %v4331
      %v4334 = vshrl.u32 %v4201, 16
      %v4336 = vrot.slane %v4334, 4
      %v4337 = vshll.u32 %v4201, 16
      %v4339 = vrot.slane %v4337, 5
      %v4340 = vor.u32 %v4336, %v4339
      %v4341 = vrot.slane %v4340, 4
      %v4343 = vshll.u32 %v4202, 16
      %v4345 = vrot.slane %v4343, 5
      %v4346 = vsel %vm263, %v4341, %v4345
      %v4347 = vshrl.u32 %v4202, 16
      %v4349 = vrot.slane %v4347, 4
      %v4350 = vor.u32 %v4349, %v4345
      %v4351 = vrot.slane %v4350, 4
      %v4353 = vshll.u32 %v4203, 16
      %v4355 = vrot.slane %v4353, 5
      %v4356 = vsel %vm263, %v4351, %v4355
      %v4358 = vshrl.u32 %v4204, 16
      %v4360 = vrot.slane %v4358, 4
      %v4361 = vshll.u32 %v4204, 16
      %v4363 = vrot.slane %v4361, 5
      %v4364 = vor.u32 %v4360, %v4363
      %v4365 = vrot.slane %v4364, 4
      %v4367 = vshll.u32 %v4205, 16
      %v4369 = vrot.slane %v4367, 5
      %v4370 = vsel %vm263, %v4365, %v4369
      %v4371 = vshrl.u32 %v4205, 16
      %v4373 = vrot.slane %v4371, 4
      %v4374 = vor.u32 %v4373, %v4369
      %v4375 = vrot.slane %v4374, 4
      %v4377 = vshll.u32 %v4206, 16
      %v4379 = vrot.slane %v4377, 5
      %v4380 = vsel %vm263, %v4375, %v4379
      %v4382 = vshrl.u32 %v4207, 16
      %v4384 = vrot.slane %v4382, 4
      %v4385 = vshll.u32 %v4207, 16
      %v4387 = vrot.slane %v4385, 5
      %v4388 = vor.u32 %v4384, %v4387
      %v4389 = vrot.slane %v4388, 4
      %v4391 = vshll.u32 %v4208, 16
      %v4393 = vrot.slane %v4391, 5
      %v4394 = vsel %vm263, %v4389, %v4393
      %v4395 = vshrl.u32 %v4208, 16
      %v4397 = vrot.slane %v4395, 4
      %v4398 = vor.u32 %v4397, %v4393
      %v4399 = vrot.slane %v4398, 4
      %v4401 = vshll.u32 %v4209, 16
      %v4403 = vrot.slane %v4401, 5
      %v4404 = vsel %vm263, %v4399, %v4403
      %v4406 = vshrl.u32 %v4210, 16
      %v4408 = vrot.slane %v4406, 4
      %v4409 = vshll.u32 %v4210, 16
      %v4411 = vrot.slane %v4409, 5
      %v4412 = vor.u32 %v4408, %v4411
      %v4413 = vrot.slane %v4412, 4
      %v4415 = vshll.u32 %v4211, 16
      %v4417 = vrot.slane %v4415, 5
      %v4418 = vsel %vm263, %v4413, %v4417
      %v4419 = vshrl.u32 %v4211, 16
      %v4421 = vrot.slane %v4419, 4
      %v4422 = vor.u32 %v4421, %v4417
      %v4423 = vrot.slane %v4422, 4
      %v4425 = vshll.u32 %v4212, 16
      %v4427 = vrot.slane %v4425, 5
      %v4428 = vsel %vm263, %v4423, %v4427
      %v4430 = vshrl.u32 %v4213, 16
      %v4432 = vrot.slane %v4430, 4
      %v4433 = vshll.u32 %v4213, 16
      %v4435 = vrot.slane %v4433, 5
      %v4436 = vor.u32 %v4432, %v4435
      %v4437 = vrot.slane %v4436, 4
      %v4439 = vshll.u32 %v4214, 16
      %v4441 = vrot.slane %v4439, 5
      %v4442 = vsel %vm263, %v4437, %v4441
      %v4443 = vshrl.u32 %v4214, 16
      %v4445 = vrot.slane %v4443, 4
      %v4446 = vor.u32 %v4445, %v4441
      %v4447 = vrot.slane %v4446, 4
      %v4449 = vshll.u32 %v4215, 16
      %v4451 = vrot.slane %v4449, 5
      %v4452 = vsel %vm263, %v4447, %v4451
      %v4454 = vshrl.u32 %v4216, 16
      %v4456 = vrot.slane %v4454, 4
      %v4457 = vshll.u32 %v4216, 16
      %v4459 = vrot.slane %v4457, 5
      %v4460 = vor.u32 %v4456, %v4459
      %v4461 = vrot.slane %v4460, 4
      %v4463 = vshll.u32 %v4217, 16
      %v4465 = vrot.slane %v4463, 5
      %v4466 = vsel %vm263, %v4461, %v4465
      %v4467 = vshrl.u32 %v4217, 16
      %v4469 = vrot.slane %v4467, 4
      %v4470 = vor.u32 %v4469, %v4465
      %v4471 = vrot.slane %v4470, 4
      %v4473 = vshll.u32 %v4218, 16
      %v4475 = vrot.slane %v4473, 5
      %v4476 = vsel %vm263, %v4471, %v4475
      %v4478 = vshrl.u32 %v4219, 16
      %v4480 = vrot.slane %v4478, 4
      %v4481 = vshll.u32 %v4219, 16
      %v4483 = vrot.slane %v4481, 5
      %v4484 = vor.u32 %v4480, %v4483
      %v4485 = vrot.slane %v4484, 4
      %v4487 = vshll.u32 %v4220, 16
      %v4489 = vrot.slane %v4487, 5
      %v4490 = vsel %vm263, %v4485, %v4489
      %v4491 = vshrl.u32 %v4220, 16
      %v4493 = vrot.slane %v4491, 4
      %v4494 = vor.u32 %v4493, %v4489
      %v4495 = vrot.slane %v4494, 4
      %v4497 = vshll.u32 %v4221, 16
      %v4499 = vrot.slane %v4497, 5
      %v4500 = vsel %vm263, %v4495, %v4499
      %v4502 = vshrl.u32 %v4222, 16
      %v4504 = vrot.slane %v4502, 4
      %v4505 = vshll.u32 %v4222, 16
      %v4507 = vrot.slane %v4505, 5
      %v4508 = vor.u32 %v4504, %v4507
      %v4509 = vrot.slane %v4508, 4
      %v4511 = vshll.u32 %v4223, 16
      %v4513 = vrot.slane %v4511, 5
      %v4514 = vsel %vm263, %v4509, %v4513
      %v4515 = vshrl.u32 %v4223, 16
      %v4517 = vrot.slane %v4515, 4
      %v4518 = vor.u32 %v4517, %v4513
      %v4519 = vrot.slane %v4518, 4
      %v4521 = vshll.u32 %v4224, 16
      %v4523 = vrot.slane %v4521, 5
      %v4524 = vsel %vm263, %v4519, %v4523
      %v4526 = vshrl.u32 %v4225, 16
      %v4528 = vrot.slane %v4526, 4
      %v4529 = vshll.u32 %v4225, 16
      %v4531 = vrot.slane %v4529, 5
      %v4532 = vor.u32 %v4528, %v4531
      %v4533 = vrot.slane %v4532, 4
      %v4535 = vshll.u32 %v4226, 16
      %v4537 = vrot.slane %v4535, 5
      %v4538 = vsel %vm263, %v4533, %v4537
      %v4539 = vshrl.u32 %v4226, 16
      %v4541 = vrot.slane %v4539, 4
      %v4542 = vor.u32 %v4541, %v4537
      %v4543 = vrot.slane %v4542, 4
      %v4545 = vshll.u32 %v4227, 16
      %v4547 = vrot.slane %v4545, 5
      %v4548 = vsel %vm263, %v4543, %v4547
      %v4550 = vshrl.u32 %v4228, 16
      %v4552 = vrot.slane %v4550, 4
      %v4553 = vshll.u32 %v4228, 16
      %v4555 = vrot.slane %v4553, 5
      %v4556 = vor.u32 %v4552, %v4555
      %v4557 = vrot.slane %v4556, 4
      %v4559 = vshll.u32 %v4229, 16
      %v4561 = vrot.slane %v4559, 5
      %v4562 = vsel %vm263, %v4557, %v4561
      %v4563 = vshrl.u32 %v4229, 16
      %v4565 = vrot.slane %v4563, 4
      %v4566 = vor.u32 %v4565, %v4561
      %v4567 = vrot.slane %v4566, 4
      %v4569 = vshll.u32 %v4230, 16
      %v4571 = vrot.slane %v4569, 5
      %v4572 = vsel %vm263, %v4567, %v4571
      %v4574 = vshrl.u32 %v4231, 16
      %v4576 = vrot.slane %v4574, 4
      %v4577 = vshll.u32 %v4231, 16
      %v4579 = vrot.slane %v4577, 5
      %v4580 = vor.u32 %v4576, %v4579
      %v4581 = vrot.slane %v4580, 4
      %v4583 = vshll.u32 %v4232, 16
      %v4585 = vrot.slane %v4583, 5
      %v4586 = vsel %vm263, %v4581, %v4585
      %v4587 = vshrl.u32 %v4232, 16
      %v4589 = vrot.slane %v4587, 4
      %v4590 = vor.u32 %v4589, %v4585
      %v4591 = vrot.slane %v4590, 4
      %v4593 = vshll.u32 %v4233, 16
      %v4595 = vrot.slane %v4593, 5
      %v4596 = vsel %vm263, %v4591, %v4595
      %v4598 = vshrl.u32 %v4234, 16
      %v4600 = vrot.slane %v4598, 4
      %v4601 = vshll.u32 %v4234, 16
      %v4603 = vrot.slane %v4601, 5
      %v4604 = vor.u32 %v4600, %v4603
      %v4605 = vrot.slane %v4604, 4
      %v4607 = vshll.u32 %v4235, 16
      %v4609 = vrot.slane %v4607, 5
      %v4610 = vsel %vm263, %v4605, %v4609
      %v4611 = vshrl.u32 %v4235, 16
      %v4613 = vrot.slane %v4611, 4
      %v4614 = vor.u32 %v4613, %v4609
      %v4615 = vrot.slane %v4614, 4
      %v4617 = vshll.u32 %v4236, 16
      %v4619 = vrot.slane %v4617, 5
      %v4620 = vsel %vm263, %v4615, %v4619
      %s4621 = scalar_lea.vmem %s1, 36
      %v4622 = vld [vmem:[%s4621] sm:$0xf]
      %v4623 = vunpack.c.l.b16 %v4250
      %v4624 = vunpack.c.l.b16 %v4260
      %v4625 = vunpack.c.l.b16 %v4274
      %v4626 = vunpack.c.l.b16 %v4284
      %v4627 = vunpack.c.l.b16 %v4298
      %v4628 = vunpack.c.l.b16 %v4308
      %v4629 = vunpack.c.l.b16 %v4322
      %v4630 = vunpack.c.l.b16 %v4332
      %v4631 = vunpack.c.l.b16 %v4346
      %v4632 = vunpack.c.l.b16 %v4356
      %v4633 = vunpack.c.l.b16 %v4370
      %v4634 = vunpack.c.l.b16 %v4380
      %v4635 = vunpack.c.l.b16 %v4394
      %v4636 = vunpack.c.l.b16 %v4404
      %v4637 = vunpack.c.l.b16 %v4418
      %v4638 = vunpack.c.l.b16 %v4428
      %v4639 = vunpack.c.l.b16 %v4442
      %v4640 = vunpack.c.l.b16 %v4452
      %v4641 = vunpack.c.l.b16 %v4466
      %v4642 = vunpack.c.l.b16 %v4476
      %v4643 = vunpack.c.l.b16 %v4490
      %v4644 = vunpack.c.l.b16 %v4500
      %v4645 = vunpack.c.l.b16 %v4514
      %v4646 = vunpack.c.l.b16 %v4524
      %v4647 = vunpack.c.l.b16 %v4538
      %v4648 = vunpack.c.l.b16 %v4548
      %v4649 = vunpack.c.l.b16 %v4562
      %v4650 = vunpack.c.l.b16 %v4572
      %v4651 = vunpack.c.l.b16 %v4586
      %v4652 = vunpack.c.l.b16 %v4596
      %v4653 = vunpack.c.l.b16 %v4610
      %v4654 = vunpack.c.l.b16 %v4620
      %v4655 = vpack.c.b16 %v4624, %v4623
      %v4656 = vpack.c.b16 %v4626, %v4625
      %v4657 = vpack.c.b16 %v4628, %v4627
      %v4658 = vpack.c.b16 %v4630, %v4629
      %v4659 = vpack.c.b16 %v4632, %v4631
      %v4660 = vpack.c.b16 %v4634, %v4633
      %v4661 = vpack.c.b16 %v4636, %v4635
      %v4662 = vpack.c.b16 %v4638, %v4637
      %v4663 = vpack.c.b16 %v4640, %v4639
      %v4664 = vpack.c.b16 %v4642, %v4641
      %v4665 = vpack.c.b16 %v4644, %v4643
      %v4666 = vpack.c.b16 %v4646, %v4645
      %v4667 = vpack.c.b16 %v4648, %v4647
      %v4668 = vpack.c.b16 %v4650, %v4649
      %v4669 = vpack.c.b16 %v4652, %v4651
      %v4670 = vpack.c.b16 %v4654, %v4653
      %v4672 = vsel %vm732, %v4622, 0
      %v4675 = vsel %vm732, %v4655, 0
      %v4678 = vsel %vm732, %v4656, 0
      %v4681 = vsel %vm732, %v4657, 0
      %v4684 = vsel %vm732, %v4658, 0
      %v4687 = vsel %vm732, %v4659, 0
      %v4690 = vsel %vm732, %v4660, 0
      %v4693 = vsel %vm732, %v4661, 0
      %v4696 = vsel %vm732, %v4662, 0
      %v4699 = vsel %vm732, %v4663, 0
      %v4702 = vsel %vm732, %v4664, 0
      %v4705 = vsel %vm732, %v4665, 0
      %v4708 = vsel %vm732, %v4666, 0
      %v4711 = vsel %vm732, %v4667, 0
      %v4714 = vsel %vm732, %v4668, 0
      %v4717 = vsel %vm732, %v4669, 0
      %v4720 = vsel %vm732, %v4670, 0
      %4722 = vmatpush.bf16.xpose.msra.mxu0 %v4696
      %4723 = vmatpush.bf16.xpose.msra.mxu0 %v4693
      %4724 = vmatpush.bf16.xpose.msra.mxu0 %v4690
      %4725 = vmatpush.bf16.xpose.msra.mxu0 %v4687
      %4726 = vmatpush.bf16.xpose.msra.mxu0 %v4684
      %4727 = vmatpush.bf16.xpose.msra.mxu0 %v4681
      %4728 = vmatpush.bf16.xpose.msra.mxu0 %v4678
      %4729 = vmatpush.bf16.xpose.msra.mxu0 %v4675
      %4730 = vmatmul.bf16.gmra.mxu0 %v4672
      %v4731 = vpop.f32.mrf.mxu0
      %v4732 = vadd.f32 0.0, %v4731
      %v4733 = vpop.f32.mrf.mxu0
      %4734 = vdwg.mxu0
      %4735 = vmatpush.bf16.xpose.msra.mxu0 %v4720
      %4736 = vmatpush.bf16.xpose.msra.mxu0 %v4717
      %4737 = vmatpush.bf16.xpose.msra.mxu0 %v4714
      %4738 = vmatpush.bf16.xpose.msra.mxu0 %v4711
      %4739 = vmatpush.bf16.xpose.msra.mxu0 %v4708
      %4740 = vmatpush.bf16.xpose.msra.mxu0 %v4705
      %4741 = vmatpush.bf16.xpose.msra.mxu0 %v4702
      %4742 = vmatpush.bf16.xpose.msra.mxu0 %v4699
      %4743 = vmatmul.bf16.gmra.mxu0 %v4672
      %v4744 = vpop.f32.mrf.mxu0
      %v4745 = vadd.f32 0.0, %v4744
      %v4746 = vpop.f32.mrf.mxu0
      %4747 = vdwg.mxu0
      %v4748 = vadd.f32 %v4173, %v4732
      %v4749 = vadd.f32 %v4186, %v4745
      %v4750 = vld [vmem:[%s212] sm:$0xf]
      %v4751 = vld [vmem:[%s212 + $0x4] sm:$0xf]
      %v4752 = vld [vmem:[%s212 + $0xc] sm:$0xf]
      %v4753 = vld [vmem:[%s212 + $0x10] sm:$0xf]
      %v4754 = vld [vmem:[%s212 + $0x18] sm:$0xf]
      %v4755 = vld [vmem:[%s212 + $0x1c] sm:$0xf]
      %v4756 = vld [vmem:[%s212 + $0x24] sm:$0xf]
      %v4757 = vld [vmem:[%s212 + $0x28] sm:$0xf]
      %v4758 = vld [vmem:[%s212 + $0x30] sm:$0xf]
      %v4759 = vld [vmem:[%s212 + $0x34] sm:$0xf]
      %v4760 = vld [vmem:[%s212 + $0x3c] sm:$0xf]
      %v4761 = vld [vmem:[%s212 + $0x40] sm:$0xf]
      %v4762 = vld [vmem:[%s212 + $0x48] sm:$0xf]
      %v4763 = vld [vmem:[%s212 + $0x4c] sm:$0xf]
      %v4764 = vld [vmem:[%s212 + $0x54] sm:$0xf]
      %v4765 = vld [vmem:[%s212 + $0x58] sm:$0xf]
      %v4766 = vld [vmem:[%s212 + $0x60] sm:$0xf]
      %v4767 = vld [vmem:[%s212 + $0x64] sm:$0xf]
      %v4768 = vld [vmem:[%s212 + $0x6c] sm:$0xf]
      %v4769 = vld [vmem:[%s212 + $0x70] sm:$0xf]
      %v4770 = vld [vmem:[%s212 + $0x78] sm:$0xf]
      %v4771 = vld [vmem:[%s212 + $0x7c] sm:$0xf]
      %v4772 = vld [vmem:[%s212 + $0x84] sm:$0xf]
      %v4773 = vld [vmem:[%s212 + $0x88] sm:$0xf]
      %v4774 = vld [vmem:[%s212 + $0x90] sm:$0xf]
      %v4775 = vld [vmem:[%s212 + $0x94] sm:$0xf]
      %v4776 = vld [vmem:[%s212 + $0x9c] sm:$0xf]
      %v4777 = vld [vmem:[%s212 + $0xa0] sm:$0xf]
      %v4778 = vld [vmem:[%s212 + $0xa8] sm:$0xf]
      %v4779 = vld [vmem:[%s212 + $0xac] sm:$0xf]
      %v4780 = vld [vmem:[%s212 + $0xb4] sm:$0xf]
      %v4781 = vld [vmem:[%s212 + $0xb8] sm:$0xf]
      %s4782 = scalar_lea.vmem %s1, 44
      %v4783 = vld [vmem:[%s4782] sm:$0xf]
      %v4816 = vunpack.c.l.b16 %v4750
      %v4817 = vunpack.c.l.b16 %v4751
      %v4818 = vunpack.c.l.b16 %v4752
      %v4819 = vunpack.c.l.b16 %v4753
      %v4820 = vunpack.c.l.b16 %v4754
      %v4821 = vunpack.c.l.b16 %v4755
      %v4822 = vunpack.c.l.b16 %v4756
      %v4823 = vunpack.c.l.b16 %v4757
      %v4824 = vunpack.c.l.b16 %v4758
      %v4825 = vunpack.c.l.b16 %v4759
      %v4826 = vunpack.c.l.b16 %v4760
      %v4827 = vunpack.c.l.b16 %v4761
      %v4828 = vunpack.c.l.b16 %v4762
      %v4829 = vunpack.c.l.b16 %v4763
      %v4830 = vunpack.c.l.b16 %v4764
      %v4831 = vunpack.c.l.b16 %v4765
      %v4832 = vunpack.c.l.b16 %v4766
      %v4833 = vunpack.c.l.b16 %v4767
      %v4834 = vunpack.c.l.b16 %v4768
      %v4835 = vunpack.c.l.b16 %v4769
      %v4836 = vunpack.c.l.b16 %v4770
      %v4837 = vunpack.c.l.b16 %v4771
      %v4838 = vunpack.c.l.b16 %v4772
      %v4839 = vunpack.c.l.b16 %v4773
      %v4840 = vunpack.c.l.b16 %v4774
      %v4841 = vunpack.c.l.b16 %v4775
      %v4842 = vunpack.c.l.b16 %v4776
      %v4843 = vunpack.c.l.b16 %v4777
      %v4844 = vunpack.c.l.b16 %v4778
      %v4845 = vunpack.c.l.b16 %v4779
      %v4846 = vunpack.c.l.b16 %v4780
      %v4847 = vunpack.c.l.b16 %v4781
      %v4848 = vpack.c.b16 %v4817, %v4816
      %v4849 = vpack.c.b16 %v4819, %v4818
      %v4850 = vpack.c.b16 %v4821, %v4820
      %v4851 = vpack.c.b16 %v4823, %v4822
      %v4852 = vpack.c.b16 %v4825, %v4824
      %v4853 = vpack.c.b16 %v4827, %v4826
      %v4854 = vpack.c.b16 %v4829, %v4828
      %v4855 = vpack.c.b16 %v4831, %v4830
      %v4856 = vpack.c.b16 %v4833, %v4832
      %v4857 = vpack.c.b16 %v4835, %v4834
      %v4858 = vpack.c.b16 %v4837, %v4836
      %v4859 = vpack.c.b16 %v4839, %v4838
      %v4860 = vpack.c.b16 %v4841, %v4840
      %v4861 = vpack.c.b16 %v4843, %v4842
      %v4862 = vpack.c.b16 %v4845, %v4844
      %v4863 = vpack.c.b16 %v4847, %v4846
      %v4865 = vsel %vm732, %v4783, 0
      %v4868 = vsel %vm732, %v4848, 0
      %v4871 = vsel %vm732, %v4849, 0
      %v4874 = vsel %vm732, %v4850, 0
      %v4877 = vsel %vm732, %v4851, 0
      %v4880 = vsel %vm732, %v4852, 0
      %v4883 = vsel %vm732, %v4853, 0
      %v4886 = vsel %vm732, %v4854, 0
      %v4889 = vsel %vm732, %v4855, 0
      %v4892 = vsel %vm732, %v4856, 0
      %v4895 = vsel %vm732, %v4857, 0
      %v4898 = vsel %vm732, %v4858, 0
      %v4901 = vsel %vm732, %v4859, 0
      %v4904 = vsel %vm732, %v4860, 0
      %v4907 = vsel %vm732, %v4861, 0
      %v4910 = vsel %vm732, %v4862, 0
      %v4913 = vsel %vm732, %v4863, 0
      %4915 = vmatpush.bf16.xpose.msra.mxu0 %v4889
      %4916 = vmatpush.bf16.xpose.msra.mxu0 %v4886
      %4917 = vmatpush.bf16.xpose.msra.mxu0 %v4883
      %4918 = vmatpush.bf16.xpose.msra.mxu0 %v4880
      %4919 = vmatpush.bf16.xpose.msra.mxu0 %v4877
      %4920 = vmatpush.bf16.xpose.msra.mxu0 %v4874
      %4921 = vmatpush.bf16.xpose.msra.mxu0 %v4871
      %4922 = vmatpush.bf16.xpose.msra.mxu0 %v4868
      %4923 = vmatmul.bf16.gmra.mxu0 %v4865
      %v4924 = vpop.f32.mrf.mxu0
      %v4925 = vadd.f32 0.0, %v4924
      %v4926 = vpop.f32.mrf.mxu0
      %4927 = vdwg.mxu0
      %4928 = vmatpush.bf16.xpose.msra.mxu0 %v4913
      %4929 = vmatpush.bf16.xpose.msra.mxu0 %v4910
      %4930 = vmatpush.bf16.xpose.msra.mxu0 %v4907
      %4931 = vmatpush.bf16.xpose.msra.mxu0 %v4904
      %4932 = vmatpush.bf16.xpose.msra.mxu0 %v4901
      %4933 = vmatpush.bf16.xpose.msra.mxu0 %v4898
      %4934 = vmatpush.bf16.xpose.msra.mxu0 %v4895
      %4935 = vmatpush.bf16.xpose.msra.mxu0 %v4892
      %4936 = vmatmul.bf16.gmra.mxu0 %v4865
      %v4937 = vpop.f32.mrf.mxu0
      %v4938 = vadd.f32 0.0, %v4937
      %v4939 = vpop.f32.mrf.mxu0
      %4940 = vdwg.mxu0
      %v4941 = vadd.f32 %v4748, %v4925
      %v4942 = vadd.f32 %v4749, %v4938
      %v4943 = vadd.f32 %v4941, %v1692
      %v4944 = vadd.f32 %v4942, %v1692
      %v4945 = vadd.f32 %v4943, %v4944
      %4946 = vadd.xlane.f32.xlu0 %v4945
      %v4947 = vpop.xlane.xlu0 %4946
      %v4948 = vmul.f32 %v4947, %v1705
      %v4949 = vsub.f32 %v4943, %v4948
      %v4950 = vsub.f32 %v4944, %v4948
      %v4951 = vmul.f32 %v4949, %v4949
      %v4952 = vmul.f32 %v4950, %v4950
      %v4953 = vadd.f32 %v4951, %v4952
      %4954 = vadd.xlane.f32.xlu0 %v4953
      %v4955 = vpop.xlane.xlu0 %4954
      %v4956 = vsel %vm1714, %v4948, %v4955
      %s4957 = scalar_lea.vmem %s210, 16
      %4958 = vst.msk [vmem:[%s4957] sm:$0xff] %vm1716, %v4956
      %v4959 = vpack.c.bf16 %v4944, %v4943
      %s4960 = scalar_lea.vmem %s205, 16
      %4961 = vst [vmem:[%s4960] sm:$0xff] %v4959
      %v4962 = vld [vmem:[%s3470] sm:$0xe]
      %v4963 = vld [vmem:[%s3470 + $0x4] sm:$0xf]
      %v4964 = vld [vmem:[%s3470 + $0x8] sm:$0x1]
      %v4965 = vld [vmem:[%s3470 + $0xc] sm:$0xe]
      %v4966 = vld [vmem:[%s3470 + $0x10] sm:$0xf]
      %v4967 = vld [vmem:[%s3470 + $0x14] sm:$0x1]
      %v4968 = vld [vmem:[%s3470 + $0x18] sm:$0xe]
      %v4969 = vld [vmem:[%s3470 + $0x1c] sm:$0xf]
      %v4970 = vld [vmem:[%s3470 + $0x20] sm:$0x1]
      %v4971 = vld [vmem:[%s3470 + $0x24] sm:$0xe]
      %v4972 = vld [vmem:[%s3470 + $0x28] sm:$0xf]
      %v4973 = vld [vmem:[%s3470 + $0x2c] sm:$0x1]
      %v4974 = vld [vmem:[%s3470 + $0x30] sm:$0xe]
      %v4975 = vld [vmem:[%s3470 + $0x34] sm:$0xf]
      %v4976 = vld [vmem:[%s3470 + $0x38] sm:$0x1]
      %v4977 = vld [vmem:[%s3470 + $0x3c] sm:$0xe]
      %v4978 = vld [vmem:[%s3470 + $0x40] sm:$0xf]
      %v4979 = vld [vmem:[%s3470 + $0x44] sm:$0x1]
      %v4980 = vld [vmem:[%s3470 + $0x48] sm:$0xe]
      %v4981 = vld [vmem:[%s3470 + $0x4c] sm:$0xf]
      %v4982 = vld [vmem:[%s3470 + $0x50] sm:$0x1]
      %v4983 = vld [vmem:[%s3470 + $0x54] sm:$0xe]
      %v4984 = vld [vmem:[%s3470 + $0x58] sm:$0xf]
      %v4985 = vld [vmem:[%s3470 + $0x5c] sm:$0x1]
      %v4986 = vld [vmem:[%s3470 + $0x60] sm:$0xe]
      %v4987 = vld [vmem:[%s3470 + $0x64] sm:$0xf]
      %v4988 = vld [vmem:[%s3470 + $0x68] sm:$0x1]
      %v4989 = vld [vmem:[%s3470 + $0x6c] sm:$0xe]
      %v4990 = vld [vmem:[%s3470 + $0x70] sm:$0xf]
      %v4991 = vld [vmem:[%s3470 + $0x74] sm:$0x1]
      %v4992 = vld [vmem:[%s3470 + $0x78] sm:$0xe]
      %v4993 = vld [vmem:[%s3470 + $0x7c] sm:$0xf]
      %v4994 = vld [vmem:[%s3470 + $0x80] sm:$0x1]
      %v4995 = vld [vmem:[%s3470 + $0x84] sm:$0xe]
      %v4996 = vld [vmem:[%s3470 + $0x88] sm:$0xf]
      %v4997 = vld [vmem:[%s3470 + $0x8c] sm:$0x1]
      %v4998 = vld [vmem:[%s3470 + $0x90] sm:$0xe]
      %v4999 = vld [vmem:[%s3470 + $0x94] sm:$0xf]
      %v5000 = vld [vmem:[%s3470 + $0x98] sm:$0x1]
      %v5001 = vld [vmem:[%s3470 + $0x9c] sm:$0xe]
      %v5002 = vld [vmem:[%s3470 + $0xa0] sm:$0xf]
      %v5003 = vld [vmem:[%s3470 + $0xa4] sm:$0x1]
      %v5004 = vld [vmem:[%s3470 + $0xa8] sm:$0xe]
      %v5005 = vld [vmem:[%s3470 + $0xac] sm:$0xf]
      %v5006 = vld [vmem:[%s3470 + $0xb0] sm:$0x1]
      %v5007 = vld [vmem:[%s3470 + $0xb4] sm:$0xe]
      %v5008 = vld [vmem:[%s3470 + $0xb8] sm:$0xf]
      %v5009 = vld [vmem:[%s3470 + $0xbc] sm:$0x1]
      %v5058 = vrot.slane %v4962, 5
      %v5059 = vrot.slane %v5058, 4
      %v5060 = vrot.slane %v4963, 5
      %v5061 = vsel %vm1818, %v5059, %v5060
      %v5062 = vrot.slane %v5060, 4
      %v5063 = vrot.slane %v4964, 5
      %v5064 = vsel %vm1818, %v5062, %v5063
      %v5065 = vrot.slane %v4965, 5
      %v5066 = vrot.slane %v5065, 4
      %v5067 = vrot.slane %v4966, 5
      %v5068 = vsel %vm1818, %v5066, %v5067
      %v5069 = vrot.slane %v5067, 4
      %v5070 = vrot.slane %v4967, 5
      %v5071 = vsel %vm1818, %v5069, %v5070
      %v5072 = vrot.slane %v4968, 5
      %v5073 = vrot.slane %v5072, 4
      %v5074 = vrot.slane %v4969, 5
      %v5075 = vsel %vm1818, %v5073, %v5074
      %v5076 = vrot.slane %v5074, 4
      %v5077 = vrot.slane %v4970, 5
      %v5078 = vsel %vm1818, %v5076, %v5077
      %v5079 = vrot.slane %v4971, 5
      %v5080 = vrot.slane %v5079, 4
      %v5081 = vrot.slane %v4972, 5
      %v5082 = vsel %vm1818, %v5080, %v5081
      %v5083 = vrot.slane %v5081, 4
      %v5084 = vrot.slane %v4973, 5
      %v5085 = vsel %vm1818, %v5083, %v5084
      %v5086 = vrot.slane %v4974, 5
      %v5087 = vrot.slane %v5086, 4
      %v5088 = vrot.slane %v4975, 5
      %v5089 = vsel %vm1818, %v5087, %v5088
      %v5090 = vrot.slane %v5088, 4
      %v5091 = vrot.slane %v4976, 5
      %v5092 = vsel %vm1818, %v5090, %v5091
      %v5093 = vrot.slane %v4977, 5
      %v5094 = vrot.slane %v5093, 4
      %v5095 = vrot.slane %v4978, 5
      %v5096 = vsel %vm1818, %v5094, %v5095
      %v5097 = vrot.slane %v5095, 4
      %v5098 = vrot.slane %v4979, 5
      %v5099 = vsel %vm1818, %v5097, %v5098
      %v5100 = vrot.slane %v4980, 5
      %v5101 = vrot.slane %v5100, 4
      %v5102 = vrot.slane %v4981, 5
      %v5103 = vsel %vm1818, %v5101, %v5102
      %v5104 = vrot.slane %v5102, 4
      %v5105 = vrot.slane %v4982, 5
      %v5106 = vsel %vm1818, %v5104, %v5105
      %v5107 = vrot.slane %v4983, 5
      %v5108 = vrot.slane %v5107, 4
      %v5109 = vrot.slane %v4984, 5
      %v5110 = vsel %vm1818, %v5108, %v5109
      %v5111 = vrot.slane %v5109, 4
      %v5112 = vrot.slane %v4985, 5
      %v5113 = vsel %vm1818, %v5111, %v5112
      %v5114 = vrot.slane %v4986, 5
      %v5115 = vrot.slane %v5114, 4
      %v5116 = vrot.slane %v4987, 5
      %v5117 = vsel %vm1818, %v5115, %v5116
      %v5118 = vrot.slane %v5116, 4
      %v5119 = vrot.slane %v4988, 5
      %v5120 = vsel %vm1818, %v5118, %v5119
      %v5121 = vrot.slane %v4989, 5
      %v5122 = vrot.slane %v5121, 4
      %v5123 = vrot.slane %v4990, 5
      %v5124 = vsel %vm1818, %v5122, %v5123
      %v5125 = vrot.slane %v5123, 4
      %v5126 = vrot.slane %v4991, 5
      %v5127 = vsel %vm1818, %v5125, %v5126
      %v5128 = vrot.slane %v4992, 5
      %v5129 = vrot.slane %v5128, 4
      %v5130 = vrot.slane %v4993, 5
      %v5131 = vsel %vm1818, %v5129, %v5130
      %v5132 = vrot.slane %v5130, 4
      %v5133 = vrot.slane %v4994, 5
      %v5134 = vsel %vm1818, %v5132, %v5133
      %v5135 = vrot.slane %v4995, 5
      %v5136 = vrot.slane %v5135, 4
      %v5137 = vrot.slane %v4996, 5
      %v5138 = vsel %vm1818, %v5136, %v5137
      %v5139 = vrot.slane %v5137, 4
      %v5140 = vrot.slane %v4997, 5
      %v5141 = vsel %vm1818, %v5139, %v5140
      %v5142 = vrot.slane %v4998, 5
      %v5143 = vrot.slane %v5142, 4
      %v5144 = vrot.slane %v4999, 5
      %v5145 = vsel %vm1818, %v5143, %v5144
      %v5146 = vrot.slane %v5144, 4
      %v5147 = vrot.slane %v5000, 5
      %v5148 = vsel %vm1818, %v5146, %v5147
      %v5149 = vrot.slane %v5001, 5
      %v5150 = vrot.slane %v5149, 4
      %v5151 = vrot.slane %v5002, 5
      %v5152 = vsel %vm1818, %v5150, %v5151
      %v5153 = vrot.slane %v5151, 4
      %v5154 = vrot.slane %v5003, 5
      %v5155 = vsel %vm1818, %v5153, %v5154
      %v5156 = vrot.slane %v5004, 5
      %v5157 = vrot.slane %v5156, 4
      %v5158 = vrot.slane %v5005, 5
      %v5159 = vsel %vm1818, %v5157, %v5158
      %v5160 = vrot.slane %v5158, 4
      %v5161 = vrot.slane %v5006, 5
      %v5162 = vsel %vm1818, %v5160, %v5161
      %v5163 = vrot.slane %v5007, 5
      %v5164 = vrot.slane %v5163, 4
      %v5165 = vrot.slane %v5008, 5
      %v5166 = vsel %vm1818, %v5164, %v5165
      %v5167 = vrot.slane %v5165, 4
      %v5168 = vrot.slane %v5009, 5
      %v5169 = vsel %vm1818, %v5167, %v5168
      %v5170 = vld [vmem:[%s1] sm:$0xf]
      %v5171 = vld [vmem:[%s3470] sm:$0xf]
      %v5172 = vld [vmem:[%s3470 + $0xc] sm:$0xf]
      %v5173 = vld [vmem:[%s3470 + $0x18] sm:$0xf]
      %v5174 = vld [vmem:[%s3470 + $0x24] sm:$0xf]
      %v5175 = vld [vmem:[%s3470 + $0x30] sm:$0xf]
      %v5176 = vld [vmem:[%s3470 + $0x3c] sm:$0xf]
      %v5177 = vld [vmem:[%s3470 + $0x48] sm:$0xf]
      %v5178 = vld [vmem:[%s3470 + $0x54] sm:$0xf]
      %v5179 = vld [vmem:[%s3470 + $0x60] sm:$0xf]
      %v5180 = vld [vmem:[%s3470 + $0x6c] sm:$0xf]
      %v5181 = vld [vmem:[%s3470 + $0x78] sm:$0xf]
      %v5182 = vld [vmem:[%s3470 + $0x84] sm:$0xf]
      %v5183 = vld [vmem:[%s3470 + $0x90] sm:$0xf]
      %v5184 = vld [vmem:[%s3470 + $0x9c] sm:$0xf]
      %v5185 = vld [vmem:[%s3470 + $0xa8] sm:$0xf]
      %v5186 = vld [vmem:[%s3470 + $0xb4] sm:$0xf]
      %v5188 = vshrl.u32 %v5171, 16
      %v5190 = vrot.slane %v5188, 4
      %v5191 = vshll.u32 %v5171, 16
      %v5193 = vrot.slane %v5191, 5
      %v5194 = vor.u32 %v5190, %v5193
      %v5195 = vrot.slane %v5194, 4
      %v5197 = vshll.u32 %v4963, 16
      %v5199 = vrot.slane %v5197, 5
      %v5200 = vsel %vm263, %v5195, %v5199
      %v5201 = vshrl.u32 %v4963, 16
      %v5203 = vrot.slane %v5201, 4
      %v5204 = vor.u32 %v5203, %v5199
      %v5205 = vrot.slane %v5204, 4
      %v5207 = vshll.u32 %v4964, 16
      %v5209 = vrot.slane %v5207, 5
      %v5210 = vsel %vm263, %v5205, %v5209
      %v5212 = vshrl.u32 %v5172, 16
      %v5214 = vrot.slane %v5212, 4
      %v5215 = vshll.u32 %v5172, 16
      %v5217 = vrot.slane %v5215, 5
      %v5218 = vor.u32 %v5214, %v5217
      %v5219 = vrot.slane %v5218, 4
      %v5221 = vshll.u32 %v4966, 16
      %v5223 = vrot.slane %v5221, 5
      %v5224 = vsel %vm263, %v5219, %v5223
      %v5225 = vshrl.u32 %v4966, 16
      %v5227 = vrot.slane %v5225, 4
      %v5228 = vor.u32 %v5227, %v5223
      %v5229 = vrot.slane %v5228, 4
      %v5231 = vshll.u32 %v4967, 16
      %v5233 = vrot.slane %v5231, 5
      %v5234 = vsel %vm263, %v5229, %v5233
      %v5236 = vshrl.u32 %v5173, 16
      %v5238 = vrot.slane %v5236, 4
      %v5239 = vshll.u32 %v5173, 16
      %v5241 = vrot.slane %v5239, 5
      %v5242 = vor.u32 %v5238, %v5241
      %v5243 = vrot.slane %v5242, 4
      %v5245 = vshll.u32 %v4969, 16
      %v5247 = vrot.slane %v5245, 5
      %v5248 = vsel %vm263, %v5243, %v5247
      %v5249 = vshrl.u32 %v4969, 16
      %v5251 = vrot.slane %v5249, 4
      %v5252 = vor.u32 %v5251, %v5247
      %v5253 = vrot.slane %v5252, 4
      %v5255 = vshll.u32 %v4970, 16
      %v5257 = vrot.slane %v5255, 5
      %v5258 = vsel %vm263, %v5253, %v5257
      %v5260 = vshrl.u32 %v5174, 16
      %v5262 = vrot.slane %v5260, 4
      %v5263 = vshll.u32 %v5174, 16
      %v5265 = vrot.slane %v5263, 5
      %v5266 = vor.u32 %v5262, %v5265
      %v5267 = vrot.slane %v5266, 4
      %v5269 = vshll.u32 %v4972, 16
      %v5271 = vrot.slane %v5269, 5
      %v5272 = vsel %vm263, %v5267, %v5271
      %v5273 = vshrl.u32 %v4972, 16
      %v5275 = vrot.slane %v5273, 4
      %v5276 = vor.u32 %v5275, %v5271
      %v5277 = vrot.slane %v5276, 4
      %v5279 = vshll.u32 %v4973, 16
      %v5281 = vrot.slane %v5279, 5
      %v5282 = vsel %vm263, %v5277, %v5281
      %v5284 = vshrl.u32 %v5175, 16
      %v5286 = vrot.slane %v5284, 4
      %v5287 = vshll.u32 %v5175, 16
      %v5289 = vrot.slane %v5287, 5
      %v5290 = vor.u32 %v5286, %v5289
      %v5291 = vrot.slane %v5290, 4
      %v5293 = vshll.u32 %v4975, 16
      %v5295 = vrot.slane %v5293, 5
      %v5296 = vsel %vm263, %v5291, %v5295
      %v5297 = vshrl.u32 %v4975, 16
      %v5299 = vrot.slane %v5297, 4
      %v5300 = vor.u32 %v5299, %v5295
      %v5301 = vrot.slane %v5300, 4
      %v5303 = vshll.u32 %v4976, 16
      %v5305 = vrot.slane %v5303, 5
      %v5306 = vsel %vm263, %v5301, %v5305
      %v5308 = vshrl.u32 %v5176, 16
      %v5310 = vrot.slane %v5308, 4
      %v5311 = vshll.u32 %v5176, 16
      %v5313 = vrot.slane %v5311, 5
      %v5314 = vor.u32 %v5310, %v5313
      %v5315 = vrot.slane %v5314, 4
      %v5317 = vshll.u32 %v4978, 16
      %v5319 = vrot.slane %v5317, 5
      %v5320 = vsel %vm263, %v5315, %v5319
      %v5321 = vshrl.u32 %v4978, 16
      %v5323 = vrot.slane %v5321, 4
      %v5324 = vor.u32 %v5323, %v5319
      %v5325 = vrot.slane %v5324, 4
      %v5327 = vshll.u32 %v4979, 16
      %v5329 = vrot.slane %v5327, 5
      %v5330 = vsel %vm263, %v5325, %v5329
      %v5332 = vshrl.u32 %v5177, 16
      %v5334 = vrot.slane %v5332, 4
      %v5335 = vshll.u32 %v5177, 16
      %v5337 = vrot.slane %v5335, 5
      %v5338 = vor.u32 %v5334, %v5337
      %v5339 = vrot.slane %v5338, 4
      %v5341 = vshll.u32 %v4981, 16
      %v5343 = vrot.slane %v5341, 5
      %v5344 = vsel %vm263, %v5339, %v5343
      %v5345 = vshrl.u32 %v4981, 16
      %v5347 = vrot.slane %v5345, 4
      %v5348 = vor.u32 %v5347, %v5343
      %v5349 = vrot.slane %v5348, 4
      %v5351 = vshll.u32 %v4982, 16
      %v5353 = vrot.slane %v5351, 5
      %v5354 = vsel %vm263, %v5349, %v5353
      %v5356 = vshrl.u32 %v5178, 16
      %v5358 = vrot.slane %v5356, 4
      %v5359 = vshll.u32 %v5178, 16
      %v5361 = vrot.slane %v5359, 5
      %v5362 = vor.u32 %v5358, %v5361
      %v5363 = vrot.slane %v5362, 4
      %v5365 = vshll.u32 %v4984, 16
      %v5367 = vrot.slane %v5365, 5
      %v5368 = vsel %vm263, %v5363, %v5367
      %v5369 = vshrl.u32 %v4984, 16
      %v5371 = vrot.slane %v5369, 4
      %v5372 = vor.u32 %v5371, %v5367
      %v5373 = vrot.slane %v5372, 4
      %v5375 = vshll.u32 %v4985, 16
      %v5377 = vrot.slane %v5375, 5
      %v5378 = vsel %vm263, %v5373, %v5377
      %v5380 = vshrl.u32 %v5179, 16
      %v5382 = vrot.slane %v5380, 4
      %v5383 = vshll.u32 %v5179, 16
      %v5385 = vrot.slane %v5383, 5
      %v5386 = vor.u32 %v5382, %v5385
      %v5387 = vrot.slane %v5386, 4
      %v5389 = vshll.u32 %v4987, 16
      %v5391 = vrot.slane %v5389, 5
      %v5392 = vsel %vm263, %v5387, %v5391
      %v5393 = vshrl.u32 %v4987, 16
      %v5395 = vrot.slane %v5393, 4
      %v5396 = vor.u32 %v5395, %v5391
      %v5397 = vrot.slane %v5396, 4
      %v5399 = vshll.u32 %v4988, 16
      %v5401 = vrot.slane %v5399, 5
      %v5402 = vsel %vm263, %v5397, %v5401
      %v5404 = vshrl.u32 %v5180, 16
      %v5406 = vrot.slane %v5404, 4
      %v5407 = vshll.u32 %v5180, 16
      %v5409 = vrot.slane %v5407, 5
      %v5410 = vor.u32 %v5406, %v5409
      %v5411 = vrot.slane %v5410, 4
      %v5413 = vshll.u32 %v4990, 16
      %v5415 = vrot.slane %v5413, 5
      %v5416 = vsel %vm263, %v5411, %v5415
      %v5417 = vshrl.u32 %v4990, 16
      %v5419 = vrot.slane %v5417, 4
      %v5420 = vor.u32 %v5419, %v5415
      %v5421 = vrot.slane %v5420, 4
      %v5423 = vshll.u32 %v4991, 16
      %v5425 = vrot.slane %v5423, 5
      %v5426 = vsel %vm263, %v5421, %v5425
      %v5428 = vshrl.u32 %v5181, 16
      %v5430 = vrot.slane %v5428, 4
      %v5431 = vshll.u32 %v5181, 16
      %v5433 = vrot.slane %v5431, 5
      %v5434 = vor.u32 %v5430, %v5433
      %v5435 = vrot.slane %v5434, 4
      %v5437 = vshll.u32 %v4993, 16
      %v5439 = vrot.slane %v5437, 5
      %v5440 = vsel %vm263, %v5435, %v5439
      %v5441 = vshrl.u32 %v4993, 16
      %v5443 = vrot.slane %v5441, 4
      %v5444 = vor.u32 %v5443, %v5439
      %v5445 = vrot.slane %v5444, 4
      %v5447 = vshll.u32 %v4994, 16
      %v5449 = vrot.slane %v5447, 5
      %v5450 = vsel %vm263, %v5445, %v5449
      %v5452 = vshrl.u32 %v5182, 16
      %v5454 = vrot.slane %v5452, 4
      %v5455 = vshll.u32 %v5182, 16
      %v5457 = vrot.slane %v5455, 5
      %v5458 = vor.u32 %v5454, %v5457
      %v5459 = vrot.slane %v5458, 4
      %v5461 = vshll.u32 %v4996, 16
      %v5463 = vrot.slane %v5461, 5
      %v5464 = vsel %vm263, %v5459, %v5463
      %v5465 = vshrl.u32 %v4996, 16
      %v5467 = vrot.slane %v5465, 4
      %v5468 = vor.u32 %v5467, %v5463
      %v5469 = vrot.slane %v5468, 4
      %v5471 = vshll.u32 %v4997, 16
      %v5473 = vrot.slane %v5471, 5
      %v5474 = vsel %vm263, %v5469, %v5473
      %v5476 = vshrl.u32 %v5183, 16
      %v5478 = vrot.slane %v5476, 4
      %v5479 = vshll.u32 %v5183, 16
      %v5481 = vrot.slane %v5479, 5
      %v5482 = vor.u32 %v5478, %v5481
      %v5483 = vrot.slane %v5482, 4
      %v5485 = vshll.u32 %v4999, 16
      %v5487 = vrot.slane %v5485, 5
      %v5488 = vsel %vm263, %v5483, %v5487
      %v5489 = vshrl.u32 %v4999, 16
      %v5491 = vrot.slane %v5489, 4
      %v5492 = vor.u32 %v5491, %v5487
      %v5493 = vrot.slane %v5492, 4
      %v5495 = vshll.u32 %v5000, 16
      %v5497 = vrot.slane %v5495, 5
      %v5498 = vsel %vm263, %v5493, %v5497
      %v5500 = vshrl.u32 %v5184, 16
      %v5502 = vrot.slane %v5500, 4
      %v5503 = vshll.u32 %v5184, 16
      %v5505 = vrot.slane %v5503, 5
      %v5506 = vor.u32 %v5502, %v5505
      %v5507 = vrot.slane %v5506, 4
      %v5509 = vshll.u32 %v5002, 16
      %v5511 = vrot.slane %v5509, 5
      %v5512 = vsel %vm263, %v5507, %v5511
      %v5513 = vshrl.u32 %v5002, 16
      %v5515 = vrot.slane %v5513, 4
      %v5516 = vor.u32 %v5515, %v5511
      %v5517 = vrot.slane %v5516, 4
      %v5519 = vshll.u32 %v5003, 16
      %v5521 = vrot.slane %v5519, 5
      %v5522 = vsel %vm263, %v5517, %v5521
      %v5524 = vshrl.u32 %v5185, 16
      %v5526 = vrot.slane %v5524, 4
      %v5527 = vshll.u32 %v5185, 16
      %v5529 = vrot.slane %v5527, 5
      %v5530 = vor.u32 %v5526, %v5529
      %v5531 = vrot.slane %v5530, 4
      %v5533 = vshll.u32 %v5005, 16
      %v5535 = vrot.slane %v5533, 5
      %v5536 = vsel %vm263, %v5531, %v5535
      %v5537 = vshrl.u32 %v5005, 16
      %v5539 = vrot.slane %v5537, 4
      %v5540 = vor.u32 %v5539, %v5535
      %v5541 = vrot.slane %v5540, 4
      %v5543 = vshll.u32 %v5006, 16
      %v5545 = vrot.slane %v5543, 5
      %v5546 = vsel %vm263, %v5541, %v5545
      %v5548 = vshrl.u32 %v5186, 16
      %v5550 = vrot.slane %v5548, 4
      %v5551 = vshll.u32 %v5186, 16
      %v5553 = vrot.slane %v5551, 5
      %v5554 = vor.u32 %v5550, %v5553
      %v5555 = vrot.slane %v5554, 4
      %v5557 = vshll.u32 %v5008, 16
      %v5559 = vrot.slane %v5557, 5
      %v5560 = vsel %vm263, %v5555, %v5559
      %v5561 = vshrl.u32 %v5008, 16
      %v5563 = vrot.slane %v5561, 4
      %v5564 = vor.u32 %v5563, %v5559
      %v5565 = vrot.slane %v5564, 4
      %v5567 = vshll.u32 %v5009, 16
      %v5569 = vrot.slane %v5567, 5
      %v5570 = vsel %vm263, %v5565, %v5569
      %s5571 = scalar_lea.vmem %s1, 8
      %v5572 = vld [vmem:[%s5571] sm:$0xf]
      %v5573 = vunpack.c.l.b16 %v5200
      %v5574 = vunpack.c.l.b16 %v5210
      %v5575 = vunpack.c.l.b16 %v5224
      %v5576 = vunpack.c.l.b16 %v5234
      %v5577 = vunpack.c.l.b16 %v5248
      %v5578 = vunpack.c.l.b16 %v5258
      %v5579 = vunpack.c.l.b16 %v5272
      %v5580 = vunpack.c.l.b16 %v5282
      %v5581 = vunpack.c.l.b16 %v5296
      %v5582 = vunpack.c.l.b16 %v5306
      %v5583 = vunpack.c.l.b16 %v5320
      %v5584 = vunpack.c.l.b16 %v5330
      %v5585 = vunpack.c.l.b16 %v5344
      %v5586 = vunpack.c.l.b16 %v5354
      %v5587 = vunpack.c.l.b16 %v5368
      %v5588 = vunpack.c.l.b16 %v5378
      %v5589 = vunpack.c.l.b16 %v5392
      %v5590 = vunpack.c.l.b16 %v5402
      %v5591 = vunpack.c.l.b16 %v5416
      %v5592 = vunpack.c.l.b16 %v5426
      %v5593 = vunpack.c.l.b16 %v5440
      %v5594 = vunpack.c.l.b16 %v5450
      %v5595 = vunpack.c.l.b16 %v5464
      %v5596 = vunpack.c.l.b16 %v5474
      %v5597 = vunpack.c.l.b16 %v5488
      %v5598 = vunpack.c.l.b16 %v5498
      %v5599 = vunpack.c.l.b16 %v5512
      %v5600 = vunpack.c.l.b16 %v5522
      %v5601 = vunpack.c.l.b16 %v5536
      %v5602 = vunpack.c.l.b16 %v5546
      %v5603 = vunpack.c.l.b16 %v5560
      %v5604 = vunpack.c.l.b16 %v5570
      %v5605 = vpack.c.b16 %v5574, %v5573
      %v5606 = vpack.c.b16 %v5576, %v5575
      %v5607 = vpack.c.b16 %v5578, %v5577
      %v5608 = vpack.c.b16 %v5580, %v5579
      %v5609 = vpack.c.b16 %v5582, %v5581
      %v5610 = vpack.c.b16 %v5584, %v5583
      %v5611 = vpack.c.b16 %v5586, %v5585
      %v5612 = vpack.c.b16 %v5588, %v5587
      %v5613 = vpack.c.b16 %v5590, %v5589
      %v5614 = vpack.c.b16 %v5592, %v5591
      %v5615 = vpack.c.b16 %v5594, %v5593
      %v5616 = vpack.c.b16 %v5596, %v5595
      %v5617 = vpack.c.b16 %v5598, %v5597
      %v5618 = vpack.c.b16 %v5600, %v5599
      %v5619 = vpack.c.b16 %v5602, %v5601
      %v5620 = vpack.c.b16 %v5604, %v5603
      %v5622 = vsel %vm732, %v5572, 0
      %v5625 = vsel %vm732, %v5605, 0
      %v5628 = vsel %vm732, %v5606, 0
      %v5631 = vsel %vm732, %v5607, 0
      %v5634 = vsel %vm732, %v5608, 0
      %v5637 = vsel %vm732, %v5609, 0
      %v5640 = vsel %vm732, %v5610, 0
      %v5643 = vsel %vm732, %v5611, 0
      %v5646 = vsel %vm732, %v5612, 0
      %v5649 = vsel %vm732, %v5613, 0
      %v5652 = vsel %vm732, %v5614, 0
      %v5655 = vsel %vm732, %v5615, 0
      %v5658 = vsel %vm732, %v5616, 0
      %v5661 = vsel %vm732, %v5617, 0
      %v5664 = vsel %vm732, %v5618, 0
      %v5667 = vsel %vm732, %v5619, 0
      %v5670 = vsel %vm732, %v5620, 0
      %5672 = vmatpush.bf16.xpose.msra.mxu0 %v5646
      %5673 = vmatpush.bf16.xpose.msra.mxu0 %v5643
      %5674 = vmatpush.bf16.xpose.msra.mxu0 %v5640
      %5675 = vmatpush.bf16.xpose.msra.mxu0 %v5637
      %5676 = vmatpush.bf16.xpose.msra.mxu0 %v5634
      %5677 = vmatpush.bf16.xpose.msra.mxu0 %v5631
      %5678 = vmatpush.bf16.xpose.msra.mxu0 %v5628
      %5679 = vmatpush.bf16.xpose.msra.mxu0 %v5625
      %5680 = vmatmul.bf16.gmra.mxu0 %v5622
      %v5681 = vpop.f32.mrf.mxu0
      %v5682 = vadd.f32 0.0, %v5681
      %v5683 = vpop.f32.mrf.mxu0
      %5684 = vdwg.mxu0
      %5685 = vmatpush.bf16.xpose.msra.mxu0 %v5670
      %5686 = vmatpush.bf16.xpose.msra.mxu0 %v5667
      %5687 = vmatpush.bf16.xpose.msra.mxu0 %v5664
      %5688 = vmatpush.bf16.xpose.msra.mxu0 %v5661
      %5689 = vmatpush.bf16.xpose.msra.mxu0 %v5658
      %5690 = vmatpush.bf16.xpose.msra.mxu0 %v5655
      %5691 = vmatpush.bf16.xpose.msra.mxu0 %v5652
      %5692 = vmatpush.bf16.xpose.msra.mxu0 %v5649
      %5693 = vmatmul.bf16.gmra.mxu0 %v5622
      %v5694 = vpop.f32.mrf.mxu0
      %v5695 = vadd.f32 0.0, %v5694
      %v5696 = vpop.f32.mrf.mxu0
      %5697 = vdwg.mxu0
      %v5698 = vunpack.c.l.b16 %v5061
      %v5699 = vunpack.c.l.b16 %v5064
      %v5700 = vunpack.c.l.b16 %v5068
      %v5701 = vunpack.c.l.b16 %v5071
      %v5702 = vunpack.c.l.b16 %v5075
      %v5703 = vunpack.c.l.b16 %v5078
      %v5704 = vunpack.c.l.b16 %v5082
      %v5705 = vunpack.c.l.b16 %v5085
      %v5706 = vunpack.c.l.b16 %v5089
      %v5707 = vunpack.c.l.b16 %v5092
      %v5708 = vunpack.c.l.b16 %v5096
      %v5709 = vunpack.c.l.b16 %v5099
      %v5710 = vunpack.c.l.b16 %v5103
      %v5711 = vunpack.c.l.b16 %v5106
      %v5712 = vunpack.c.l.b16 %v5110
      %v5713 = vunpack.c.l.b16 %v5113
      %v5714 = vunpack.c.l.b16 %v5117
      %v5715 = vunpack.c.l.b16 %v5120
      %v5716 = vunpack.c.l.b16 %v5124
      %v5717 = vunpack.c.l.b16 %v5127
      %v5718 = vunpack.c.l.b16 %v5131
      %v5719 = vunpack.c.l.b16 %v5134
      %v5720 = vunpack.c.l.b16 %v5138
      %v5721 = vunpack.c.l.b16 %v5141
      %v5722 = vunpack.c.l.b16 %v5145
      %v5723 = vunpack.c.l.b16 %v5148
      %v5724 = vunpack.c.l.b16 %v5152
      %v5725 = vunpack.c.l.b16 %v5155
      %v5726 = vunpack.c.l.b16 %v5159
      %v5727 = vunpack.c.l.b16 %v5162
      %v5728 = vunpack.c.l.b16 %v5166
      %v5729 = vunpack.c.l.b16 %v5169
      %v5730 = vpack.c.b16 %v5699, %v5698
      %v5731 = vpack.c.b16 %v5701, %v5700
      %v5732 = vpack.c.b16 %v5703, %v5702
      %v5733 = vpack.c.b16 %v5705, %v5704
      %v5734 = vpack.c.b16 %v5707, %v5706
      %v5735 = vpack.c.b16 %v5709, %v5708
      %v5736 = vpack.c.b16 %v5711, %v5710
      %v5737 = vpack.c.b16 %v5713, %v5712
      %v5738 = vpack.c.b16 %v5715, %v5714
      %v5739 = vpack.c.b16 %v5717, %v5716
      %v5740 = vpack.c.b16 %v5719, %v5718
      %v5741 = vpack.c.b16 %v5721, %v5720
      %v5742 = vpack.c.b16 %v5723, %v5722
      %v5743 = vpack.c.b16 %v5725, %v5724
      %v5744 = vpack.c.b16 %v5727, %v5726
      %v5745 = vpack.c.b16 %v5729, %v5728
      %v5747 = vsel %vm732, %v5170, 0
      %v5750 = vsel %vm732, %v5730, 0
      %v5753 = vsel %vm732, %v5731, 0
      %v5756 = vsel %vm732, %v5732, 0
      %v5759 = vsel %vm732, %v5733, 0
      %v5762 = vsel %vm732, %v5734, 0
      %v5765 = vsel %vm732, %v5735, 0
      %v5768 = vsel %vm732, %v5736, 0
      %v5771 = vsel %vm732, %v5737, 0
      %v5774 = vsel %vm732, %v5738, 0
      %v5777 = vsel %vm732, %v5739, 0
      %v5780 = vsel %vm732, %v5740, 0
      %v5783 = vsel %vm732, %v5741, 0
      %v5786 = vsel %vm732, %v5742, 0
      %v5789 = vsel %vm732, %v5743, 0
      %v5792 = vsel %vm732, %v5744, 0
      %v5795 = vsel %vm732, %v5745, 0
      %5797 = vmatpush.bf16.xpose.msra.mxu0 %v5771
      %5798 = vmatpush.bf16.xpose.msra.mxu0 %v5768
      %5799 = vmatpush.bf16.xpose.msra.mxu0 %v5765
      %5800 = vmatpush.bf16.xpose.msra.mxu0 %v5762
      %5801 = vmatpush.bf16.xpose.msra.mxu0 %v5759
      %5802 = vmatpush.bf16.xpose.msra.mxu0 %v5756
      %5803 = vmatpush.bf16.xpose.msra.mxu0 %v5753
      %5804 = vmatpush.bf16.xpose.msra.mxu0 %v5750
      %5805 = vmatmul.bf16.gmra.mxu0 %v5747
      %v5806 = vpop.f32.mrf.mxu0
      %v5807 = vadd.f32 %v5682, %v5806
      %v5808 = vpop.f32.mrf.mxu0
      %5809 = vdwg.mxu0
      %5810 = vmatpush.bf16.xpose.msra.mxu0 %v5795
      %5811 = vmatpush.bf16.xpose.msra.mxu0 %v5792
      %5812 = vmatpush.bf16.xpose.msra.mxu0 %v5789
      %5813 = vmatpush.bf16.xpose.msra.mxu0 %v5786
      %5814 = vmatpush.bf16.xpose.msra.mxu0 %v5783
      %5815 = vmatpush.bf16.xpose.msra.mxu0 %v5780
      %5816 = vmatpush.bf16.xpose.msra.mxu0 %v5777
      %5817 = vmatpush.bf16.xpose.msra.mxu0 %v5774
      %5818 = vmatmul.bf16.gmra.mxu0 %v5747
      %v5819 = vpop.f32.mrf.mxu0
      %v5820 = vadd.f32 %v5695, %v5819
      %v5821 = vpop.f32.mrf.mxu0
      %5822 = vdwg.mxu0
      %v5823 = vld [vmem:[%s212] sm:$0xe]
      %v5824 = vld [vmem:[%s212 + $0x4] sm:$0xf]
      %v5825 = vld [vmem:[%s212 + $0x8] sm:$0x1]
      %v5826 = vld [vmem:[%s212 + $0xc] sm:$0xe]
      %v5827 = vld [vmem:[%s212 + $0x10] sm:$0xf]
      %v5828 = vld [vmem:[%s212 + $0x14] sm:$0x1]
      %v5829 = vld [vmem:[%s212 + $0x18] sm:$0xe]
      %v5830 = vld [vmem:[%s212 + $0x1c] sm:$0xf]
      %v5831 = vld [vmem:[%s212 + $0x20] sm:$0x1]
      %v5832 = vld [vmem:[%s212 + $0x24] sm:$0xe]
      %v5833 = vld [vmem:[%s212 + $0x28] sm:$0xf]
      %v5834 = vld [vmem:[%s212 + $0x2c] sm:$0x1]
      %v5835 = vld [vmem:[%s212 + $0x30] sm:$0xe]
      %v5836 = vld [vmem:[%s212 + $0x34] sm:$0xf]
      %v5837 = vld [vmem:[%s212 + $0x38] sm:$0x1]
      %v5838 = vld [vmem:[%s212 + $0x3c] sm:$0xe]
      %v5839 = vld [vmem:[%s212 + $0x40] sm:$0xf]
      %v5840 = vld [vmem:[%s212 + $0x44] sm:$0x1]
      %v5841 = vld [vmem:[%s212 + $0x48] sm:$0xe]
      %v5842 = vld [vmem:[%s212 + $0x4c] sm:$0xf]
      %v5843 = vld [vmem:[%s212 + $0x50] sm:$0x1]
      %v5844 = vld [vmem:[%s212 + $0x54] sm:$0xe]
      %v5845 = vld [vmem:[%s212 + $0x58] sm:$0xf]
      %v5846 = vld [vmem:[%s212 + $0x5c] sm:$0x1]
      %v5847 = vld [vmem:[%s212 + $0x60] sm:$0xe]
      %v5848 = vld [vmem:[%s212 + $0x64] sm:$0xf]
      %v5849 = vld [vmem:[%s212 + $0x68] sm:$0x1]
      %v5850 = vld [vmem:[%s212 + $0x6c] sm:$0xe]
      %v5851 = vld [vmem:[%s212 + $0x70] sm:$0xf]
      %v5852 = vld [vmem:[%s212 + $0x74] sm:$0x1]
      %v5853 = vld [vmem:[%s212 + $0x78] sm:$0xe]
      %v5854 = vld [vmem:[%s212 + $0x7c] sm:$0xf]
      %v5855 = vld [vmem:[%s212 + $0x80] sm:$0x1]
      %v5856 = vld [vmem:[%s212 + $0x84] sm:$0xe]
      %v5857 = vld [vmem:[%s212 + $0x88] sm:$0xf]
      %v5858 = vld [vmem:[%s212 + $0x8c] sm:$0x1]
      %v5859 = vld [vmem:[%s212 + $0x90] sm:$0xe]
      %v5860 = vld [vmem:[%s212 + $0x94] sm:$0xf]
      %v5861 = vld [vmem:[%s212 + $0x98] sm:$0x1]
      %v5862 = vld [vmem:[%s212 + $0x9c] sm:$0xe]
      %v5863 = vld [vmem:[%s212 + $0xa0] sm:$0xf]
      %v5864 = vld [vmem:[%s212 + $0xa4] sm:$0x1]
      %v5865 = vld [vmem:[%s212 + $0xa8] sm:$0xe]
      %v5866 = vld [vmem:[%s212 + $0xac] sm:$0xf]
      %v5867 = vld [vmem:[%s212 + $0xb0] sm:$0x1]
      %v5868 = vld [vmem:[%s212 + $0xb4] sm:$0xe]
      %v5869 = vld [vmem:[%s212 + $0xb8] sm:$0xf]
      %v5870 = vld [vmem:[%s212 + $0xbc] sm:$0x1]
      %v5919 = vrot.slane %v5823, 5
      %v5920 = vrot.slane %v5919, 4
      %v5921 = vrot.slane %v5824, 5
      %v5922 = vsel %vm1818, %v5920, %v5921
      %v5923 = vrot.slane %v5921, 4
      %v5924 = vrot.slane %v5825, 5
      %v5925 = vsel %vm1818, %v5923, %v5924
      %v5926 = vrot.slane %v5826, 5
      %v5927 = vrot.slane %v5926, 4
      %v5928 = vrot.slane %v5827, 5
      %v5929 = vsel %vm1818, %v5927, %v5928
      %v5930 = vrot.slane %v5928, 4
      %v5931 = vrot.slane %v5828, 5
      %v5932 = vsel %vm1818, %v5930, %v5931
      %v5933 = vrot.slane %v5829, 5
      %v5934 = vrot.slane %v5933, 4
      %v5935 = vrot.slane %v5830, 5
      %v5936 = vsel %vm1818, %v5934, %v5935
      %v5937 = vrot.slane %v5935, 4
      %v5938 = vrot.slane %v5831, 5
      %v5939 = vsel %vm1818, %v5937, %v5938
      %v5940 = vrot.slane %v5832, 5
      %v5941 = vrot.slane %v5940, 4
      %v5942 = vrot.slane %v5833, 5
      %v5943 = vsel %vm1818, %v5941, %v5942
      %v5944 = vrot.slane %v5942, 4
      %v5945 = vrot.slane %v5834, 5
      %v5946 = vsel %vm1818, %v5944, %v5945
      %v5947 = vrot.slane %v5835, 5
      %v5948 = vrot.slane %v5947, 4
      %v5949 = vrot.slane %v5836, 5
      %v5950 = vsel %vm1818, %v5948, %v5949
      %v5951 = vrot.slane %v5949, 4
      %v5952 = vrot.slane %v5837, 5
      %v5953 = vsel %vm1818, %v5951, %v5952
      %v5954 = vrot.slane %v5838, 5
      %v5955 = vrot.slane %v5954, 4
      %v5956 = vrot.slane %v5839, 5
      %v5957 = vsel %vm1818, %v5955, %v5956
      %v5958 = vrot.slane %v5956, 4
      %v5959 = vrot.slane %v5840, 5
      %v5960 = vsel %vm1818, %v5958, %v5959
      %v5961 = vrot.slane %v5841, 5
      %v5962 = vrot.slane %v5961, 4
      %v5963 = vrot.slane %v5842, 5
      %v5964 = vsel %vm1818, %v5962, %v5963
      %v5965 = vrot.slane %v5963, 4
      %v5966 = vrot.slane %v5843, 5
      %v5967 = vsel %vm1818, %v5965, %v5966
      %v5968 = vrot.slane %v5844, 5
      %v5969 = vrot.slane %v5968, 4
      %v5970 = vrot.slane %v5845, 5
      %v5971 = vsel %vm1818, %v5969, %v5970
      %v5972 = vrot.slane %v5970, 4
      %v5973 = vrot.slane %v5846, 5
      %v5974 = vsel %vm1818, %v5972, %v5973
      %v5975 = vrot.slane %v5847, 5
      %v5976 = vrot.slane %v5975, 4
      %v5977 = vrot.slane %v5848, 5
      %v5978 = vsel %vm1818, %v5976, %v5977
      %v5979 = vrot.slane %v5977, 4
      %v5980 = vrot.slane %v5849, 5
      %v5981 = vsel %vm1818, %v5979, %v5980
      %v5982 = vrot.slane %v5850, 5
      %v5983 = vrot.slane %v5982, 4
      %v5984 = vrot.slane %v5851, 5
      %v5985 = vsel %vm1818, %v5983, %v5984
      %v5986 = vrot.slane %v5984, 4
      %v5987 = vrot.slane %v5852, 5
      %v5988 = vsel %vm1818, %v5986, %v5987
      %v5989 = vrot.slane %v5853, 5
      %v5990 = vrot.slane %v5989, 4
      %v5991 = vrot.slane %v5854, 5
      %v5992 = vsel %vm1818, %v5990, %v5991
      %v5993 = vrot.slane %v5991, 4
      %v5994 = vrot.slane %v5855, 5
      %v5995 = vsel %vm1818, %v5993, %v5994
      %v5996 = vrot.slane %v5856, 5
      %v5997 = vrot.slane %v5996, 4
      %v5998 = vrot.slane %v5857, 5
      %v5999 = vsel %vm1818, %v5997, %v5998
      %v6000 = vrot.slane %v5998, 4
      %v6001 = vrot.slane %v5858, 5
      %v6002 = vsel %vm1818, %v6000, %v6001
      %v6003 = vrot.slane %v5859, 5
      %v6004 = vrot.slane %v6003, 4
      %v6005 = vrot.slane %v5860, 5
      %v6006 = vsel %vm1818, %v6004, %v6005
      %v6007 = vrot.slane %v6005, 4
      %v6008 = vrot.slane %v5861, 5
      %v6009 = vsel %vm1818, %v6007, %v6008
      %v6010 = vrot.slane %v5862, 5
      %v6011 = vrot.slane %v6010, 4
      %v6012 = vrot.slane %v5863, 5
      %v6013 = vsel %vm1818, %v6011, %v6012
      %v6014 = vrot.slane %v6012, 4
      %v6015 = vrot.slane %v5864, 5
      %v6016 = vsel %vm1818, %v6014, %v6015
      %v6017 = vrot.slane %v5865, 5
      %v6018 = vrot.slane %v6017, 4
      %v6019 = vrot.slane %v5866, 5
      %v6020 = vsel %vm1818, %v6018, %v6019
      %v6021 = vrot.slane %v6019, 4
      %v6022 = vrot.slane %v5867, 5
      %v6023 = vsel %vm1818, %v6021, %v6022
      %v6024 = vrot.slane %v5868, 5
      %v6025 = vrot.slane %v6024, 4
      %v6026 = vrot.slane %v5869, 5
      %v6027 = vsel %vm1818, %v6025, %v6026
      %v6028 = vrot.slane %v6026, 4
      %v6029 = vrot.slane %v5870, 5
      %v6030 = vsel %vm1818, %v6028, %v6029
      %s6031 = scalar_lea.vmem %s1, 32
      %v6032 = vld [vmem:[%s6031] sm:$0xf]
      %v6033 = vunpack.c.l.b16 %v5922
      %v6034 = vunpack.c.l.b16 %v5925
      %v6035 = vunpack.c.l.b16 %v5929
      %v6036 = vunpack.c.l.b16 %v5932
      %v6037 = vunpack.c.l.b16 %v5936
      %v6038 = vunpack.c.l.b16 %v5939
      %v6039 = vunpack.c.l.b16 %v5943
      %v6040 = vunpack.c.l.b16 %v5946
      %v6041 = vunpack.c.l.b16 %v5950
      %v6042 = vunpack.c.l.b16 %v5953
      %v6043 = vunpack.c.l.b16 %v5957
      %v6044 = vunpack.c.l.b16 %v5960
      %v6045 = vunpack.c.l.b16 %v5964
      %v6046 = vunpack.c.l.b16 %v5967
      %v6047 = vunpack.c.l.b16 %v5971
      %v6048 = vunpack.c.l.b16 %v5974
      %v6049 = vunpack.c.l.b16 %v5978
      %v6050 = vunpack.c.l.b16 %v5981
      %v6051 = vunpack.c.l.b16 %v5985
      %v6052 = vunpack.c.l.b16 %v5988
      %v6053 = vunpack.c.l.b16 %v5992
      %v6054 = vunpack.c.l.b16 %v5995
      %v6055 = vunpack.c.l.b16 %v5999
      %v6056 = vunpack.c.l.b16 %v6002
      %v6057 = vunpack.c.l.b16 %v6006
      %v6058 = vunpack.c.l.b16 %v6009
      %v6059 = vunpack.c.l.b16 %v6013
      %v6060 = vunpack.c.l.b16 %v6016
      %v6061 = vunpack.c.l.b16 %v6020
      %v6062 = vunpack.c.l.b16 %v6023
      %v6063 = vunpack.c.l.b16 %v6027
      %v6064 = vunpack.c.l.b16 %v6030
      %v6065 = vpack.c.b16 %v6034, %v6033
      %v6066 = vpack.c.b16 %v6036, %v6035
      %v6067 = vpack.c.b16 %v6038, %v6037
      %v6068 = vpack.c.b16 %v6040, %v6039
      %v6069 = vpack.c.b16 %v6042, %v6041
      %v6070 = vpack.c.b16 %v6044, %v6043
      %v6071 = vpack.c.b16 %v6046, %v6045
      %v6072 = vpack.c.b16 %v6048, %v6047
      %v6073 = vpack.c.b16 %v6050, %v6049
      %v6074 = vpack.c.b16 %v6052, %v6051
      %v6075 = vpack.c.b16 %v6054, %v6053
      %v6076 = vpack.c.b16 %v6056, %v6055
      %v6077 = vpack.c.b16 %v6058, %v6057
      %v6078 = vpack.c.b16 %v6060, %v6059
      %v6079 = vpack.c.b16 %v6062, %v6061
      %v6080 = vpack.c.b16 %v6064, %v6063
      %v6082 = vsel %vm732, %v6032, 0
      %v6085 = vsel %vm732, %v6065, 0
      %v6088 = vsel %vm732, %v6066, 0
      %v6091 = vsel %vm732, %v6067, 0
      %v6094 = vsel %vm732, %v6068, 0
      %v6097 = vsel %vm732, %v6069, 0
      %v6100 = vsel %vm732, %v6070, 0
      %v6103 = vsel %vm732, %v6071, 0
      %v6106 = vsel %vm732, %v6072, 0
      %v6109 = vsel %vm732, %v6073, 0
      %v6112 = vsel %vm732, %v6074, 0
      %v6115 = vsel %vm732, %v6075, 0
      %v6118 = vsel %vm732, %v6076, 0
      %v6121 = vsel %vm732, %v6077, 0
      %v6124 = vsel %vm732, %v6078, 0
      %v6127 = vsel %vm732, %v6079, 0
      %v6130 = vsel %vm732, %v6080, 0
      %6132 = vmatpush.bf16.xpose.msra.mxu0 %v6106
      %6133 = vmatpush.bf16.xpose.msra.mxu0 %v6103
      %6134 = vmatpush.bf16.xpose.msra.mxu0 %v6100
      %6135 = vmatpush.bf16.xpose.msra.mxu0 %v6097
      %6136 = vmatpush.bf16.xpose.msra.mxu0 %v6094
      %6137 = vmatpush.bf16.xpose.msra.mxu0 %v6091
      %6138 = vmatpush.bf16.xpose.msra.mxu0 %v6088
      %6139 = vmatpush.bf16.xpose.msra.mxu0 %v6085
      %6140 = vmatmul.bf16.gmra.mxu0 %v6082
      %v6141 = vpop.f32.mrf.mxu0
      %v6142 = vadd.f32 0.0, %v6141
      %v6143 = vpop.f32.mrf.mxu0
      %6144 = vdwg.mxu0
      %6145 = vmatpush.bf16.xpose.msra.mxu0 %v6130
      %6146 = vmatpush.bf16.xpose.msra.mxu0 %v6127
      %6147 = vmatpush.bf16.xpose.msra.mxu0 %v6124
      %6148 = vmatpush.bf16.xpose.msra.mxu0 %v6121
      %6149 = vmatpush.bf16.xpose.msra.mxu0 %v6118
      %6150 = vmatpush.bf16.xpose.msra.mxu0 %v6115
      %6151 = vmatpush.bf16.xpose.msra.mxu0 %v6112
      %6152 = vmatpush.bf16.xpose.msra.mxu0 %v6109
      %6153 = vmatmul.bf16.gmra.mxu0 %v6082
      %v6154 = vpop.f32.mrf.mxu0
      %v6155 = vadd.f32 0.0, %v6154
      %v6156 = vpop.f32.mrf.mxu0
      %6157 = vdwg.mxu0
      %v6158 = vadd.f32 %v5807, %v6142
      %v6159 = vadd.f32 %v5820, %v6155
      %v6160 = vld [vmem:[%s212] sm:$0xf]
      %v6161 = vld [vmem:[%s212 + $0xc] sm:$0xf]
      %v6162 = vld [vmem:[%s212 + $0x18] sm:$0xf]
      %v6163 = vld [vmem:[%s212 + $0x24] sm:$0xf]
      %v6164 = vld [vmem:[%s212 + $0x30] sm:$0xf]
      %v6165 = vld [vmem:[%s212 + $0x3c] sm:$0xf]
      %v6166 = vld [vmem:[%s212 + $0x48] sm:$0xf]
      %v6167 = vld [vmem:[%s212 + $0x54] sm:$0xf]
      %v6168 = vld [vmem:[%s212 + $0x60] sm:$0xf]
      %v6169 = vld [vmem:[%s212 + $0x6c] sm:$0xf]
      %v6170 = vld [vmem:[%s212 + $0x78] sm:$0xf]
      %v6171 = vld [vmem:[%s212 + $0x84] sm:$0xf]
      %v6172 = vld [vmem:[%s212 + $0x90] sm:$0xf]
      %v6173 = vld [vmem:[%s212 + $0x9c] sm:$0xf]
      %v6174 = vld [vmem:[%s212 + $0xa8] sm:$0xf]
      %v6175 = vld [vmem:[%s212 + $0xb4] sm:$0xf]
      %v6177 = vshrl.u32 %v6160, 16
      %v6179 = vrot.slane %v6177, 4
      %v6180 = vshll.u32 %v6160, 16
      %v6182 = vrot.slane %v6180, 5
      %v6183 = vor.u32 %v6179, %v6182
      %v6184 = vrot.slane %v6183, 4
      %v6186 = vshll.u32 %v5824, 16
      %v6188 = vrot.slane %v6186, 5
      %v6189 = vsel %vm263, %v6184, %v6188
      %v6190 = vshrl.u32 %v5824, 16
      %v6192 = vrot.slane %v6190, 4
      %v6193 = vor.u32 %v6192, %v6188
      %v6194 = vrot.slane %v6193, 4
      %v6196 = vshll.u32 %v5825, 16
      %v6198 = vrot.slane %v6196, 5
      %v6199 = vsel %vm263, %v6194, %v6198
      %v6201 = vshrl.u32 %v6161, 16
      %v6203 = vrot.slane %v6201, 4
      %v6204 = vshll.u32 %v6161, 16
      %v6206 = vrot.slane %v6204, 5
      %v6207 = vor.u32 %v6203, %v6206
      %v6208 = vrot.slane %v6207, 4
      %v6210 = vshll.u32 %v5827, 16
      %v6212 = vrot.slane %v6210, 5
      %v6213 = vsel %vm263, %v6208, %v6212
      %v6214 = vshrl.u32 %v5827, 16
      %v6216 = vrot.slane %v6214, 4
      %v6217 = vor.u32 %v6216, %v6212
      %v6218 = vrot.slane %v6217, 4
      %v6220 = vshll.u32 %v5828, 16
      %v6222 = vrot.slane %v6220, 5
      %v6223 = vsel %vm263, %v6218, %v6222
      %v6225 = vshrl.u32 %v6162, 16
      %v6227 = vrot.slane %v6225, 4
      %v6228 = vshll.u32 %v6162, 16
      %v6230 = vrot.slane %v6228, 5
      %v6231 = vor.u32 %v6227, %v6230
      %v6232 = vrot.slane %v6231, 4
      %v6234 = vshll.u32 %v5830, 16
      %v6236 = vrot.slane %v6234, 5
      %v6237 = vsel %vm263, %v6232, %v6236
      %v6238 = vshrl.u32 %v5830, 16
      %v6240 = vrot.slane %v6238, 4
      %v6241 = vor.u32 %v6240, %v6236
      %v6242 = vrot.slane %v6241, 4
      %v6244 = vshll.u32 %v5831, 16
      %v6246 = vrot.slane %v6244, 5
      %v6247 = vsel %vm263, %v6242, %v6246
      %v6249 = vshrl.u32 %v6163, 16
      %v6251 = vrot.slane %v6249, 4
      %v6252 = vshll.u32 %v6163, 16
      %v6254 = vrot.slane %v6252, 5
      %v6255 = vor.u32 %v6251, %v6254
      %v6256 = vrot.slane %v6255, 4
      %v6258 = vshll.u32 %v5833, 16
      %v6260 = vrot.slane %v6258, 5
      %v6261 = vsel %vm263, %v6256, %v6260
      %v6262 = vshrl.u32 %v5833, 16
      %v6264 = vrot.slane %v6262, 4
      %v6265 = vor.u32 %v6264, %v6260
      %v6266 = vrot.slane %v6265, 4
      %v6268 = vshll.u32 %v5834, 16
      %v6270 = vrot.slane %v6268, 5
      %v6271 = vsel %vm263, %v6266, %v6270
      %v6273 = vshrl.u32 %v6164, 16
      %v6275 = vrot.slane %v6273, 4
      %v6276 = vshll.u32 %v6164, 16
      %v6278 = vrot.slane %v6276, 5
      %v6279 = vor.u32 %v6275, %v6278
      %v6280 = vrot.slane %v6279, 4
      %v6282 = vshll.u32 %v5836, 16
      %v6284 = vrot.slane %v6282, 5
      %v6285 = vsel %vm263, %v6280, %v6284
      %v6286 = vshrl.u32 %v5836, 16
      %v6288 = vrot.slane %v6286, 4
      %v6289 = vor.u32 %v6288, %v6284
      %v6290 = vrot.slane %v6289, 4
      %v6292 = vshll.u32 %v5837, 16
      %v6294 = vrot.slane %v6292, 5
      %v6295 = vsel %vm263, %v6290, %v6294
      %v6297 = vshrl.u32 %v6165, 16
      %v6299 = vrot.slane %v6297, 4
      %v6300 = vshll.u32 %v6165, 16
      %v6302 = vrot.slane %v6300, 5
      %v6303 = vor.u32 %v6299, %v6302
      %v6304 = vrot.slane %v6303, 4
      %v6306 = vshll.u32 %v5839, 16
      %v6308 = vrot.slane %v6306, 5
      %v6309 = vsel %vm263, %v6304, %v6308
      %v6310 = vshrl.u32 %v5839, 16
      %v6312 = vrot.slane %v6310, 4
      %v6313 = vor.u32 %v6312, %v6308
      %v6314 = vrot.slane %v6313, 4
      %v6316 = vshll.u32 %v5840, 16
      %v6318 = vrot.slane %v6316, 5
      %v6319 = vsel %vm263, %v6314, %v6318
      %v6321 = vshrl.u32 %v6166, 16
      %v6323 = vrot.slane %v6321, 4
      %v6324 = vshll.u32 %v6166, 16
      %v6326 = vrot.slane %v6324, 5
      %v6327 = vor.u32 %v6323, %v6326
      %v6328 = vrot.slane %v6327, 4
      %v6330 = vshll.u32 %v5842, 16
      %v6332 = vrot.slane %v6330, 5
      %v6333 = vsel %vm263, %v6328, %v6332
      %v6334 = vshrl.u32 %v5842, 16
      %v6336 = vrot.slane %v6334, 4
      %v6337 = vor.u32 %v6336, %v6332
      %v6338 = vrot.slane %v6337, 4
      %v6340 = vshll.u32 %v5843, 16
      %v6342 = vrot.slane %v6340, 5
      %v6343 = vsel %vm263, %v6338, %v6342
      %v6345 = vshrl.u32 %v6167, 16
      %v6347 = vrot.slane %v6345, 4
      %v6348 = vshll.u32 %v6167, 16
      %v6350 = vrot.slane %v6348, 5
      %v6351 = vor.u32 %v6347, %v6350
      %v6352 = vrot.slane %v6351, 4
      %v6354 = vshll.u32 %v5845, 16
      %v6356 = vrot.slane %v6354, 5
      %v6357 = vsel %vm263, %v6352, %v6356
      %v6358 = vshrl.u32 %v5845, 16
      %v6360 = vrot.slane %v6358, 4
      %v6361 = vor.u32 %v6360, %v6356
      %v6362 = vrot.slane %v6361, 4
      %v6364 = vshll.u32 %v5846, 16
      %v6366 = vrot.slane %v6364, 5
      %v6367 = vsel %vm263, %v6362, %v6366
      %v6369 = vshrl.u32 %v6168, 16
      %v6371 = vrot.slane %v6369, 4
      %v6372 = vshll.u32 %v6168, 16
      %v6374 = vrot.slane %v6372, 5
      %v6375 = vor.u32 %v6371, %v6374
      %v6376 = vrot.slane %v6375, 4
      %v6378 = vshll.u32 %v5848, 16
      %v6380 = vrot.slane %v6378, 5
      %v6381 = vsel %vm263, %v6376, %v6380
      %v6382 = vshrl.u32 %v5848, 16
      %v6384 = vrot.slane %v6382, 4
      %v6385 = vor.u32 %v6384, %v6380
      %v6386 = vrot.slane %v6385, 4
      %v6388 = vshll.u32 %v5849, 16
      %v6390 = vrot.slane %v6388, 5
      %v6391 = vsel %vm263, %v6386, %v6390
      %v6393 = vshrl.u32 %v6169, 16
      %v6395 = vrot.slane %v6393, 4
      %v6396 = vshll.u32 %v6169, 16
      %v6398 = vrot.slane %v6396, 5
      %v6399 = vor.u32 %v6395, %v6398
      %v6400 = vrot.slane %v6399, 4
      %v6402 = vshll.u32 %v5851, 16
      %v6404 = vrot.slane %v6402, 5
      %v6405 = vsel %vm263, %v6400, %v6404
      %v6406 = vshrl.u32 %v5851, 16
      %v6408 = vrot.slane %v6406, 4
      %v6409 = vor.u32 %v6408, %v6404
      %v6410 = vrot.slane %v6409, 4
      %v6412 = vshll.u32 %v5852, 16
      %v6414 = vrot.slane %v6412, 5
      %v6415 = vsel %vm263, %v6410, %v6414
      %v6417 = vshrl.u32 %v6170, 16
      %v6419 = vrot.slane %v6417, 4
      %v6420 = vshll.u32 %v6170, 16
      %v6422 = vrot.slane %v6420, 5
      %v6423 = vor.u32 %v6419, %v6422
      %v6424 = vrot.slane %v6423, 4
      %v6426 = vshll.u32 %v5854, 16
      %v6428 = vrot.slane %v6426, 5
      %v6429 = vsel %vm263, %v6424, %v6428
      %v6430 = vshrl.u32 %v5854, 16
      %v6432 = vrot.slane %v6430, 4
      %v6433 = vor.u32 %v6432, %v6428
      %v6434 = vrot.slane %v6433, 4
      %v6436 = vshll.u32 %v5855, 16
      %v6438 = vrot.slane %v6436, 5
      %v6439 = vsel %vm263, %v6434, %v6438
      %v6441 = vshrl.u32 %v6171, 16
      %v6443 = vrot.slane %v6441, 4
      %v6444 = vshll.u32 %v6171, 16
      %v6446 = vrot.slane %v6444, 5
      %v6447 = vor.u32 %v6443, %v6446
      %v6448 = vrot.slane %v6447, 4
      %v6450 = vshll.u32 %v5857, 16
      %v6452 = vrot.slane %v6450, 5
      %v6453 = vsel %vm263, %v6448, %v6452
      %v6454 = vshrl.u32 %v5857, 16
      %v6456 = vrot.slane %v6454, 4
      %v6457 = vor.u32 %v6456, %v6452
      %v6458 = vrot.slane %v6457, 4
      %v6460 = vshll.u32 %v5858, 16
      %v6462 = vrot.slane %v6460, 5
      %v6463 = vsel %vm263, %v6458, %v6462
      %v6465 = vshrl.u32 %v6172, 16
      %v6467 = vrot.slane %v6465, 4
      %v6468 = vshll.u32 %v6172, 16
      %v6470 = vrot.slane %v6468, 5
      %v6471 = vor.u32 %v6467, %v6470
      %v6472 = vrot.slane %v6471, 4
      %v6474 = vshll.u32 %v5860, 16
      %v6476 = vrot.slane %v6474, 5
      %v6477 = vsel %vm263, %v6472, %v6476
      %v6478 = vshrl.u32 %v5860, 16
      %v6480 = vrot.slane %v6478, 4
      %v6481 = vor.u32 %v6480, %v6476
      %v6482 = vrot.slane %v6481, 4
      %v6484 = vshll.u32 %v5861, 16
      %v6486 = vrot.slane %v6484, 5
      %v6487 = vsel %vm263, %v6482, %v6486
      %v6489 = vshrl.u32 %v6173, 16
      %v6491 = vrot.slane %v6489, 4
      %v6492 = vshll.u32 %v6173, 16
      %v6494 = vrot.slane %v6492, 5
      %v6495 = vor.u32 %v6491, %v6494
      %v6496 = vrot.slane %v6495, 4
      %v6498 = vshll.u32 %v5863, 16
      %v6500 = vrot.slane %v6498, 5
      %v6501 = vsel %vm263, %v6496, %v6500
      %v6502 = vshrl.u32 %v5863, 16
      %v6504 = vrot.slane %v6502, 4
      %v6505 = vor.u32 %v6504, %v6500
      %v6506 = vrot.slane %v6505, 4
      %v6508 = vshll.u32 %v5864, 16
      %v6510 = vrot.slane %v6508, 5
      %v6511 = vsel %vm263, %v6506, %v6510
      %v6513 = vshrl.u32 %v6174, 16
      %v6515 = vrot.slane %v6513, 4
      %v6516 = vshll.u32 %v6174, 16
      %v6518 = vrot.slane %v6516, 5
      %v6519 = vor.u32 %v6515, %v6518
      %v6520 = vrot.slane %v6519, 4
      %v6522 = vshll.u32 %v5866, 16
      %v6524 = vrot.slane %v6522, 5
      %v6525 = vsel %vm263, %v6520, %v6524
      %v6526 = vshrl.u32 %v5866, 16
      %v6528 = vrot.slane %v6526, 4
      %v6529 = vor.u32 %v6528, %v6524
      %v6530 = vrot.slane %v6529, 4
      %v6532 = vshll.u32 %v5867, 16
      %v6534 = vrot.slane %v6532, 5
      %v6535 = vsel %vm263, %v6530, %v6534
      %v6537 = vshrl.u32 %v6175, 16
      %v6539 = vrot.slane %v6537, 4
      %v6540 = vshll.u32 %v6175, 16
      %v6542 = vrot.slane %v6540, 5
      %v6543 = vor.u32 %v6539, %v6542
      %v6544 = vrot.slane %v6543, 4
      %v6546 = vshll.u32 %v5869, 16
      %v6548 = vrot.slane %v6546, 5
      %v6549 = vsel %vm263, %v6544, %v6548
      %v6550 = vshrl.u32 %v5869, 16
      %v6552 = vrot.slane %v6550, 4
      %v6553 = vor.u32 %v6552, %v6548
      %v6554 = vrot.slane %v6553, 4
      %v6556 = vshll.u32 %v5870, 16
      %v6558 = vrot.slane %v6556, 5
      %v6559 = vsel %vm263, %v6554, %v6558
      %s6560 = scalar_lea.vmem %s1, 40
      %v6561 = vld [vmem:[%s6560] sm:$0xf]
      %v6562 = vunpack.c.l.b16 %v6189
      %v6563 = vunpack.c.l.b16 %v6199
      %v6564 = vunpack.c.l.b16 %v6213
      %v6565 = vunpack.c.l.b16 %v6223
      %v6566 = vunpack.c.l.b16 %v6237
      %v6567 = vunpack.c.l.b16 %v6247
      %v6568 = vunpack.c.l.b16 %v6261
      %v6569 = vunpack.c.l.b16 %v6271
      %v6570 = vunpack.c.l.b16 %v6285
      %v6571 = vunpack.c.l.b16 %v6295
      %v6572 = vunpack.c.l.b16 %v6309
      %v6573 = vunpack.c.l.b16 %v6319
      %v6574 = vunpack.c.l.b16 %v6333
      %v6575 = vunpack.c.l.b16 %v6343
      %v6576 = vunpack.c.l.b16 %v6357
      %v6577 = vunpack.c.l.b16 %v6367
      %v6578 = vunpack.c.l.b16 %v6381
      %v6579 = vunpack.c.l.b16 %v6391
      %v6580 = vunpack.c.l.b16 %v6405
      %v6581 = vunpack.c.l.b16 %v6415
      %v6582 = vunpack.c.l.b16 %v6429
      %v6583 = vunpack.c.l.b16 %v6439
      %v6584 = vunpack.c.l.b16 %v6453
      %v6585 = vunpack.c.l.b16 %v6463
      %v6586 = vunpack.c.l.b16 %v6477
      %v6587 = vunpack.c.l.b16 %v6487
      %v6588 = vunpack.c.l.b16 %v6501
      %v6589 = vunpack.c.l.b16 %v6511
      %v6590 = vunpack.c.l.b16 %v6525
      %v6591 = vunpack.c.l.b16 %v6535
      %v6592 = vunpack.c.l.b16 %v6549
      %v6593 = vunpack.c.l.b16 %v6559
      %v6594 = vpack.c.b16 %v6563, %v6562
      %v6595 = vpack.c.b16 %v6565, %v6564
      %v6596 = vpack.c.b16 %v6567, %v6566
      %v6597 = vpack.c.b16 %v6569, %v6568
      %v6598 = vpack.c.b16 %v6571, %v6570
      %v6599 = vpack.c.b16 %v6573, %v6572
      %v6600 = vpack.c.b16 %v6575, %v6574
      %v6601 = vpack.c.b16 %v6577, %v6576
      %v6602 = vpack.c.b16 %v6579, %v6578
      %v6603 = vpack.c.b16 %v6581, %v6580
      %v6604 = vpack.c.b16 %v6583, %v6582
      %v6605 = vpack.c.b16 %v6585, %v6584
      %v6606 = vpack.c.b16 %v6587, %v6586
      %v6607 = vpack.c.b16 %v6589, %v6588
      %v6608 = vpack.c.b16 %v6591, %v6590
      %v6609 = vpack.c.b16 %v6593, %v6592
      %v6611 = vsel %vm732, %v6561, 0
      %v6614 = vsel %vm732, %v6594, 0
      %v6617 = vsel %vm732, %v6595, 0
      %v6620 = vsel %vm732, %v6596, 0
      %v6623 = vsel %vm732, %v6597, 0
      %v6626 = vsel %vm732, %v6598, 0
      %v6629 = vsel %vm732, %v6599, 0
      %v6632 = vsel %vm732, %v6600, 0
      %v6635 = vsel %vm732, %v6601, 0
      %v6638 = vsel %vm732, %v6602, 0
      %v6641 = vsel %vm732, %v6603, 0
      %v6644 = vsel %vm732, %v6604, 0
      %v6647 = vsel %vm732, %v6605, 0
      %v6650 = vsel %vm732, %v6606, 0
      %v6653 = vsel %vm732, %v6607, 0
      %v6656 = vsel %vm732, %v6608, 0
      %v6659 = vsel %vm732, %v6609, 0
      %6661 = vmatpush.bf16.xpose.msra.mxu0 %v6635
      %6662 = vmatpush.bf16.xpose.msra.mxu0 %v6632
      %6663 = vmatpush.bf16.xpose.msra.mxu0 %v6629
      %6664 = vmatpush.bf16.xpose.msra.mxu0 %v6626
      %6665 = vmatpush.bf16.xpose.msra.mxu0 %v6623
      %6666 = vmatpush.bf16.xpose.msra.mxu0 %v6620
      %6667 = vmatpush.bf16.xpose.msra.mxu0 %v6617
      %6668 = vmatpush.bf16.xpose.msra.mxu0 %v6614
      %6669 = vmatmul.bf16.gmra.mxu0 %v6611
      %v6670 = vpop.f32.mrf.mxu0
      %v6671 = vadd.f32 0.0, %v6670
      %v6672 = vpop.f32.mrf.mxu0
      %6673 = vdwg.mxu0
      %6674 = vmatpush.bf16.xpose.msra.mxu0 %v6659
      %6675 = vmatpush.bf16.xpose.msra.mxu0 %v6656
      %6676 = vmatpush.bf16.xpose.msra.mxu0 %v6653
      %6677 = vmatpush.bf16.xpose.msra.mxu0 %v6650
      %6678 = vmatpush.bf16.xpose.msra.mxu0 %v6647
      %6679 = vmatpush.bf16.xpose.msra.mxu0 %v6644
      %6680 = vmatpush.bf16.xpose.msra.mxu0 %v6641
      %6681 = vmatpush.bf16.xpose.msra.mxu0 %v6638
      %6682 = vmatmul.bf16.gmra.mxu0 %v6611
      %v6683 = vpop.f32.mrf.mxu0
      %v6684 = vadd.f32 0.0, %v6683
      %v6685 = vpop.f32.mrf.mxu0
      %6686 = vdwg.mxu0
      %v6687 = vadd.f32 %v6158, %v6671
      %v6688 = vadd.f32 %v6159, %v6684
      %v6689 = vadd.f32 %v6687, %v1692
      %v6690 = vadd.f32 %v6688, %v1692
      %v6691 = vadd.f32 %v6689, %v6690
      %6692 = vadd.xlane.f32.xlu0 %v6691
      %v6693 = vpop.xlane.xlu0 %6692
      %v6694 = vmul.f32 %v6693, %v1705
      %v6695 = vsub.f32 %v6689, %v6694
      %v6696 = vsub.f32 %v6690, %v6694
      %v6697 = vmul.f32 %v6695, %v6695
      %v6698 = vmul.f32 %v6696, %v6696
      %v6699 = vadd.f32 %v6697, %v6698
      %6700 = vadd.xlane.f32.xlu0 %v6699
      %v6701 = vpop.xlane.xlu0 %6700
      %v6702 = vsel %vm1714, %v6694, %v6701
      %s6703 = scalar_lea.vmem %s210, 24
      %6704 = vst.msk [vmem:[%s6703] sm:$0xff] %vm1716, %v6702
      %v6705 = vpack.c.bf16 %v6690, %v6689
      %s6706 = scalar_lea.vmem %s205, 24
      %6707 = vst [vmem:[%s6706] sm:$0xff] %v6705
      %p6708 = scmp.lt.s32.totalorder %s16, 1
      %s6709 = scalar_select %p6708, %s16, 1
      %s6710 = smul.addr %s6709, 8
      %s6711 = smul.addr %s6710, 4
      %s6712 = scalar_lea.vmem %s3, %s6711
      %p6713 = scmp.lt.s32.totalorder %s16, 1
      %s6714 = scalar_select %p6713, %s16, 1
      %s6715 = smul.addr %s6714, 4
      %s6716 = smul.addr %s6715, 8
      %s6717 = scalar_lea.vmem %s4, %s6716
      // Predicated region
      $region33: #{deconv_forward.1} parent=31 // pred_check
        %p6718 = pneg %p102
      $region34: #{deconv_forward.1} parent=31 // pred_check_branch
        %6720 = sbr.rel (%p6718) target = $region36
      $region35: #{deconv_forward.1} parent=31 // pred_region
        _
      $region36: #{deconv_forward.1} parent=31 // pred_fallthru
        _
      // Predicated region
      $region37: #{deconv_forward.1} parent=31 // pred_check
        %p6721 = pneg %p128
      $region38: #{deconv_forward.1} parent=31 // pred_check_branch
        %6723 = sbr.rel (%p6721) target = $region40
      $region39: #{deconv_forward.1} parent=31 // pred_region
        _
      $region40: #{deconv_forward.1} parent=31 // pred_fallthru
        _
    $region32: #{deconv_forward.1} parent=5 // pred_fallthru
      _
    %p6724 = scmp.le.s32.totalorder 2, %s11
    // Predicated region
    $region41: #{deconv_forward.1} parent=5 // pred_check
      %p6725 = pneg %p6724
    $region42: #{deconv_forward.1} parent=5 // pred_check_branch
      %6727 = sbr.rel (%p6725) target = $region44
    $region43: #{deconv_forward.1} parent=5 // pred_region
      %s6728 = ssub.s32 %s11, 2
      // Predicated region
      $region45: #{deconv_forward.1} parent=43 // pred_check
        %p6729 = pneg %p108
      $region46: #{deconv_forward.1} parent=43 // pred_check_branch
        %6731 = sbr.rel (%p6729) target = $region48
      $region47: #{deconv_forward.1} parent=43 // pred_region
        %p6732 = scmp.lt.s32.totalorder %s17, 1
        %s6733 = scalar_select %p6732, %s17, 1
        %s6734 = smul.addr %s6733, 8
        %s6735 = smul.addr %s6734, 4
        %s6736 = scalar_lea.vmem %s3, %s6735
      $region48: #{deconv_forward.1} parent=43 // pred_fallthru
        _
      // Predicated region
      $region49: #{deconv_forward.1} parent=43 // pred_check
        %p6737 = pneg %p134
      $region50: #{deconv_forward.1} parent=43 // pred_check_branch
        %6739 = sbr.rel (%p6737) target = $region52
      $region51: #{deconv_forward.1} parent=43 // pred_region
        %p6740 = scmp.lt.s32.totalorder %s17, 1
        %s6741 = scalar_select %p6740, %s17, 1
        %s6742 = smul.addr %s6741, 4
        %s6743 = smul.addr %s6742, 8
        %s6744 = scalar_lea.vmem %s4, %s6743
      $region52: #{deconv_forward.1} parent=43 // pred_fallthru
        _
    $region44: #{deconv_forward.1} parent=5 // pred_fallthru
      _
  $region6: #{deconv_forward.1} parent=0 // loop_footer
    %s15 = sadd.s32 1, %s11
  $region7: #{deconv_forward.1} parent=0 // loop_footer_branch
    %10 = sbr.rel target = $region3
  $region8: #{deconv_forward.1} parent=0 // loop_exit
    _

</llo_original>
